<compile_context>
chip_gen: v7x
topology: tpu7x:2x2x1
jax: 0.10.0
libtpu: 0.0.40
codegen_flags: <defaults>
</compile_context>

<pallas_src>
import math
from functools import partial

import jax
import jax.numpy as jnp
from jax.experimental import pallas as pl
from jax.experimental.pallas import tpu as pltpu

PARAM_DTYPE = jnp.float32      # biases / LayerNorm params (LN & softmax math in f32)
ACT_DTYPE = jnp.bfloat16       # activations carried between kernels
MATMUL_DTYPE = jnp.bfloat16    # MXU operand dtype (weights stored in this dtype)
NEG_INF = -1e10                # matches masked_fill(-10000000000.0)


def _tpu_vmem_capacity():
    try:
        return int(pltpu.get_tpu_info().vmem_capacity_bytes)
    except Exception:
        return 64 * 1024 * 1024          # conservative fallback (v7x-sized)


_VMEM_CAP = _tpu_vmem_capacity()
# Leave headroom for Mosaic-internal scratch/semaphores: ~3/4 of physical VMEM,
# i.e. ~96 MiB on 128-MiB parts (v5e/v6e) and ~48 MiB on 64-MiB parts (v7x).
VMEM_LIMIT = int(min(_VMEM_CAP * 3 // 4, 100 * 1024 * 1024))

if _VMEM_CAP > 96 * 1024 * 1024:         # v5e / v6e (128 MiB VMEM): bigger tiles
    BLOCK_M, BLOCK_N, BLOCK_Q, BLOCK_K, BLOCK_PF = 512, 1024, 256, 1024, 4096
else:                                    # v7x-class (64 MiB per TC) or unknown
    BLOCK_M, BLOCK_N, BLOCK_Q, BLOCK_K, BLOCK_PF = 256, 512, 256, 512, 2048


# ----------------------------- small helpers -----------------------------

def _round_up(x, m):
    return ((x + m - 1) // m) * m


def _pad_axis(a, size, axis):
    if a.shape[axis] == size:
        return a
    pad = [(0, 0)] * a.ndim
    pad[axis] = (0, size - a.shape[axis])
    return jnp.pad(a, pad)


def _const_spec(shape, index_map):
    """BlockSpec for grid-invariant operands (weights/bias/LN): single VMEM buffer."""
    try:
        return pl.BlockSpec(shape, index_map, pipeline_mode=pl.Buffered(1))
    except Exception:                     # older jax without pipeline_mode / Buffered
        return pl.BlockSpec(shape, index_map)


# ----------------------------- Pallas kernels -----------------------------

def _flash_mha_ln_kernel(x_ref, kvp_ref, qv_ref, kvv_ref,
                         wq_ref, bq_ref, wo_ref, bo_ref, g_ref, b_ref,
                         o_ref,
                         q_sc, m_sc, l_sc, acc_sc,
                         *, heads, inv_scale, causal):
    """Flash-style fused attention sub-layer for one (batch, q-tile, kv-tile) step.

    ki == 0          : project + scale Q once per q-tile, reset online-softmax state.
    every kv-tile    : masked online-softmax update per head (mask built once).
    ki == last       : per-head accumulation into the output projection (no concat),
                       residual add, LayerNorm, store.
    """
    ki = pl.program_id(2)
    nk = pl.num_programs(2)
    tq, E = x_ref.shape[1], x_ref.shape[2]
    tk = kvp_ref.shape[1]
    D = E // heads
    w_dt = wq_ref.dtype

    @pl.when(ki == 0)
    def _():
        xq = x_ref[0].astype(w_dt)                                     # (tq, E)
        q = jnp.dot(xq, wq_ref[...],
                    preferred_element_type=jnp.float32) + bq_ref[...]
        q_sc[...] = (q * inv_scale).astype(q_sc.dtype)                 # fold 1/sqrt(D)
        m_sc[...] = jnp.full_like(m_sc, NEG_INF)
        l_sc[...] = jnp.zeros_like(l_sc)
        acc_sc[...] = jnp.zeros_like(acc_sc)

    kvp = kvp_ref[0]                                                   # (tk, 2E) bf16
    q_all = q_sc[...]                                                  # (tq, E)  bf16

    # Combined padding/causal mask, computed ONCE per (q-tile, kv-tile) and shared by
    # every head.  Exactly reproduces masked_fill(mask==0, -1e10).
    keep = (qv_ref[0] > 0.5) & (kvv_ref[0] > 0.5)                      # (tq,1)&(1,tk)
    if causal:
        q_pos = pl.program_id(1) * tq + jax.lax.broadcasted_iota(jnp.int32, (tq, tk), 0)
        k_pos = ki * tk + jax.lax.broadcasted_iota(jnp.int32, (tq, tk), 1)
        keep = keep & (k_pos <= q_pos)

    for h in range(heads):                                             # static unroll
        qh = q_all[:, h * D:(h + 1) * D]                               # (tq, D)
        kh = kvp[:, h * D:(h + 1) * D]                                 # (tk, D)
        vh = kvp[:, E + h * D:E + (h + 1) * D]                         # (tk, D)
        s = jax.lax.dot_general(qh, kh, (((1,), (1,)), ((), ())),
                                preferred_element_type=jnp.float32)    # (tq, tk)
        s = jnp.where(keep, s, NEG_INF)
        m_prev = m_sc[h]                                               # (tq, 1)
        m_new = jnp.maximum(m_prev, jnp.max(s, axis=-1, keepdims=True))
        alpha = jnp.exp(m_prev - m_new)
        p = jnp.exp(s - m_new)                                         # (tq, tk) f32
        # TODO(synk): attention dropout is identity (eval mode).
        l_sc[h] = alpha * l_sc[h] + jnp.sum(p, axis=-1, keepdims=True)
        acc_sc[h] = alpha * acc_sc[h] + jax.lax.dot_general(
            p.astype(w_dt), vh, (((1,), (0,)), ((), ())),
            preferred_element_type=jnp.float32)                        # (tq, D)
        m_sc[h] = m_new

    @pl.when(ki == nk - 1)
    def _():
        wo = wo_ref[...]                                               # (E, E) bf16
        attn = jnp.zeros((tq, E), jnp.float32)
        for h in range(heads):
            ctx_h = acc_sc[h] * pl.reciprocal(l_sc[h], approx=True)    # (tq, D) f32
            # per-head accumulation into the output projection (no lane concat)
            attn = attn + jnp.dot(ctx_h.astype(w_dt), wo[h * D:(h + 1) * D, :],
                                  preferred_element_type=jnp.float32)
        attn = attn + bo_ref[...]
        # residual + LayerNorm (f32, eps=1e-5, biased variance == nn.LayerNorm)
        z = x_ref[0].astype(jnp.float32) + attn
        mu = jnp.mean(z, axis=-1, keepdims=True)
        var = jnp.mean(jnp.square(z - mu), axis=-1, keepdims=True)
        o_ref[0] = ((z - mu) * jax.lax.rsqrt(var + 1e-5) * g_ref[...]
                    + b_ref[...]).astype(o_ref.dtype)


def _ffn_ln_kernel(x_ref, w1_ref, b1_ref, w2_ref, b2_ref, g_ref, b_ref,
                   o_ref, acc_ref):
    """relu(x@W1+b1)@W2 accumulated over pf-tiles, then +b2 + residual + LayerNorm."""
    k = pl.program_id(1)

    @pl.when(k == 0)
    def _():
        acc_ref[...] = jnp.zeros_like(acc_ref)

    x = x_ref[...]                                                     # (bm, E) bf16
    h = jnp.dot(x, w1_ref[...], preferred_element_type=jnp.float32) + b1_ref[...]
    h = jnp.maximum(h, 0.0)
    # TODO(synk): FFN dropout is identity (eval mode).
    acc_ref[...] += jnp.dot(h.astype(w2_ref.dtype), w2_ref[...],
                            preferred_element_type=jnp.float32)

    @pl.when(k == pl.num_programs(1) - 1)
    def _():
        z = x.astype(jnp.float32) + acc_ref[...] + b2_ref[...]
        mu = jnp.mean(z, axis=-1, keepdims=True)
        var = jnp.mean(jnp.square(z - mu), axis=-1, keepdims=True)
        o_ref[...] = ((z - mu) * jax.lax.rsqrt(var + 1e-5) * g_ref[...]
                      + b_ref[...]).astype(o_ref.dtype)


def _linear_kernel(x_ref, w_ref, b_ref, o_ref):
    o_ref[...] = (jnp.dot(x_ref[...].astype(w_ref.dtype), w_ref[...],
                          preferred_element_type=jnp.float32)
                  + b_ref[...]).astype(o_ref.dtype)


# ----------------------------- kernel wrappers -----------------------------

def linear(x, w, b, *, block_m=BLOCK_M, block_n=BLOCK_N, out_dtype=None):
    """x:(M,K) @ w:(K,N) + b:(N,), tiled over (M,N) with zero-padding for edges."""
    M, K = x.shape
    N = w.shape[1]
    out_dtype = x.dtype if out_dtype is None else out_dtype
    bm = M if M <= block_m else block_m
    bn = N if N <= block_n else block_n
    Mp, Np = _round_up(M, bm), _round_up(N, bn)
    xp = _pad_axis(x, Mp, 0)
    wp = _pad_axis(w, Np, 1)
    bp = _pad_axis(b.reshape(1, N).astype(PARAM_DTYPE), Np, 1)
    out = pl.pallas_call(
        _linear_kernel,
        out_shape=jax.ShapeDtypeStruct((Mp, Np), out_dtype),
        grid=(Mp // bm, Np // bn),
        in_specs=[pl.BlockSpec((bm, K), lambda i, j: (i, 0)),
                  pl.BlockSpec((K, bn), lambda i, j: (0, j)),
                  pl.BlockSpec((1, bn), lambda i, j: (0, j))],
        out_specs=pl.BlockSpec((bm, bn), lambda i, j: (i, j)),
        compiler_params=pltpu.CompilerParams(
            dimension_semantics=("parallel", "parallel"),
            vmem_limit_bytes=VMEM_LIMIT),
    )(xp, wp, bp)
    return out[:M, :N]


def mha_ln(ap, x, kv_src, q_valid, k_valid, causal, ln_g, ln_b, heads,
           *, block_q=BLOCK_Q, block_k=BLOCK_K):
    """Fused attention sub-layer:  LN(x + OutProj(MHA(xWq, srcWk, srcWv))).

    x       : (B, Sq, E)  queries + residual (bf16)
    kv_src  : (B, Sk, E)  key/value source (bf16)
    q_valid : (B, Sq, 1)  1.0 where the query row is unmasked (trg pad mask)
    k_valid : (B, 1, Sk)  1.0 where the key is unmasked (src pad mask)
    """
    B, Sq, E = x.shape
    Sk = kv_src.shape[1]
    D = E // heads

    tq = Sq if Sq <= block_q else block_q
    tk = Sk if Sk <= block_k else block_k
    Sqp, Skp = _round_up(Sq, tq), _round_up(Sk, tk)

    xq = _pad_axis(x, Sqp, 1)
    src = _pad_axis(kv_src, Skp, 1)
    qv = _pad_axis(q_valid, Sqp, 1)          # padded rows -> masked (discarded anyway)
    kvv = _pad_axis(k_valid, Skp, 2)         # padded keys -> masked out

    # K/V projection once per token (separate tiled matmul kernel, bf16 output).
    kvp = linear(src.reshape(B * Skp, E), ap["wkv"], ap["bkv"],
                 out_dtype=ACT_DTYPE).reshape(B, Skp, 2 * E)

    kernel = partial(_flash_mha_ln_kernel, heads=heads,
                     inv_scale=1.0 / math.sqrt(D), causal=causal)
    out = pl.pallas_call(
        kernel,
        out_shape=jax.ShapeDtypeStruct((B, Sqp, E), x.dtype),
        grid=(B, Sqp // tq, Skp // tk),
        in_specs=[
            pl.BlockSpec((1, tq, E), lambda b, qi, ki: (b, qi, 0)),        # x (residual)
            pl.BlockSpec((1, tk, 2 * E), lambda b, qi, ki: (b, ki, 0)),    # projected KV
            pl.BlockSpec((1, tq, 1), lambda b, qi, ki: (b, qi, 0)),        # q validity
            pl.BlockSpec((1, 1, tk), lambda b, qi, ki: (b, 0, ki)),        # k validity
            _const_spec((E, E), lambda b, qi, ki: (0, 0)),                 # wq
            _const_spec((1, E), lambda b, qi, ki: (0, 0)),                 # bq
            _const_spec((E, E), lambda b, qi, ki: (0, 0)),                 # wo
            _const_spec((1, E), lambda b, qi, ki: (0, 0)),                 # bo
            _const_spec((1, E), lambda b, qi, ki: (0, 0)),                 # ln gamma
            _const_spec((1, E), lambda b, qi, ki: (0, 0)),                 # ln beta
        ],
        out_specs=pl.BlockSpec((1, tq, E), lambda b, qi, ki: (b, qi, 0)),
        scratch_shapes=[
            pltpu.VMEM((tq, E), MATMUL_DTYPE),           # projected & scaled Q
            pltpu.VMEM((heads, tq, 1), jnp.float32),     # running max
            pltpu.VMEM((heads, tq, 1), jnp.float32),     # running denom
            pltpu.VMEM((heads, tq, D), jnp.float32),     # running context
        ],
        compiler_params=pltpu.CompilerParams(
            dimension_semantics=("parallel", "parallel", "arbitrary"),
            vmem_limit_bytes=VMEM_LIMIT),
    )(xq, kvp, qv, kvv,
      ap["wq"], ap["bq"].reshape(1, E),
      ap["wo"], ap["bo"].reshape(1, E),
      ln_g.reshape(1, E), ln_b.reshape(1, E))
    return out[:, :Sq, :]


def ffn_ln(x, w1, b1, w2, b2, ln_g, ln_b, *, block_m=BLOCK_M, block_pf=BLOCK_PF):
    """x:(M,E) -> LayerNorm(x + FFN(x)), tiled over tokens and (arbitrary) pf_dim."""
    M, E = x.shape
    PF = w1.shape[1]
    bm = M if M <= block_m else block_m
    tpf = PF if PF <= block_pf else block_pf
    Mp, PFp = _round_up(M, bm), _round_up(PF, tpf)
    xp = _pad_axis(x, Mp, 0)
    w1p = _pad_axis(w1, PFp, 1)
    b1p = _pad_axis(b1.reshape(1, PF), PFp, 1)
    w2p = _pad_axis(w2, PFp, 0)
    out = pl.pallas_call(
        _ffn_ln_kernel,
        out_shape=jax.ShapeDtypeStruct((Mp, E), x.dtype),
        grid=(Mp // bm, PFp // tpf),
        in_specs=[pl.BlockSpec((bm, E), lambda i, k: (i, 0)),
                  pl.BlockSpec((E, tpf), lambda i, k: (0, k)),
                  pl.BlockSpec((1, tpf), lambda i, k: (0, k)),
                  pl.BlockSpec((tpf, E), lambda i, k: (k, 0)),
                  _const_spec((1, E), lambda i, k: (0, 0)),
                  _const_spec((1, E), lambda i, k: (0, 0)),
                  _const_spec((1, E), lambda i, k: (0, 0))],
        out_specs=pl.BlockSpec((bm, E), lambda i, k: (i, 0)),
        scratch_shapes=[pltpu.VMEM((bm, E), jnp.float32)],
        compiler_params=pltpu.CompilerParams(
            dimension_semantics=("parallel", "arbitrary"),
            vmem_limit_bytes=VMEM_LIMIT),
    )(xp, w1p, b1p, w2p, b2.reshape(1, E), ln_g.reshape(1, E), ln_b.reshape(1, E))
    return out[:M]


# ----------------------------- model glue (plain JAX) -----------------------------

def positional_embedding(seq_len, d_model):
    position = jnp.arange(seq_len, dtype=jnp.float32)[:, None]
    div_term = jnp.exp(jnp.arange(0, d_model, 2, dtype=jnp.float32)
                       * -(math.log(10000.0) / d_model))
    pe = jnp.zeros((seq_len, d_model), jnp.float32)
    pe = pe.at[:, 0::2].set(jnp.sin(position * div_term))
    pe = pe.at[:, 1::2].set(jnp.cos(position * div_term))
    return pe


def decoder_forward(params, src_tokens, trg_tokens, encoder_out, *, pad_id, heads):
    B, T = trg_tokens.shape
    S = src_tokens.shape[1]
    E = params["embed_tokens"].shape[1]

    # Tiny per-token validity vectors replace the materialized O(S^2) masks.
    trg_valid = (trg_tokens != pad_id).astype(jnp.float32)[:, :, None]   # (B,T,1)
    src_valid = (src_tokens != pad_id).astype(jnp.float32)[:, None, :]   # (B,1,S)
    ones_q = jnp.ones((B, T, 1), jnp.float32)
    ones_k = jnp.ones((B, 1, T), jnp.float32)

    x = params["embed_tokens"][trg_tokens] * math.sqrt(E)    # token gather (plain JAX)
    x = x + positional_embedding(T, E)[None]
    h = x.astype(ACT_DTYPE)                                  # embed dropout: identity
    enc = encoder_out.astype(ACT_DTYPE)

    for lp in params["layers"]:
        # self-attention: causal + query-pad masking (== reference trg_mask)
        h = mha_ln(lp["self_attn"], h, h, trg_valid, ones_k, True,
                   lp["ln_g"], lp["ln_b"], heads)
        # cross-attention: key-pad masking only (== reference src_mask)
        h = mha_ln(lp["src_attn"], h, enc, ones_q, src_valid, False,
                   lp["ln_g"], lp["ln_b"], heads)
        # position-wise feed-forward
        h = ffn_ln(h.reshape(B * T, E), lp["ffn_w1"], lp["ffn_b1"],
                   lp["ffn_w2"], lp["ffn_b2"],
                   lp["ln_g"], lp["ln_b"]).reshape(B, T, E)

    logits = linear(h.reshape(B * T, E), params["w_out"], params["b_out"],
                    out_dtype=jnp.float32)
    return logits, h.astype(jnp.float32)


# ----------------------------- deterministic params -----------------------------

def init_params(key, vocab, embed_dim, pf_dim, layers):
    def nrm(k, shape, scale=0.02):
        return (scale * jax.random.normal(k, shape)).astype(PARAM_DTYPE)

    keys = jax.random.split(key, 4 + layers)
    params = {
        "embed_tokens": nrm(keys[0], (vocab, embed_dim), 0.1),
        "w_out": nrm(keys[1], (embed_dim, vocab)).astype(MATMUL_DTYPE),
        "b_out": jnp.zeros((vocab,), PARAM_DTYPE),
    }
    layer_params = []
    for li in range(layers):
        lk = jax.random.split(keys[4 + li], 16)

        def attn_params(ks):
            wq = nrm(ks[0], (embed_dim, embed_dim))
            wk = nrm(ks[1], (embed_dim, embed_dim))
            wv = nrm(ks[2], (embed_dim, embed_dim))
            wo = nrm(ks[3], (embed_dim, embed_dim))
            return {"wq": wq.astype(MATMUL_DTYPE),
                    "bq": jnp.zeros((embed_dim,), PARAM_DTYPE),
                    "wkv": jnp.concatenate([wk, wv], axis=1).astype(MATMUL_DTYPE),
                    "bkv": jnp.zeros((2 * embed_dim,), PARAM_DTYPE),
                    "wo": wo.astype(MATMUL_DTYPE),
                    "bo": jnp.zeros((embed_dim,), PARAM_DTYPE)}

        layer_params.append({
            "ln_g": jnp.ones((embed_dim,), PARAM_DTYPE),
            "ln_b": jnp.zeros((embed_dim,), PARAM_DTYPE),
            "self_attn": attn_params(lk[0:4]),
            "src_attn": attn_params(lk[4:8]),
            "ffn_w1": nrm(lk[8], (embed_dim, pf_dim)).astype(MATMUL_DTYPE),
            "ffn_b1": jnp.zeros((pf_dim,), PARAM_DTYPE),
            "ffn_w2": nrm(lk[9], (pf_dim, embed_dim)).astype(MATMUL_DTYPE),
            "ffn_b2": jnp.zeros((embed_dim,), PARAM_DTYPE),
        })
    params["layers"] = layer_params
    return params


# ----------------------------- demo -----------------------------

if __name__ == "__main__":
    VOCAB = 16
    EMBED_DIM = 32
    HEADS = 4
    LAYERS = 2
    PF_DIM = 64
    PAD_ID = 0

    B, SRC_LEN, TRG_LEN = 2, 8, 8

    root = jax.random.PRNGKey(0)
    k_par, k_src, k_trg, k_enc = jax.random.split(root, 4)

    params = init_params(k_par, VOCAB, EMBED_DIM, PF_DIM, LAYERS)

    src_tokens = jax.random.randint(k_src, (B, SRC_LEN), 1, VOCAB, dtype=jnp.int32)
    trg_tokens = jax.random.randint(k_trg, (B, TRG_LEN), 1, VOCAB, dtype=jnp.int32)
    # add some padding to exercise the masks
    src_tokens = src_tokens.at[:, -2:].set(PAD_ID)
    trg_tokens = trg_tokens.at[:, -1:].set(PAD_ID)
    encoder_out = (0.1 * jax.random.normal(k_enc, (B, SRC_LEN, EMBED_DIM))
                   ).astype(jnp.float32)

    fwd = jax.jit(partial(decoder_forward, pad_id=PAD_ID, heads=HEADS))
    logits, h = fwd(params, src_tokens, trg_tokens, encoder_out)
    jax.block_until_ready((logits, h))

    assert logits.shape == (B * TRG_LEN, VOCAB)
    assert h.shape == (B, TRG_LEN, EMBED_DIM)
    assert bool(jnp.all(jnp.isfinite(logits))) and bool(jnp.all(jnp.isfinite(h)))
    print("KERNEL_OK")
</pallas_src>

<mosaic_0001>
module attributes {stable_mosaic.version = 11 : i64} {
  func.func @_linear_kernel(%arg0: i32, %arg1: i32, %arg2: memref<16x32xbf16, #tpu.memory_space<vmem>>, %arg3: memref<32x64xbf16, #tpu.memory_space<vmem>>, %arg4: memref<1x64xf32, #tpu.memory_space<vmem>>, %arg5: memref<16x64xbf16, #tpu.memory_space<vmem>>) attributes {dimension_semantics = [#tpu.dimension_semantics<parallel>, #tpu.dimension_semantics<parallel>], iteration_bounds = array<i64: 1, 1>, scalar_prefetch = 0 : i64, scratch_operands = 0 : i64, tpu.core_type = #tpu.core_type<tc>, window_params = [{transform_indices = @transform_0, window_bounds = array<i64: 16, 32>}, {transform_indices = @transform_1, window_bounds = array<i64: 32, 64>}, {transform_indices = @transform_2, window_bounds = array<i64: 1, 64>}, {transform_indices = @transform_3, window_bounds = array<i64: 16, 64>}]} {
    %c0 = arith.constant 0 : index
    %c0_0 = arith.constant 0 : index
    %0 = vector.load %arg2[%c0, %c0_0] : memref<16x32xbf16, #tpu.memory_space<vmem>>, vector<16x32xbf16>
    %c0_1 = arith.constant 0 : index
    %c0_2 = arith.constant 0 : index
    %1 = vector.load %arg3[%c0_1, %c0_2] : memref<32x64xbf16, #tpu.memory_space<vmem>>, vector<32x64xbf16>
    %cst = arith.constant dense<0.000000e+00> : vector<16x64xf32>
    %2 = tpu.matmul %0, %1, %cst {dimension_numbers = #tpu.dot_dimension_numbers<[1], [0], [0], [1], [0, 0, 1, 1], [], []>} : vector<16x32xbf16>, vector<32x64xbf16>, vector<16x64xf32> -> vector<16x64xf32>
    %c0_3 = arith.constant 0 : index
    %c0_4 = arith.constant 0 : index
    %3 = vector.load %arg4[%c0_3, %c0_4] : memref<1x64xf32, #tpu.memory_space<vmem>>, vector<1x64xf32>
    %4 = vector.broadcast %3 : vector<1x64xf32> to vector<16x64xf32>
    %5 = arith.addf %2, %4 : vector<16x64xf32>
    %6 = arith.truncf %5 : vector<16x64xf32> to vector<16x64xbf16>
    %c0_5 = arith.constant 0 : index
    %c0_6 = arith.constant 0 : index
    %7 = vector.load %arg5[%c0_5, %c0_6] : memref<16x64xbf16, #tpu.memory_space<vmem>>, vector<16x64xbf16>
    tpu.vector_store %arg5[%c0_5, %c0_6], %6 {strides = array<i32>} : memref<16x64xbf16, #tpu.memory_space<vmem>>, vector<16x64xbf16>,
    return
  }
  func.func @transform_0(%arg0: i32, %arg1: i32) -> (i32, i32) {
    %c0_i32 = arith.constant 0 : i32
    %c0_i32_0 = arith.constant 0 : i32
    return %arg0, %c0_i32 : i32, i32
  }
  func.func @transform_1(%arg0: i32, %arg1: i32) -> (i32, i32) {
    %c0_i32 = arith.constant 0 : i32
    %c0_i32_0 = arith.constant 0 : i32
    return %c0_i32, %arg1 : i32, i32
  }
  func.func @transform_2(%arg0: i32, %arg1: i32) -> (i32, i32) {
    %c0_i32 = arith.constant 0 : i32
    %c0_i32_0 = arith.constant 0 : i32
    return %c0_i32, %arg1 : i32, i32
  }
  func.func @transform_3(%arg0: i32, %arg1: i32) -> (i32, i32) {
    %c0_i32 = arith.constant 0 : i32
    return %arg0, %arg1 : i32, i32
  }
}

module attributes {stable_mosaic.version = 11 : i64} {
  func.func @_flash_mha_ln_kernel(%arg0: i32, %arg1: i32, %arg2: i32, %arg3: memref<1x8x32xbf16, #tpu.memory_space<vmem>>, %arg4: memref<1x8x64xbf16, #tpu.memory_space<vmem>>, %arg5: memref<1x8x1xf32, #tpu.memory_space<vmem>>, %arg6: memref<1x1x8xf32, #tpu.memory_space<vmem>>, %arg7: memref<32x32xbf16, #tpu.memory_space<vmem>>, %arg8: memref<1x32xf32, #tpu.memory_space<vmem>>, %arg9: memref<32x32xbf16, #tpu.memory_space<vmem>>, %arg10: memref<1x32xf32, #tpu.memory_space<vmem>>, %arg11: memref<1x32xf32, #tpu.memory_space<vmem>>, %arg12: memref<1x32xf32, #tpu.memory_space<vmem>>, %arg13: memref<1x8x32xbf16, #tpu.memory_space<vmem>>, %arg14: memref<8x32xbf16, #tpu.memory_space<vmem>>, %arg15: memref<4x8x1xf32, #tpu.memory_space<vmem>>, %arg16: memref<4x8x1xf32, #tpu.memory_space<vmem>>, %arg17: memref<4x8x8xf32, #tpu.memory_space<vmem>>) attributes {dimension_semantics = [#tpu.dimension_semantics<parallel>, #tpu.dimension_semantics<parallel>, #tpu.dimension_semantics<arbitrary>], iteration_bounds = array<i64: 2, 1, 1>, scalar_prefetch = 0 : i64, scratch_operands = 4 : i64, tpu.core_type = #tpu.core_type<tc>, window_params = [{transform_indices = @transform_0, window_bounds = array<i64: 1, 8, 32>}, {transform_indices = @transform_1, window_bounds = array<i64: 1, 8, 64>}, {transform_indices = @transform_2, window_bounds = array<i64: 1, 8, 1>}, {transform_indices = @transform_3, window_bounds = array<i64: 1, 1, 8>}, {pipeline_mode = #tpu.pipeline_mode<synchronous>, transform_indices = @transform_4, window_bounds = array<i64: 32, 32>}, {pipeline_mode = #tpu.pipeline_mode<synchronous>, transform_indices = @transform_5, window_bounds = array<i64: 1, 32>}, {pipeline_mode = #tpu.pipeline_mode<synchronous>, transform_indices = @transform_6, window_bounds = array<i64: 32, 32>}, {pipeline_mode = #tpu.pipeline_mode<synchronous>, transform_indices = @transform_7, window_bounds = array<i64: 1, 32>}, {pipeline_mode = #tpu.pipeline_mode<synchronous>, transform_indices = @transform_8, window_bounds = array<i64: 1, 32>}, {pipeline_mode = #tpu.pipeline_mode<synchronous>, transform_indices = @transform_9, window_bounds = array<i64: 1, 32>}, {transform_indices = @transform_10, window_bounds = array<i64: 1, 8, 32>}]} {
    %c0_i32 = arith.constant 0 : i32
    %0 = arith.cmpi eq, %arg2, %c0_i32 : i32
    %1 = arith.extui %0 : i1 to i32
    %c0_i32_0 = arith.constant 0 : i32
    %2 = arith.cmpi ne, %1, %c0_i32_0 : i32
    scf.if %2 {
      %c0_104 = arith.constant 0 : index
      %c0_105 = arith.constant 0 : index
      %c0_106 = arith.constant 0 : index
      %182 = vector.load %arg3[%c0_104, %c0_105, %c0_106] : memref<1x8x32xbf16, #tpu.memory_space<vmem>>, vector<1x8x32xbf16>
      %183 = vector.shape_cast %182 : vector<1x8x32xbf16> to vector<8x32xbf16>
      %c0_107 = arith.constant 0 : index
      %c0_108 = arith.constant 0 : index
      %184 = vector.load %arg7[%c0_107, %c0_108] : memref<32x32xbf16, #tpu.memory_space<vmem>>, vector<32x32xbf16>
      %cst_109 = arith.constant dense<0.000000e+00> : vector<8x32xf32>
      %185 = tpu.matmul %183, %184, %cst_109 {dimension_numbers = #tpu.dot_dimension_numbers<[1], [0], [0], [1], [0, 0, 1, 1], [], []>} : vector<8x32xbf16>, vector<32x32xbf16>, vector<8x32xf32> -> vector<8x32xf32>
      %c0_110 = arith.constant 0 : index
      %c0_111 = arith.constant 0 : index
      %186 = vector.load %arg8[%c0_110, %c0_111] : memref<1x32xf32, #tpu.memory_space<vmem>>, vector<1x32xf32>
      %187 = vector.broadcast %186 : vector<1x32xf32> to vector<8x32xf32>
      %188 = arith.addf %185, %187 : vector<8x32xf32>
      %cst_112 = arith.constant 0.353553385 : f32
      %189 = vector.broadcast %cst_112 : f32 to vector<8x32xf32>
      %190 = arith.mulf %188, %189 : vector<8x32xf32>
      %191 = arith.truncf %190 : vector<8x32xf32> to vector<8x32xbf16>
      %c0_113 = arith.constant 0 : index
      %c0_114 = arith.constant 0 : index
      %192 = vector.load %arg14[%c0_113, %c0_114] : memref<8x32xbf16, #tpu.memory_space<vmem>>, vector<8x32xbf16>
      tpu.vector_store %arg14[%c0_113, %c0_114], %191 {strides = array<i32>} : memref<8x32xbf16, #tpu.memory_space<vmem>>, vector<8x32xbf16>,
      %cst_115 = arith.constant -1.000000e+10 : f32
      %193 = vector.broadcast %cst_115 : f32 to vector<4x8x1xf32>
      %c0_116 = arith.constant 0 : index
      %c0_117 = arith.constant 0 : index
      %c0_118 = arith.constant 0 : index
      %194 = vector.load %arg15[%c0_116, %c0_117, %c0_118] : memref<4x8x1xf32, #tpu.memory_space<vmem>>, vector<4x8x1xf32>
      tpu.vector_store %arg15[%c0_116, %c0_117, %c0_118], %193 {strides = array<i32>} : memref<4x8x1xf32, #tpu.memory_space<vmem>>, vector<4x8x1xf32>,
      %cst_119 = arith.constant 0.000000e+00 : f32
      %195 = vector.broadcast %cst_119 : f32 to vector<4x8x1xf32>
      %c0_120 = arith.constant 0 : index
      %c0_121 = arith.constant 0 : index
      %c0_122 = arith.constant 0 : index
      %196 = vector.load %arg16[%c0_120, %c0_121, %c0_122] : memref<4x8x1xf32, #tpu.memory_space<vmem>>, vector<4x8x1xf32>
      tpu.vector_store %arg16[%c0_120, %c0_121, %c0_122], %195 {strides = array<i32>} : memref<4x8x1xf32, #tpu.memory_space<vmem>>, vector<4x8x1xf32>,
      %cst_123 = arith.constant 0.000000e+00 : f32
      %197 = vector.broadcast %cst_123 : f32 to vector<4x8x8xf32>
      %c0_124 = arith.constant 0 : index
      %c0_125 = arith.constant 0 : index
      %c0_126 = arith.constant 0 : index
      %198 = vector.load %arg17[%c0_124, %c0_125, %c0_126] : memref<4x8x8xf32, #tpu.memory_space<vmem>>, vector<4x8x8xf32>
      tpu.vector_store %arg17[%c0_124, %c0_125, %c0_126], %197 {strides = array<i32>} : memref<4x8x8xf32, #tpu.memory_space<vmem>>, vector<4x8x8xf32>,
    } else {
    }
    %c0 = arith.constant 0 : index
    %c0_1 = arith.constant 0 : index
    %c0_2 = arith.constant 0 : index
    %3 = vector.load %arg4[%c0, %c0_1, %c0_2] : memref<1x8x64xbf16, #tpu.memory_space<vmem>>, vector<1x8x64xbf16>
    %4 = vector.shape_cast %3 : vector<1x8x64xbf16> to vector<8x64xbf16>
    %c0_3 = arith.constant 0 : index
    %c0_4 = arith.constant 0 : index
    %5 = vector.load %arg14[%c0_3, %c0_4] : memref<8x32xbf16, #tpu.memory_space<vmem>>, vector<8x32xbf16>
    %c0_5 = arith.constant 0 : index
    %c0_6 = arith.constant 0 : index
    %c0_7 = arith.constant 0 : index
    %6 = vector.load %arg5[%c0_5, %c0_6, %c0_7] : memref<1x8x1xf32, #tpu.memory_space<vmem>>, vector<1x8x1xf32>
    %7 = vector.shape_cast %6 : vector<1x8x1xf32> to vector<8x1xf32>
    %cst = arith.constant 5.000000e-01 : f32
    %8 = vector.broadcast %cst : f32 to vector<8x1xf32>
    %9 = arith.cmpf ogt, %7, %8 : vector<8x1xf32>
    %c0_8 = arith.constant 0 : index
    %c0_9 = arith.constant 0 : index
    %c0_10 = arith.constant 0 : index
    %10 = vector.load %arg6[%c0_8, %c0_9, %c0_10] : memref<1x1x8xf32, #tpu.memory_space<vmem>>, vector<1x1x8xf32>
    %11 = vector.shape_cast %10 : vector<1x1x8xf32> to vector<1x8xf32>
    %cst_11 = arith.constant 5.000000e-01 : f32
    %12 = vector.broadcast %cst_11 : f32 to vector<1x8xf32>
    %13 = arith.cmpf ogt, %11, %12 : vector<1x8xf32>
    %14 = vector.broadcast %9 : vector<8x1xi1> to vector<8x8xi1>
    %15 = vector.broadcast %13 : vector<1x8xi1> to vector<8x8xi1>
    %16 = arith.andi %14, %15 : vector<8x8xi1>
    %c8_i32 = arith.constant 8 : i32
    %17 = arith.muli %arg1, %c8_i32 : i32
    %18 = tpu.iota {dimensions = array<i32: 0>} : vector<8x8xi32>
    %19 = vector.broadcast %17 : i32 to vector<8x8xi32>
    %20 = arith.addi %19, %18 : vector<8x8xi32>
    %c8_i32_12 = arith.constant 8 : i32
    %21 = arith.muli %arg2, %c8_i32_12 : i32
    %22 = tpu.iota {dimensions = array<i32: 1>} : vector<8x8xi32>
    %23 = vector.broadcast %21 : i32 to vector<8x8xi32>
    %24 = arith.addi %23, %22 : vector<8x8xi32>
    %25 = arith.cmpi sle, %24, %20 : vector<8x8xi32>
    %26 = arith.andi %16, %25 : vector<8x8xi1>
    %27 = vector.extract_strided_slice %5 {offsets = [0, 0], sizes = [8, 8], strides = [1, 1]} : vector<8x32xbf16> to vector<8x8xbf16>
    %28 = vector.extract_strided_slice %4 {offsets = [0, 0], sizes = [8, 8], strides = [1, 1]} : vector<8x64xbf16> to vector<8x8xbf16>
    %29 = vector.extract_strided_slice %4 {offsets = [0, 32], sizes = [8, 8], strides = [1, 1]} : vector<8x64xbf16> to vector<8x8xbf16>
    %cst_13 = arith.constant dense<0.000000e+00> : vector<8x8xf32>
    %30 = tpu.matmul %27, %28, %cst_13 {dimension_numbers = #tpu.dot_dimension_numbers<[1], [1], [0], [0], [0, 0, 1, 0], [], []>} : vector<8x8xbf16>, vector<8x8xbf16>, vector<8x8xf32> -> vector<8x8xf32>
    %cst_14 = arith.constant -1.000000e+10 : f32
    %31 = vector.broadcast %cst_14 : f32 to vector<8x8xf32>
    %32 = arith.select %26, %30, %31 : vector<8x8xi1>, vector<8x8xf32>
    %c0_15 = arith.constant 0 : index
    %c0_16 = arith.constant 0 : index
    %c0_17 = arith.constant 0 : index
    %33 = vector.load %arg15[%c0_15, %c0_16, %c0_17] : memref<4x8x1xf32, #tpu.memory_space<vmem>>, vector<1x8x1xf32>
    %34 = vector.shape_cast %33 : vector<1x8x1xf32> to vector<8x1xf32>
    %cst_18 = arith.constant dense<0xFF800000> : vector<8xf32>
    %35 = vector.multi_reduction <maximumf>, %32, %cst_18 [1] : vector<8x8xf32> to vector<8xf32>
    %36 = vector.shape_cast %35 : vector<8xf32> to vector<8x1xf32>
    %37 = arith.maximumf %34, %36 : vector<8x1xf32>
    %38 = arith.subf %34, %37 : vector<8x1xf32>
    %39 = math.exp %38 : vector<8x1xf32>
    %40 = vector.broadcast %37 : vector<8x1xf32> to vector<8x8xf32>
    %41 = arith.subf %32, %40 : vector<8x8xf32>
    %42 = math.exp %41 : vector<8x8xf32>
    %c0_19 = arith.constant 0 : index
    %c0_20 = arith.constant 0 : index
    %c0_21 = arith.constant 0 : index
    %43 = vector.load %arg16[%c0_19, %c0_20, %c0_21] : memref<4x8x1xf32, #tpu.memory_space<vmem>>, vector<1x8x1xf32>
    %44 = vector.shape_cast %43 : vector<1x8x1xf32> to vector<8x1xf32>
    %45 = arith.mulf %39, %44 : vector<8x1xf32>
    %cst_22 = arith.constant dense<0.000000e+00> : vector<8xf32>
    %46 = vector.multi_reduction <add>, %42, %cst_22 [1] : vector<8x8xf32> to vector<8xf32>
    %47 = vector.shape_cast %46 : vector<8xf32> to vector<8x1xf32>
    %48 = arith.addf %45, %47 : vector<8x1xf32>
    %c0_23 = arith.constant 0 : index
    %c0_24 = arith.constant 0 : index
    %c0_25 = arith.constant 0 : index
    %49 = vector.load %arg16[%c0_23, %c0_24, %c0_25] : memref<4x8x1xf32, #tpu.memory_space<vmem>>, vector<1x8x1xf32>
    %50 = vector.shape_cast %49 : vector<1x8x1xf32> to vector<8x1xf32>
    %51 = vector.shape_cast %48 : vector<8x1xf32> to vector<1x8x1xf32>
    tpu.vector_store %arg16[%c0_23, %c0_24, %c0_25], %51 {strides = array<i32>} : memref<4x8x1xf32, #tpu.memory_space<vmem>>, vector<1x8x1xf32>,
    %c0_26 = arith.constant 0 : index
    %c0_27 = arith.constant 0 : index
    %c0_28 = arith.constant 0 : index
    %52 = vector.load %arg17[%c0_26, %c0_27, %c0_28] : memref<4x8x8xf32, #tpu.memory_space<vmem>>, vector<1x8x8xf32>
    %53 = vector.shape_cast %52 : vector<1x8x8xf32> to vector<8x8xf32>
    %54 = vector.broadcast %39 : vector<8x1xf32> to vector<8x8xf32>
    %55 = arith.mulf %54, %53 : vector<8x8xf32>
    %56 = arith.truncf %42 : vector<8x8xf32> to vector<8x8xbf16>
    %cst_29 = arith.constant dense<0.000000e+00> : vector<8x8xf32>
    %57 = tpu.matmul %56, %29, %cst_29 {dimension_numbers = #tpu.dot_dimension_numbers<[1], [0], [0], [1], [0, 0, 1, 1], [], []>} : vector<8x8xbf16>, vector<8x8xbf16>, vector<8x8xf32> -> vector<8x8xf32>
    %58 = arith.addf %55, %57 : vector<8x8xf32>
    %c0_30 = arith.constant 0 : index
    %c0_31 = arith.constant 0 : index
    %c0_32 = arith.constant 0 : index
    %59 = vector.load %arg17[%c0_30, %c0_31, %c0_32] : memref<4x8x8xf32, #tpu.memory_space<vmem>>, vector<1x8x8xf32>
    %60 = vector.shape_cast %59 : vector<1x8x8xf32> to vector<8x8xf32>
    %61 = vector.shape_cast %58 : vector<8x8xf32> to vector<1x8x8xf32>
    tpu.vector_store %arg17[%c0_30, %c0_31, %c0_32], %61 {strides = array<i32>} : memref<4x8x8xf32, #tpu.memory_space<vmem>>, vector<1x8x8xf32>,
    %c0_33 = arith.constant 0 : index
    %c0_34 = arith.constant 0 : index
    %c0_35 = arith.constant 0 : index
    %62 = vector.load %arg15[%c0_33, %c0_34, %c0_35] : memref<4x8x1xf32, #tpu.memory_space<vmem>>, vector<1x8x1xf32>
    %63 = vector.shape_cast %62 : vector<1x8x1xf32> to vector<8x1xf32>
    %64 = vector.shape_cast %37 : vector<8x1xf32> to vector<1x8x1xf32>
    tpu.vector_store %arg15[%c0_33, %c0_34, %c0_35], %64 {strides = array<i32>} : memref<4x8x1xf32, #tpu.memory_space<vmem>>, vector<1x8x1xf32>,
    %65 = vector.extract_strided_slice %5 {offsets = [0, 8], sizes = [8, 8], strides = [1, 1]} : vector<8x32xbf16> to vector<8x8xbf16>
    %66 = vector.extract_strided_slice %4 {offsets = [0, 8], sizes = [8, 8], strides = [1, 1]} : vector<8x64xbf16> to vector<8x8xbf16>
    %67 = vector.extract_strided_slice %4 {offsets = [0, 40], sizes = [8, 8], strides = [1, 1]} : vector<8x64xbf16> to vector<8x8xbf16>
    %cst_36 = arith.constant dense<0.000000e+00> : vector<8x8xf32>
    %68 = tpu.matmul %65, %66, %cst_36 {dimension_numbers = #tpu.dot_dimension_numbers<[1], [1], [0], [0], [0, 0, 1, 0], [], []>} : vector<8x8xbf16>, vector<8x8xbf16>, vector<8x8xf32> -> vector<8x8xf32>
    %cst_37 = arith.constant -1.000000e+10 : f32
    %69 = vector.broadcast %cst_37 : f32 to vector<8x8xf32>
    %70 = arith.select %26, %68, %69 : vector<8x8xi1>, vector<8x8xf32>
    %c1 = arith.constant 1 : index
    %c0_38 = arith.constant 0 : index
    %c0_39 = arith.constant 0 : index
    %71 = vector.load %arg15[%c1, %c0_38, %c0_39] : memref<4x8x1xf32, #tpu.memory_space<vmem>>, vector<1x8x1xf32>
    %72 = vector.shape_cast %71 : vector<1x8x1xf32> to vector<8x1xf32>
    %cst_40 = arith.constant dense<0xFF800000> : vector<8xf32>
    %73 = vector.multi_reduction <maximumf>, %70, %cst_40 [1] : vector<8x8xf32> to vector<8xf32>
    %74 = vector.shape_cast %73 : vector<8xf32> to vector<8x1xf32>
    %75 = arith.maximumf %72, %74 : vector<8x1xf32>
    %76 = arith.subf %72, %75 : vector<8x1xf32>
    %77 = math.exp %76 : vector<8x1xf32>
    %78 = vector.broadcast %75 : vector<8x1xf32> to vector<8x8xf32>
    %79 = arith.subf %70, %78 : vector<8x8xf32>
    %80 = math.exp %79 : vector<8x8xf32>
    %c1_41 = arith.constant 1 : index
    %c0_42 = arith.constant 0 : index
    %c0_43 = arith.constant 0 : index
    %81 = vector.load %arg16[%c1_41, %c0_42, %c0_43] : memref<4x8x1xf32, #tpu.memory_space<vmem>>, vector<1x8x1xf32>
    %82 = vector.shape_cast %81 : vector<1x8x1xf32> to vector<8x1xf32>
    %83 = arith.mulf %77, %82 : vector<8x1xf32>
    %cst_44 = arith.constant dense<0.000000e+00> : vector<8xf32>
    %84 = vector.multi_reduction <add>, %80, %cst_44 [1] : vector<8x8xf32> to vector<8xf32>
    %85 = vector.shape_cast %84 : vector<8xf32> to vector<8x1xf32>
    %86 = arith.addf %83, %85 : vector<8x1xf32>
    %c1_45 = arith.constant 1 : index
    %c0_46 = arith.constant 0 : index
    %c0_47 = arith.constant 0 : index
    %87 = vector.load %arg16[%c1_45, %c0_46, %c0_47] : memref<4x8x1xf32, #tpu.memory_space<vmem>>, vector<1x8x1xf32>
    %88 = vector.shape_cast %87 : vector<1x8x1xf32> to vector<8x1xf32>
    %89 = vector.shape_cast %86 : vector<8x1xf32> to vector<1x8x1xf32>
    tpu.vector_store %arg16[%c1_45, %c0_46, %c0_47], %89 {strides = array<i32>} : memref<4x8x1xf32, #tpu.memory_space<vmem>>, vector<1x8x1xf32>,
    %c1_48 = arith.constant 1 : index
    %c0_49 = arith.constant 0 : index
    %c0_50 = arith.constant 0 : index
    %90 = vector.load %arg17[%c1_48, %c0_49, %c0_50] : memref<4x8x8xf32, #tpu.memory_space<vmem>>, vector<1x8x8xf32>
    %91 = vector.shape_cast %90 : vector<1x8x8xf32> to vector<8x8xf32>
    %92 = vector.broadcast %77 : vector<8x1xf32> to vector<8x8xf32>
    %93 = arith.mulf %92, %91 : vector<8x8xf32>
    %94 = arith.truncf %80 : vector<8x8xf32> to vector<8x8xbf16>
    %cst_51 = arith.constant dense<0.000000e+00> : vector<8x8xf32>
    %95 = tpu.matmul %94, %67, %cst_51 {dimension_numbers = #tpu.dot_dimension_numbers<[1], [0], [0], [1], [0, 0, 1, 1], [], []>} : vector<8x8xbf16>, vector<8x8xbf16>, vector<8x8xf32> -> vector<8x8xf32>
    %96 = arith.addf %93, %95 : vector<8x8xf32>
    %c1_52 = arith.constant 1 : index
    %c0_53 = arith.constant 0 : index
    %c0_54 = arith.constant 0 : index
    %97 = vector.load %arg17[%c1_52, %c0_53, %c0_54] : memref<4x8x8xf32, #tpu.memory_space<vmem>>, vector<1x8x8xf32>
    %98 = vector.shape_cast %97 : vector<1x8x8xf32> to vector<8x8xf32>
    %99 = vector.shape_cast %96 : vector<8x8xf32> to vector<1x8x8xf32>
    tpu.vector_store %arg17[%c1_52, %c0_53, %c0_54], %99 {strides = array<i32>} : memref<4x8x8xf32, #tpu.memory_space<vmem>>, vector<1x8x8xf32>,
    %c1_55 = arith.constant 1 : index
    %c0_56 = arith.constant 0 : index
    %c0_57 = arith.constant 0 : index
    %100 = vector.load %arg15[%c1_55, %c0_56, %c0_57] : memref<4x8x1xf32, #tpu.memory_space<vmem>>, vector<1x8x1xf32>
    %101 = vector.shape_cast %100 : vector<1x8x1xf32> to vector<8x1xf32>
    %102 = vector.shape_cast %75 : vector<8x1xf32> to vector<1x8x1xf32>
    tpu.vector_store %arg15[%c1_55, %c0_56, %c0_57], %102 {strides = array<i32>} : memref<4x8x1xf32, #tpu.memory_space<vmem>>, vector<1x8x1xf32>,
    %103 = vector.extract_strided_slice %5 {offsets = [0, 16], sizes = [8, 8], strides = [1, 1]} : vector<8x32xbf16> to vector<8x8xbf16>
    %104 = vector.extract_strided_slice %4 {offsets = [0, 16], sizes = [8, 8], strides = [1, 1]} : vector<8x64xbf16> to vector<8x8xbf16>
    %105 = vector.extract_strided_slice %4 {offsets = [0, 48], sizes = [8, 8], strides = [1, 1]} : vector<8x64xbf16> to vector<8x8xbf16>
    %cst_58 = arith.constant dense<0.000000e+00> : vector<8x8xf32>
    %106 = tpu.matmul %103, %104, %cst_58 {dimension_numbers = #tpu.dot_dimension_numbers<[1], [1], [0], [0], [0, 0, 1, 0], [], []>} : vector<8x8xbf16>, vector<8x8xbf16>, vector<8x8xf32> -> vector<8x8xf32>
    %cst_59 = arith.constant -1.000000e+10 : f32
    %107 = vector.broadcast %cst_59 : f32 to vector<8x8xf32>
    %108 = arith.select %26, %106, %107 : vector<8x8xi1>, vector<8x8xf32>
    %c2 = arith.constant 2 : index
    %c0_60 = arith.constant 0 : index
    %c0_61 = arith.constant 0 : index
    %109 = vector.load %arg15[%c2, %c0_60, %c0_61] : memref<4x8x1xf32, #tpu.memory_space<vmem>>, vector<1x8x1xf32>
    %110 = vector.shape_cast %109 : vector<1x8x1xf32> to vector<8x1xf32>
    %cst_62 = arith.constant dense<0xFF800000> : vector<8xf32>
    %111 = vector.multi_reduction <maximumf>, %108, %cst_62 [1] : vector<8x8xf32> to vector<8xf32>
    %112 = vector.shape_cast %111 : vector<8xf32> to vector<8x1xf32>
    %113 = arith.maximumf %110, %112 : vector<8x1xf32>
    %114 = arith.subf %110, %113 : vector<8x1xf32>
    %115 = math.exp %114 : vector<8x1xf32>
    %116 = vector.broadcast %113 : vector<8x1xf32> to vector<8x8xf32>
    %117 = arith.subf %108, %116 : vector<8x8xf32>
    %118 = math.exp %117 : vector<8x8xf32>
    %c2_63 = arith.constant 2 : index
    %c0_64 = arith.constant 0 : index
    %c0_65 = arith.constant 0 : index
    %119 = vector.load %arg16[%c2_63, %c0_64, %c0_65] : memref<4x8x1xf32, #tpu.memory_space<vmem>>, vector<1x8x1xf32>
    %120 = vector.shape_cast %119 : vector<1x8x1xf32> to vector<8x1xf32>
    %121 = arith.mulf %115, %120 : vector<8x1xf32>
    %cst_66 = arith.constant dense<0.000000e+00> : vector<8xf32>
    %122 = vector.multi_reduction <add>, %118, %cst_66 [1] : vector<8x8xf32> to vector<8xf32>
    %123 = vector.shape_cast %122 : vector<8xf32> to vector<8x1xf32>
    %124 = arith.addf %121, %123 : vector<8x1xf32>
    %c2_67 = arith.constant 2 : index
    %c0_68 = arith.constant 0 : index
    %c0_69 = arith.constant 0 : index
    %125 = vector.load %arg16[%c2_67, %c0_68, %c0_69] : memref<4x8x1xf32, #tpu.memory_space<vmem>>, vector<1x8x1xf32>
    %126 = vector.shape_cast %125 : vector<1x8x1xf32> to vector<8x1xf32>
    %127 = vector.shape_cast %124 : vector<8x1xf32> to vector<1x8x1xf32>
    tpu.vector_store %arg16[%c2_67, %c0_68, %c0_69], %127 {strides = array<i32>} : memref<4x8x1xf32, #tpu.memory_space<vmem>>, vector<1x8x1xf32>,
    %c2_70 = arith.constant 2 : index
    %c0_71 = arith.constant 0 : index
    %c0_72 = arith.constant 0 : index
    %128 = vector.load %arg17[%c2_70, %c0_71, %c0_72] : memref<4x8x8xf32, #tpu.memory_space<vmem>>, vector<1x8x8xf32>
    %129 = vector.shape_cast %128 : vector<1x8x8xf32> to vector<8x8xf32>
    %130 = vector.broadcast %115 : vector<8x1xf32> to vector<8x8xf32>
    %131 = arith.mulf %130, %129 : vector<8x8xf32>
    %132 = arith.truncf %118 : vector<8x8xf32> to vector<8x8xbf16>
    %cst_73 = arith.constant dense<0.000000e+00> : vector<8x8xf32>
    %133 = tpu.matmul %132, %105, %cst_73 {dimension_numbers = #tpu.dot_dimension_numbers<[1], [0], [0], [1], [0, 0, 1, 1], [], []>} : vector<8x8xbf16>, vector<8x8xbf16>, vector<8x8xf32> -> vector<8x8xf32>
    %134 = arith.addf %131, %133 : vector<8x8xf32>
    %c2_74 = arith.constant 2 : index
    %c0_75 = arith.constant 0 : index
    %c0_76 = arith.constant 0 : index
    %135 = vector.load %arg17[%c2_74, %c0_75, %c0_76] : memref<4x8x8xf32, #tpu.memory_space<vmem>>, vector<1x8x8xf32>
    %136 = vector.shape_cast %135 : vector<1x8x8xf32> to vector<8x8xf32>
    %137 = vector.shape_cast %134 : vector<8x8xf32> to vector<1x8x8xf32>
    tpu.vector_store %arg17[%c2_74, %c0_75, %c0_76], %137 {strides = array<i32>} : memref<4x8x8xf32, #tpu.memory_space<vmem>>, vector<1x8x8xf32>,
    %c2_77 = arith.constant 2 : index
    %c0_78 = arith.constant 0 : index
    %c0_79 = arith.constant 0 : index
    %138 = vector.load %arg15[%c2_77, %c0_78, %c0_79] : memref<4x8x1xf32, #tpu.memory_space<vmem>>, vector<1x8x1xf32>
    %139 = vector.shape_cast %138 : vector<1x8x1xf32> to vector<8x1xf32>
    %140 = vector.shape_cast %113 : vector<8x1xf32> to vector<1x8x1xf32>
    tpu.vector_store %arg15[%c2_77, %c0_78, %c0_79], %140 {strides = array<i32>} : memref<4x8x1xf32, #tpu.memory_space<vmem>>, vector<1x8x1xf32>,
    %141 = vector.extract_strided_slice %5 {offsets = [0, 24], sizes = [8, 8], strides = [1, 1]} : vector<8x32xbf16> to vector<8x8xbf16>
    %142 = vector.extract_strided_slice %4 {offsets = [0, 24], sizes = [8, 8], strides = [1, 1]} : vector<8x64xbf16> to vector<8x8xbf16>
    %143 = vector.extract_strided_slice %4 {offsets = [0, 56], sizes = [8, 8], strides = [1, 1]} : vector<8x64xbf16> to vector<8x8xbf16>
    %cst_80 = arith.constant dense<0.000000e+00> : vector<8x8xf32>
    %144 = tpu.matmul %141, %142, %cst_80 {dimension_numbers = #tpu.dot_dimension_numbers<[1], [1], [0], [0], [0, 0, 1, 0], [], []>} : vector<8x8xbf16>, vector<8x8xbf16>, vector<8x8xf32> -> vector<8x8xf32>
    %cst_81 = arith.constant -1.000000e+10 : f32
    %145 = vector.broadcast %cst_81 : f32 to vector<8x8xf32>
    %146 = arith.select %26, %144, %145 : vector<8x8xi1>, vector<8x8xf32>
    %c3 = arith.constant 3 : index
    %c0_82 = arith.constant 0 : index
    %c0_83 = arith.constant 0 : index
    %147 = vector.load %arg15[%c3, %c0_82, %c0_83] : memref<4x8x1xf32, #tpu.memory_space<vmem>>, vector<1x8x1xf32>
    %148 = vector.shape_cast %147 : vector<1x8x1xf32> to vector<8x1xf32>
    %cst_84 = arith.constant dense<0xFF800000> : vector<8xf32>
    %149 = vector.multi_reduction <maximumf>, %146, %cst_84 [1] : vector<8x8xf32> to vector<8xf32>
    %150 = vector.shape_cast %149 : vector<8xf32> to vector<8x1xf32>
    %151 = arith.maximumf %148, %150 : vector<8x1xf32>
    %152 = arith.subf %148, %151 : vector<8x1xf32>
    %153 = math.exp %152 : vector<8x1xf32>
    %154 = vector.broadcast %151 : vector<8x1xf32> to vector<8x8xf32>
    %155 = arith.subf %146, %154 : vector<8x8xf32>
    %156 = math.exp %155 : vector<8x8xf32>
    %c3_85 = arith.constant 3 : index
    %c0_86 = arith.constant 0 : index
    %c0_87 = arith.constant 0 : index
    %157 = vector.load %arg16[%c3_85, %c0_86, %c0_87] : memref<4x8x1xf32, #tpu.memory_space<vmem>>, vector<1x8x1xf32>
    %158 = vector.shape_cast %157 : vector<1x8x1xf32> to vector<8x1xf32>
    %159 = arith.mulf %153, %158 : vector<8x1xf32>
    %cst_88 = arith.constant dense<0.000000e+00> : vector<8xf32>
    %160 = vector.multi_reduction <add>, %156, %cst_88 [1] : vector<8x8xf32> to vector<8xf32>
    %161 = vector.shape_cast %160 : vector<8xf32> to vector<8x1xf32>
    %162 = arith.addf %159, %161 : vector<8x1xf32>
    %c3_89 = arith.constant 3 : index
    %c0_90 = arith.constant 0 : index
    %c0_91 = arith.constant 0 : index
    %163 = vector.load %arg16[%c3_89, %c0_90, %c0_91] : memref<4x8x1xf32, #tpu.memory_space<vmem>>, vector<1x8x1xf32>
    %164 = vector.shape_cast %163 : vector<1x8x1xf32> to vector<8x1xf32>
    %165 = vector.shape_cast %162 : vector<8x1xf32> to vector<1x8x1xf32>
    tpu.vector_store %arg16[%c3_89, %c0_90, %c0_91], %165 {strides = array<i32>} : memref<4x8x1xf32, #tpu.memory_space<vmem>>, vector<1x8x1xf32>,
    %c3_92 = arith.constant 3 : index
    %c0_93 = arith.constant 0 : index
    %c0_94 = arith.constant 0 : index
    %166 = vector.load %arg17[%c3_92, %c0_93, %c0_94] : memref<4x8x8xf32, #tpu.memory_space<vmem>>, vector<1x8x8xf32>
    %167 = vector.shape_cast %166 : vector<1x8x8xf32> to vector<8x8xf32>
    %168 = vector.broadcast %153 : vector<8x1xf32> to vector<8x8xf32>
    %169 = arith.mulf %168, %167 : vector<8x8xf32>
    %170 = arith.truncf %156 : vector<8x8xf32> to vector<8x8xbf16>
    %cst_95 = arith.constant dense<0.000000e+00> : vector<8x8xf32>
    %171 = tpu.matmul %170, %143, %cst_95 {dimension_numbers = #tpu.dot_dimension_numbers<[1], [0], [0], [1], [0, 0, 1, 1], [], []>} : vector<8x8xbf16>, vector<8x8xbf16>, vector<8x8xf32> -> vector<8x8xf32>
    %172 = arith.addf %169, %171 : vector<8x8xf32>
    %c3_96 = arith.constant 3 : index
    %c0_97 = arith.constant 0 : index
    %c0_98 = arith.constant 0 : index
    %173 = vector.load %arg17[%c3_96, %c0_97, %c0_98] : memref<4x8x8xf32, #tpu.memory_space<vmem>>, vector<1x8x8xf32>
    %174 = vector.shape_cast %173 : vector<1x8x8xf32> to vector<8x8xf32>
    %175 = vector.shape_cast %172 : vector<8x8xf32> to vector<1x8x8xf32>
    tpu.vector_store %arg17[%c3_96, %c0_97, %c0_98], %175 {strides = array<i32>} : memref<4x8x8xf32, #tpu.memory_space<vmem>>, vector<1x8x8xf32>,
    %c3_99 = arith.constant 3 : index
    %c0_100 = arith.constant 0 : index
    %c0_101 = arith.constant 0 : index
    %176 = vector.load %arg15[%c3_99, %c0_100, %c0_101] : memref<4x8x1xf32, #tpu.memory_space<vmem>>, vector<1x8x1xf32>
    %177 = vector.shape_cast %176 : vector<1x8x1xf32> to vector<8x1xf32>
    %178 = vector.shape_cast %151 : vector<8x1xf32> to vector<1x8x1xf32>
    tpu.vector_store %arg15[%c3_99, %c0_100, %c0_101], %178 {strides = array<i32>} : memref<4x8x1xf32, #tpu.memory_space<vmem>>, vector<1x8x1xf32>,
    %c0_i32_102 = arith.constant 0 : i32
    %179 = arith.cmpi eq, %arg2, %c0_i32_102 : i32
    %180 = arith.extui %179 : i1 to i32
    %c0_i32_103 = arith.constant 0 : i32
    %181 = arith.cmpi ne, %180, %c0_i32_103 : i32
    scf.if %181 {
      %c0_104 = arith.constant 0 : index
      %c0_105 = arith.constant 0 : index
      %182 = vector.load %arg9[%c0_104, %c0_105] : memref<32x32xbf16, #tpu.memory_space<vmem>>, vector<32x32xbf16>
      %cst_106 = arith.constant 0.000000e+00 : f32
      %183 = vector.broadcast %cst_106 : f32 to vector<8x32xf32>
      %c0_107 = arith.constant 0 : index
      %c0_108 = arith.constant 0 : index
      %c0_109 = arith.constant 0 : index
      %184 = vector.load %arg17[%c0_107, %c0_108, %c0_109] : memref<4x8x8xf32, #tpu.memory_space<vmem>>, vector<1x8x8xf32>
      %185 = vector.shape_cast %184 : vector<1x8x8xf32> to vector<8x8xf32>
      %c0_110 = arith.constant 0 : index
      %c0_111 = arith.constant 0 : index
      %c0_112 = arith.constant 0 : index
      %186 = vector.load %arg16[%c0_110, %c0_111, %c0_112] : memref<4x8x1xf32, #tpu.memory_space<vmem>>, vector<1x8x1xf32>
      %187 = vector.shape_cast %186 : vector<1x8x1xf32> to vector<8x1xf32>
      %188 = tpu.reciprocal %187 {approx = true} : vector<8x1xf32> -> vector<8x1xf32>
      %189 = vector.broadcast %188 : vector<8x1xf32> to vector<8x8xf32>
      %190 = arith.mulf %185, %189 : vector<8x8xf32>
      %191 = arith.truncf %190 : vector<8x8xf32> to vector<8x8xbf16>
      %192 = vector.extract_strided_slice %182 {offsets = [0, 0], sizes = [8, 32], strides = [1, 1]} : vector<32x32xbf16> to vector<8x32xbf16>
      %cst_113 = arith.constant dense<0.000000e+00> : vector<8x32xf32>
      %193 = tpu.matmul %191, %192, %cst_113 {dimension_numbers = #tpu.dot_dimension_numbers<[1], [0], [0], [1], [0, 0, 1, 1], [], []>} : vector<8x8xbf16>, vector<8x32xbf16>, vector<8x32xf32> -> vector<8x32xf32>
      %194 = arith.addf %183, %193 : vector<8x32xf32>
      %c1_114 = arith.constant 1 : index
      %c0_115 = arith.constant 0 : index
      %c0_116 = arith.constant 0 : index
      %195 = vector.load %arg17[%c1_114, %c0_115, %c0_116] : memref<4x8x8xf32, #tpu.memory_space<vmem>>, vector<1x8x8xf32>
      %196 = vector.shape_cast %195 : vector<1x8x8xf32> to vector<8x8xf32>
      %c1_117 = arith.constant 1 : index
      %c0_118 = arith.constant 0 : index
      %c0_119 = arith.constant 0 : index
      %197 = vector.load %arg16[%c1_117, %c0_118, %c0_119] : memref<4x8x1xf32, #tpu.memory_space<vmem>>, vector<1x8x1xf32>
      %198 = vector.shape_cast %197 : vector<1x8x1xf32> to vector<8x1xf32>
      %199 = tpu.reciprocal %198 {approx = true} : vector<8x1xf32> -> vector<8x1xf32>
      %200 = vector.broadcast %199 : vector<8x1xf32> to vector<8x8xf32>
      %201 = arith.mulf %196, %200 : vector<8x8xf32>
      %202 = arith.truncf %201 : vector<8x8xf32> to vector<8x8xbf16>
      %203 = vector.extract_strided_slice %182 {offsets = [8, 0], sizes = [8, 32], strides = [1, 1]} : vector<32x32xbf16> to vector<8x32xbf16>
      %cst_120 = arith.constant dense<0.000000e+00> : vector<8x32xf32>
      %204 = tpu.matmul %202, %203, %cst_120 {dimension_numbers = #tpu.dot_dimension_numbers<[1], [0], [0], [1], [0, 0, 1, 1], [], []>} : vector<8x8xbf16>, vector<8x32xbf16>, vector<8x32xf32> -> vector<8x32xf32>
      %205 = arith.addf %194, %204 : vector<8x32xf32>
      %c2_121 = arith.constant 2 : index
      %c0_122 = arith.constant 0 : index
      %c0_123 = arith.constant 0 : index
      %206 = vector.load %arg17[%c2_121, %c0_122, %c0_123] : memref<4x8x8xf32, #tpu.memory_space<vmem>>, vector<1x8x8xf32>
      %207 = vector.shape_cast %206 : vector<1x8x8xf32> to vector<8x8xf32>
      %c2_124 = arith.constant 2 : index
      %c0_125 = arith.constant 0 : index
      %c0_126 = arith.constant 0 : index
      %208 = vector.load %arg16[%c2_124, %c0_125, %c0_126] : memref<4x8x1xf32, #tpu.memory_space<vmem>>, vector<1x8x1xf32>
      %209 = vector.shape_cast %208 : vector<1x8x1xf32> to vector<8x1xf32>
      %210 = tpu.reciprocal %209 {approx = true} : vector<8x1xf32> -> vector<8x1xf32>
      %211 = vector.broadcast %210 : vector<8x1xf32> to vector<8x8xf32>
      %212 = arith.mulf %207, %211 : vector<8x8xf32>
      %213 = arith.truncf %212 : vector<8x8xf32> to vector<8x8xbf16>
      %214 = vector.extract_strided_slice %182 {offsets = [16, 0], sizes = [8, 32], strides = [1, 1]} : vector<32x32xbf16> to vector<8x32xbf16>
      %cst_127 = arith.constant dense<0.000000e+00> : vector<8x32xf32>
      %215 = tpu.matmul %213, %214, %cst_127 {dimension_numbers = #tpu.dot_dimension_numbers<[1], [0], [0], [1], [0, 0, 1, 1], [], []>} : vector<8x8xbf16>, vector<8x32xbf16>, vector<8x32xf32> -> vector<8x32xf32>
      %216 = arith.addf %205, %215 : vector<8x32xf32>
      %c3_128 = arith.constant 3 : index
      %c0_129 = arith.constant 0 : index
      %c0_130 = arith.constant 0 : index
      %217 = vector.load %arg17[%c3_128, %c0_129, %c0_130] : memref<4x8x8xf32, #tpu.memory_space<vmem>>, vector<1x8x8xf32>
      %218 = vector.shape_cast %217 : vector<1x8x8xf32> to vector<8x8xf32>
      %c3_131 = arith.constant 3 : index
      %c0_132 = arith.constant 0 : index
      %c0_133 = arith.constant 0 : index
      %219 = vector.load %arg16[%c3_131, %c0_132, %c0_133] : memref<4x8x1xf32, #tpu.memory_space<vmem>>, vector<1x8x1xf32>
      %220 = vector.shape_cast %219 : vector<1x8x1xf32> to vector<8x1xf32>
      %221 = tpu.reciprocal %220 {approx = true} : vector<8x1xf32> -> vector<8x1xf32>
      %222 = vector.broadcast %221 : vector<8x1xf32> to vector<8x8xf32>
      %223 = arith.mulf %218, %222 : vector<8x8xf32>
      %224 = arith.truncf %223 : vector<8x8xf32> to vector<8x8xbf16>
      %225 = vector.extract_strided_slice %182 {offsets = [24, 0], sizes = [8, 32], strides = [1, 1]} : vector<32x32xbf16> to vector<8x32xbf16>
      %cst_134 = arith.constant dense<0.000000e+00> : vector<8x32xf32>
      %226 = tpu.matmul %224, %225, %cst_134 {dimension_numbers = #tpu.dot_dimension_numbers<[1], [0], [0], [1], [0, 0, 1, 1], [], []>} : vector<8x8xbf16>, vector<8x32xbf16>, vector<8x32xf32> -> vector<8x32xf32>
      %227 = arith.addf %216, %226 : vector<8x32xf32>
      %c0_135 = arith.constant 0 : index
      %c0_136 = arith.constant 0 : index
      %228 = vector.load %arg10[%c0_135, %c0_136] : memref<1x32xf32, #tpu.memory_space<vmem>>, vector<1x32xf32>
      %229 = vector.broadcast %228 : vector<1x32xf32> to vector<8x32xf32>
      %230 = arith.addf %227, %229 : vector<8x32xf32>
      %c0_137 = arith.constant 0 : index
      %c0_138 = arith.constant 0 : index
      %c0_139 = arith.constant 0 : index
      %231 = vector.load %arg3[%c0_137, %c0_138, %c0_139] : memref<1x8x32xbf16, #tpu.memory_space<vmem>>, vector<1x8x32xbf16>
      %232 = vector.shape_cast %231 : vector<1x8x32xbf16> to vector<8x32xbf16>
      %233 = arith.extf %232 : vector<8x32xbf16> to vector<8x32xf32>
      %234 = arith.addf %233, %230 : vector<8x32xf32>
      %cst_140 = arith.constant dense<0.000000e+00> : vector<8xf32>
      %235 = vector.multi_reduction <add>, %234, %cst_140 [1] : vector<8x32xf32> to vector<8xf32>
      %236 = vector.shape_cast %235 : vector<8xf32> to vector<8x1xf32>
      %cst_141 = arith.constant 3.200000e+01 : f32
      %237 = vector.broadcast %cst_141 : f32 to vector<8x1xf32>
      %238 = arith.divf %236, %237 : vector<8x1xf32>
      %239 = vector.broadcast %238 : vector<8x1xf32> to vector<8x32xf32>
      %240 = arith.subf %234, %239 : vector<8x32xf32>
      %241 = arith.mulf %240, %240 : vector<8x32xf32>
      %cst_142 = arith.constant dense<0.000000e+00> : vector<8xf32>
      %242 = vector.multi_reduction <add>, %241, %cst_142 [1] : vector<8x32xf32> to vector<8xf32>
      %243 = vector.shape_cast %242 : vector<8xf32> to vector<8x1xf32>
      %cst_143 = arith.constant 3.200000e+01 : f32
      %244 = vector.broadcast %cst_143 : f32 to vector<8x1xf32>
      %245 = arith.divf %243, %244 : vector<8x1xf32>
      %246 = vector.broadcast %238 : vector<8x1xf32> to vector<8x32xf32>
      %247 = arith.subf %234, %246 : vector<8x32xf32>
      %cst_144 = arith.constant 9.99999974E-6 : f32
      %248 = vector.broadcast %cst_144 : f32 to vector<8x1xf32>
      %249 = arith.addf %245, %248 : vector<8x1xf32>
      %250 = math.rsqrt %249 : vector<8x1xf32>
      %251 = vector.broadcast %250 : vector<8x1xf32> to vector<8x32xf32>
      %252 = arith.mulf %247, %251 : vector<8x32xf32>
      %c0_145 = arith.constant 0 : index
      %c0_146 = arith.constant 0 : index
      %253 = vector.load %arg11[%c0_145, %c0_146] : memref<1x32xf32, #tpu.memory_space<vmem>>, vector<1x32xf32>
      %254 = vector.broadcast %253 : vector<1x32xf32> to vector<8x32xf32>
      %255 = arith.mulf %252, %254 : vector<8x32xf32>
      %c0_147 = arith.constant 0 : index
      %c0_148 = arith.constant 0 : index
      %256 = vector.load %arg12[%c0_147, %c0_148] : memref<1x32xf32, #tpu.memory_space<vmem>>, vector<1x32xf32>
      %257 = vector.broadcast %256 : vector<1x32xf32> to vector<8x32xf32>
      %258 = arith.addf %255, %257 : vector<8x32xf32>
      %259 = arith.truncf %258 : vector<8x32xf32> to vector<8x32xbf16>
      %c0_149 = arith.constant 0 : index
      %c0_150 = arith.constant 0 : index
      %c0_151 = arith.constant 0 : index
      %260 = vector.load %arg13[%c0_149, %c0_150, %c0_151] : memref<1x8x32xbf16, #tpu.memory_space<vmem>>, vector<1x8x32xbf16>
      %261 = vector.shape_cast %260 : vector<1x8x32xbf16> to vector<8x32xbf16>
      %262 = vector.shape_cast %259 : vector<8x32xbf16> to vector<1x8x32xbf16>
      tpu.vector_store %arg13[%c0_149, %c0_150, %c0_151], %262 {strides = array<i32>} : memref<1x8x32xbf16, #tpu.memory_space<vmem>>, vector<1x8x32xbf16>,
    } else {
    }
    return
  }
  func.func @transform_0(%arg0: i32, %arg1: i32, %arg2: i32) -> (i32, i32, i32) {
    %c0_i32 = arith.constant 0 : i32
    %c0_i32_0 = arith.constant 0 : i32
    return %arg0, %arg1, %c0_i32 : i32, i32, i32
  }
  func.func @transform_1(%arg0: i32, %arg1: i32, %arg2: i32) -> (i32, i32, i32) {
    %c0_i32 = arith.constant 0 : i32
    %c0_i32_0 = arith.constant 0 : i32
    return %arg0, %arg2, %c0_i32 : i32, i32, i32
  }
  func.func @transform_2(%arg0: i32, %arg1: i32, %arg2: i32) -> (i32, i32, i32) {
    %c0_i32 = arith.constant 0 : i32
    %c0_i32_0 = arith.constant 0 : i32
    return %arg0, %arg1, %c0_i32 : i32, i32, i32
  }
  func.func @transform_3(%arg0: i32, %arg1: i32, %arg2: i32) -> (i32, i32, i32) {
    %c0_i32 = arith.constant 0 : i32
    %c0_i32_0 = arith.constant 0 : i32
    return %arg0, %c0_i32, %arg2 : i32, i32, i32
  }
  func.func @transform_4(%arg0: i32, %arg1: i32, %arg2: i32) -> (i32, i32) {
    %c0_i32 = arith.constant 0 : i32
    %c0_i32_0 = arith.constant 0 : i32
    %c0_i32_1 = arith.constant 0 : i32
    return %c0_i32, %c0_i32_0 : i32, i32
  }
  func.func @transform_5(%arg0: i32, %arg1: i32, %arg2: i32) -> (i32, i32) {
    %c0_i32 = arith.constant 0 : i32
    %c0_i32_0 = arith.constant 0 : i32
    %c0_i32_1 = arith.constant 0 : i32
    return %c0_i32, %c0_i32_0 : i32, i32
  }
  func.func @transform_6(%arg0: i32, %arg1: i32, %arg2: i32) -> (i32, i32) {
    %c0_i32 = arith.constant 0 : i32
    %c0_i32_0 = arith.constant 0 : i32
    %c0_i32_1 = arith.constant 0 : i32
    return %c0_i32, %c0_i32_0 : i32, i32
  }
  func.func @transform_7(%arg0: i32, %arg1: i32, %arg2: i32) -> (i32, i32) {
    %c0_i32 = arith.constant 0 : i32
    %c0_i32_0 = arith.constant 0 : i32
    %c0_i32_1 = arith.constant 0 : i32
    return %c0_i32, %c0_i32_0 : i32, i32
  }
  func.func @transform_8(%arg0: i32, %arg1: i32, %arg2: i32) -> (i32, i32) {
    %c0_i32 = arith.constant 0 : i32
    %c0_i32_0 = arith.constant 0 : i32
    %c0_i32_1 = arith.constant 0 : i32
    return %c0_i32, %c0_i32_0 : i32, i32
  }
  func.func @transform_9(%arg0: i32, %arg1: i32, %arg2: i32) -> (i32, i32) {
    %c0_i32 = arith.constant 0 : i32
    %c0_i32_0 = arith.constant 0 : i32
    %c0_i32_1 = arith.constant 0 : i32
    return %c0_i32, %c0_i32_0 : i32, i32
  }
  func.func @transform_10(%arg0: i32, %arg1: i32, %arg2: i32) -> (i32, i32, i32) {
    %c0_i32 = arith.constant 0 : i32
    %c0_i32_0 = arith.constant 0 : i32
    return %arg0, %arg1, %c0_i32 : i32, i32, i32
  }
}

module attributes {stable_mosaic.version = 11 : i64} {
  func.func @_ffn_ln_kernel(%arg0: i32, %arg1: i32, %arg2: memref<16x32xbf16, #tpu.memory_space<vmem>>, %arg3: memref<32x64xbf16, #tpu.memory_space<vmem>>, %arg4: memref<1x64xf32, #tpu.memory_space<vmem>>, %arg5: memref<64x32xbf16, #tpu.memory_space<vmem>>, %arg6: memref<1x32xf32, #tpu.memory_space<vmem>>, %arg7: memref<1x32xf32, #tpu.memory_space<vmem>>, %arg8: memref<1x32xf32, #tpu.memory_space<vmem>>, %arg9: memref<16x32xbf16, #tpu.memory_space<vmem>>, %arg10: memref<16x32xf32, #tpu.memory_space<vmem>>) attributes {dimension_semantics = [#tpu.dimension_semantics<parallel>, #tpu.dimension_semantics<arbitrary>], iteration_bounds = array<i64: 1, 1>, scalar_prefetch = 0 : i64, scratch_operands = 1 : i64, tpu.core_type = #tpu.core_type<tc>, window_params = [{transform_indices = @transform_0, window_bounds = array<i64: 16, 32>}, {transform_indices = @transform_1, window_bounds = array<i64: 32, 64>}, {transform_indices = @transform_2, window_bounds = array<i64: 1, 64>}, {transform_indices = @transform_3, window_bounds = array<i64: 64, 32>}, {pipeline_mode = #tpu.pipeline_mode<synchronous>, transform_indices = @transform_4, window_bounds = array<i64: 1, 32>}, {pipeline_mode = #tpu.pipeline_mode<synchronous>, transform_indices = @transform_5, window_bounds = array<i64: 1, 32>}, {pipeline_mode = #tpu.pipeline_mode<synchronous>, transform_indices = @transform_6, window_bounds = array<i64: 1, 32>}, {transform_indices = @transform_7, window_bounds = array<i64: 16, 32>}]} {
    %c0_i32 = arith.constant 0 : i32
    %0 = arith.cmpi eq, %arg1, %c0_i32 : i32
    %1 = arith.extui %0 : i1 to i32
    %c0_i32_0 = arith.constant 0 : i32
    %2 = arith.cmpi ne, %1, %c0_i32_0 : i32
    scf.if %2 {
      %cst_16 = arith.constant 0.000000e+00 : f32
      %20 = vector.broadcast %cst_16 : f32 to vector<16x32xf32>
      %c0_17 = arith.constant 0 : index
      %c0_18 = arith.constant 0 : index
      %21 = vector.load %arg10[%c0_17, %c0_18] : memref<16x32xf32, #tpu.memory_space<vmem>>, vector<16x32xf32>
      tpu.vector_store %arg10[%c0_17, %c0_18], %20 {strides = array<i32>} : memref<16x32xf32, #tpu.memory_space<vmem>>, vector<16x32xf32>,
    } else {
    }
    %c0 = arith.constant 0 : index
    %c0_1 = arith.constant 0 : index
    %3 = vector.load %arg2[%c0, %c0_1] : memref<16x32xbf16, #tpu.memory_space<vmem>>, vector<16x32xbf16>
    %c0_2 = arith.constant 0 : index
    %c0_3 = arith.constant 0 : index
    %4 = vector.load %arg3[%c0_2, %c0_3] : memref<32x64xbf16, #tpu.memory_space<vmem>>, vector<32x64xbf16>
    %cst = arith.constant dense<0.000000e+00> : vector<16x64xf32>
    %5 = tpu.matmul %3, %4, %cst {dimension_numbers = #tpu.dot_dimension_numbers<[1], [0], [0], [1], [0, 0, 1, 1], [], []>} : vector<16x32xbf16>, vector<32x64xbf16>, vector<16x64xf32> -> vector<16x64xf32>
    %c0_4 = arith.constant 0 : index
    %c0_5 = arith.constant 0 : index
    %6 = vector.load %arg4[%c0_4, %c0_5] : memref<1x64xf32, #tpu.memory_space<vmem>>, vector<1x64xf32>
    %7 = vector.broadcast %6 : vector<1x64xf32> to vector<16x64xf32>
    %8 = arith.addf %5, %7 : vector<16x64xf32>
    %cst_6 = arith.constant 0.000000e+00 : f32
    %9 = vector.broadcast %cst_6 : f32 to vector<16x64xf32>
    %10 = arith.maximumf %8, %9 : vector<16x64xf32>
    %c0_7 = arith.constant 0 : index
    %c0_8 = arith.constant 0 : index
    %11 = vector.load %arg10[%c0_7, %c0_8] : memref<16x32xf32, #tpu.memory_space<vmem>>, vector<16x32xf32>
    %12 = arith.truncf %10 : vector<16x64xf32> to vector<16x64xbf16>
    %c0_9 = arith.constant 0 : index
    %c0_10 = arith.constant 0 : index
    %13 = vector.load %arg5[%c0_9, %c0_10] : memref<64x32xbf16, #tpu.memory_space<vmem>>, vector<64x32xbf16>
    %cst_11 = arith.constant dense<0.000000e+00> : vector<16x32xf32>
    %14 = tpu.matmul %12, %13, %cst_11 {dimension_numbers = #tpu.dot_dimension_numbers<[1], [0], [0], [1], [0, 0, 1, 1], [], []>} : vector<16x64xbf16>, vector<64x32xbf16>, vector<16x32xf32> -> vector<16x32xf32>
    %15 = arith.addf %11, %14 : vector<16x32xf32>
    %c0_12 = arith.constant 0 : index
    %c0_13 = arith.constant 0 : index
    %16 = vector.load %arg10[%c0_12, %c0_13] : memref<16x32xf32, #tpu.memory_space<vmem>>, vector<16x32xf32>
    tpu.vector_store %arg10[%c0_12, %c0_13], %15 {strides = array<i32>} : memref<16x32xf32, #tpu.memory_space<vmem>>, vector<16x32xf32>,
    %c0_i32_14 = arith.constant 0 : i32
    %17 = arith.cmpi eq, %arg1, %c0_i32_14 : i32
    %18 = arith.extui %17 : i1 to i32
    %c0_i32_15 = arith.constant 0 : i32
    %19 = arith.cmpi ne, %18, %c0_i32_15 : i32
    scf.if %19 {
      %20 = arith.extf %3 : vector<16x32xbf16> to vector<16x32xf32>
      %c0_16 = arith.constant 0 : index
      %c0_17 = arith.constant 0 : index
      %21 = vector.load %arg10[%c0_16, %c0_17] : memref<16x32xf32, #tpu.memory_space<vmem>>, vector<16x32xf32>
      %22 = arith.addf %20, %21 : vector<16x32xf32>
      %c0_18 = arith.constant 0 : index
      %c0_19 = arith.constant 0 : index
      %23 = vector.load %arg6[%c0_18, %c0_19] : memref<1x32xf32, #tpu.memory_space<vmem>>, vector<1x32xf32>
      %24 = vector.broadcast %23 : vector<1x32xf32> to vector<16x32xf32>
      %25 = arith.addf %22, %24 : vector<16x32xf32>
      %cst_20 = arith.constant dense<0.000000e+00> : vector<16xf32>
      %26 = vector.multi_reduction <add>, %25, %cst_20 [1] : vector<16x32xf32> to vector<16xf32>
      %27 = vector.shape_cast %26 : vector<16xf32> to vector<16x1xf32>
      %cst_21 = arith.constant 3.200000e+01 : f32
      %28 = vector.broadcast %cst_21 : f32 to vector<16x1xf32>
      %29 = arith.divf %27, %28 : vector<16x1xf32>
      %30 = vector.broadcast %29 : vector<16x1xf32> to vector<16x32xf32>
      %31 = arith.subf %25, %30 : vector<16x32xf32>
      %32 = arith.mulf %31, %31 : vector<16x32xf32>
      %cst_22 = arith.constant dense<0.000000e+00> : vector<16xf32>
      %33 = vector.multi_reduction <add>, %32, %cst_22 [1] : vector<16x32xf32> to vector<16xf32>
      %34 = vector.shape_cast %33 : vector<16xf32> to vector<16x1xf32>
      %cst_23 = arith.constant 3.200000e+01 : f32
      %35 = vector.broadcast %cst_23 : f32 to vector<16x1xf32>
      %36 = arith.divf %34, %35 : vector<16x1xf32>
      %37 = vector.broadcast %29 : vector<16x1xf32> to vector<16x32xf32>
      %38 = arith.subf %25, %37 : vector<16x32xf32>
      %cst_24 = arith.constant 9.99999974E-6 : f32
      %39 = vector.broadcast %cst_24 : f32 to vector<16x1xf32>
      %40 = arith.addf %36, %39 : vector<16x1xf32>
      %41 = math.rsqrt %40 : vector<16x1xf32>
      %42 = vector.broadcast %41 : vector<16x1xf32> to vector<16x32xf32>
      %43 = arith.mulf %38, %42 : vector<16x32xf32>
      %c0_25 = arith.constant 0 : index
      %c0_26 = arith.constant 0 : index
      %44 = vector.load %arg7[%c0_25, %c0_26] : memref<1x32xf32, #tpu.memory_space<vmem>>, vector<1x32xf32>
      %45 = vector.broadcast %44 : vector<1x32xf32> to vector<16x32xf32>
      %46 = arith.mulf %43, %45 : vector<16x32xf32>
      %c0_27 = arith.constant 0 : index
      %c0_28 = arith.constant 0 : index
      %47 = vector.load %arg8[%c0_27, %c0_28] : memref<1x32xf32, #tpu.memory_space<vmem>>, vector<1x32xf32>
      %48 = vector.broadcast %47 : vector<1x32xf32> to vector<16x32xf32>
      %49 = arith.addf %46, %48 : vector<16x32xf32>
      %50 = arith.truncf %49 : vector<16x32xf32> to vector<16x32xbf16>
      %c0_29 = arith.constant 0 : index
      %c0_30 = arith.constant 0 : index
      %51 = vector.load %arg9[%c0_29, %c0_30] : memref<16x32xbf16, #tpu.memory_space<vmem>>, vector<16x32xbf16>
      tpu.vector_store %arg9[%c0_29, %c0_30], %50 {strides = array<i32>} : memref<16x32xbf16, #tpu.memory_space<vmem>>, vector<16x32xbf16>,
    } else {
    }
    return
  }
  func.func @transform_0(%arg0: i32, %arg1: i32) -> (i32, i32) {
    %c0_i32 = arith.constant 0 : i32
    %c0_i32_0 = arith.constant 0 : i32
    return %arg0, %c0_i32 : i32, i32
  }
  func.func @transform_1(%arg0: i32, %arg1: i32) -> (i32, i32) {
    %c0_i32 = arith.constant 0 : i32
    %c0_i32_0 = arith.constant 0 : i32
    return %c0_i32, %arg1 : i32, i32
  }
  func.func @transform_2(%arg0: i32, %arg1: i32) -> (i32, i32) {
    %c0_i32 = arith.constant 0 : i32
    %c0_i32_0 = arith.constant 0 : i32
    return %c0_i32, %arg1 : i32, i32
  }
  func.func @transform_3(%arg0: i32, %arg1: i32) -> (i32, i32) {
    %c0_i32 = arith.constant 0 : i32
    %c0_i32_0 = arith.constant 0 : i32
    return %arg1, %c0_i32 : i32, i32
  }
  func.func @transform_4(%arg0: i32, %arg1: i32) -> (i32, i32) {
    %c0_i32 = arith.constant 0 : i32
    %c0_i32_0 = arith.constant 0 : i32
    %c0_i32_1 = arith.constant 0 : i32
    return %c0_i32, %c0_i32_0 : i32, i32
  }
  func.func @transform_5(%arg0: i32, %arg1: i32) -> (i32, i32) {
    %c0_i32 = arith.constant 0 : i32
    %c0_i32_0 = arith.constant 0 : i32
    %c0_i32_1 = arith.constant 0 : i32
    return %c0_i32, %c0_i32_0 : i32, i32
  }
  func.func @transform_6(%arg0: i32, %arg1: i32) -> (i32, i32) {
    %c0_i32 = arith.constant 0 : i32
    %c0_i32_0 = arith.constant 0 : i32
    %c0_i32_1 = arith.constant 0 : i32
    return %c0_i32, %c0_i32_0 : i32, i32
  }
  func.func @transform_7(%arg0: i32, %arg1: i32) -> (i32, i32) {
    %c0_i32 = arith.constant 0 : i32
    %c0_i32_0 = arith.constant 0 : i32
    return %arg0, %c0_i32 : i32, i32
  }
}

module attributes {stable_mosaic.version = 11 : i64} {
  func.func @_flash_mha_ln_kernel(%arg0: i32, %arg1: i32, %arg2: i32, %arg3: memref<1x8x32xbf16, #tpu.memory_space<vmem>>, %arg4: memref<1x8x64xbf16, #tpu.memory_space<vmem>>, %arg5: memref<1x8x1xf32, #tpu.memory_space<vmem>>, %arg6: memref<1x1x8xf32, #tpu.memory_space<vmem>>, %arg7: memref<32x32xbf16, #tpu.memory_space<vmem>>, %arg8: memref<1x32xf32, #tpu.memory_space<vmem>>, %arg9: memref<32x32xbf16, #tpu.memory_space<vmem>>, %arg10: memref<1x32xf32, #tpu.memory_space<vmem>>, %arg11: memref<1x32xf32, #tpu.memory_space<vmem>>, %arg12: memref<1x32xf32, #tpu.memory_space<vmem>>, %arg13: memref<1x8x32xbf16, #tpu.memory_space<vmem>>, %arg14: memref<8x32xbf16, #tpu.memory_space<vmem>>, %arg15: memref<4x8x1xf32, #tpu.memory_space<vmem>>, %arg16: memref<4x8x1xf32, #tpu.memory_space<vmem>>, %arg17: memref<4x8x8xf32, #tpu.memory_space<vmem>>) attributes {dimension_semantics = [#tpu.dimension_semantics<parallel>, #tpu.dimension_semantics<parallel>, #tpu.dimension_semantics<arbitrary>], iteration_bounds = array<i64: 2, 1, 1>, scalar_prefetch = 0 : i64, scratch_operands = 4 : i64, tpu.core_type = #tpu.core_type<tc>, window_params = [{transform_indices = @transform_0, window_bounds = array<i64: 1, 8, 32>}, {transform_indices = @transform_1, window_bounds = array<i64: 1, 8, 64>}, {transform_indices = @transform_2, window_bounds = array<i64: 1, 8, 1>}, {transform_indices = @transform_3, window_bounds = array<i64: 1, 1, 8>}, {pipeline_mode = #tpu.pipeline_mode<synchronous>, transform_indices = @transform_4, window_bounds = array<i64: 32, 32>}, {pipeline_mode = #tpu.pipeline_mode<synchronous>, transform_indices = @transform_5, window_bounds = array<i64: 1, 32>}, {pipeline_mode = #tpu.pipeline_mode<synchronous>, transform_indices = @transform_6, window_bounds = array<i64: 32, 32>}, {pipeline_mode = #tpu.pipeline_mode<synchronous>, transform_indices = @transform_7, window_bounds = array<i64: 1, 32>}, {pipeline_mode = #tpu.pipeline_mode<synchronous>, transform_indices = @transform_8, window_bounds = array<i64: 1, 32>}, {pipeline_mode = #tpu.pipeline_mode<synchronous>, transform_indices = @transform_9, window_bounds = array<i64: 1, 32>}, {transform_indices = @transform_10, window_bounds = array<i64: 1, 8, 32>}]} {
    %c0_i32 = arith.constant 0 : i32
    %0 = arith.cmpi eq, %arg2, %c0_i32 : i32
    %1 = arith.extui %0 : i1 to i32
    %c0_i32_0 = arith.constant 0 : i32
    %2 = arith.cmpi ne, %1, %c0_i32_0 : i32
    scf.if %2 {
      %c0_103 = arith.constant 0 : index
      %c0_104 = arith.constant 0 : index
      %c0_105 = arith.constant 0 : index
      %172 = vector.load %arg3[%c0_103, %c0_104, %c0_105] : memref<1x8x32xbf16, #tpu.memory_space<vmem>>, vector<1x8x32xbf16>
      %173 = vector.shape_cast %172 : vector<1x8x32xbf16> to vector<8x32xbf16>
      %c0_106 = arith.constant 0 : index
      %c0_107 = arith.constant 0 : index
      %174 = vector.load %arg7[%c0_106, %c0_107] : memref<32x32xbf16, #tpu.memory_space<vmem>>, vector<32x32xbf16>
      %cst_108 = arith.constant dense<0.000000e+00> : vector<8x32xf32>
      %175 = tpu.matmul %173, %174, %cst_108 {dimension_numbers = #tpu.dot_dimension_numbers<[1], [0], [0], [1], [0, 0, 1, 1], [], []>} : vector<8x32xbf16>, vector<32x32xbf16>, vector<8x32xf32> -> vector<8x32xf32>
      %c0_109 = arith.constant 0 : index
      %c0_110 = arith.constant 0 : index
      %176 = vector.load %arg8[%c0_109, %c0_110] : memref<1x32xf32, #tpu.memory_space<vmem>>, vector<1x32xf32>
      %177 = vector.broadcast %176 : vector<1x32xf32> to vector<8x32xf32>
      %178 = arith.addf %175, %177 : vector<8x32xf32>
      %cst_111 = arith.constant 0.353553385 : f32
      %179 = vector.broadcast %cst_111 : f32 to vector<8x32xf32>
      %180 = arith.mulf %178, %179 : vector<8x32xf32>
      %181 = arith.truncf %180 : vector<8x32xf32> to vector<8x32xbf16>
      %c0_112 = arith.constant 0 : index
      %c0_113 = arith.constant 0 : index
      %182 = vector.load %arg14[%c0_112, %c0_113] : memref<8x32xbf16, #tpu.memory_space<vmem>>, vector<8x32xbf16>
      tpu.vector_store %arg14[%c0_112, %c0_113], %181 {strides = array<i32>} : memref<8x32xbf16, #tpu.memory_space<vmem>>, vector<8x32xbf16>,
      %cst_114 = arith.constant -1.000000e+10 : f32
      %183 = vector.broadcast %cst_114 : f32 to vector<4x8x1xf32>
      %c0_115 = arith.constant 0 : index
      %c0_116 = arith.constant 0 : index
      %c0_117 = arith.constant 0 : index
      %184 = vector.load %arg15[%c0_115, %c0_116, %c0_117] : memref<4x8x1xf32, #tpu.memory_space<vmem>>, vector<4x8x1xf32>
      tpu.vector_store %arg15[%c0_115, %c0_116, %c0_117], %183 {strides = array<i32>} : memref<4x8x1xf32, #tpu.memory_space<vmem>>, vector<4x8x1xf32>,
      %cst_118 = arith.constant 0.000000e+00 : f32
      %185 = vector.broadcast %cst_118 : f32 to vector<4x8x1xf32>
      %c0_119 = arith.constant 0 : index
      %c0_120 = arith.constant 0 : index
      %c0_121 = arith.constant 0 : index
      %186 = vector.load %arg16[%c0_119, %c0_120, %c0_121] : memref<4x8x1xf32, #tpu.memory_space<vmem>>, vector<4x8x1xf32>
      tpu.vector_store %arg16[%c0_119, %c0_120, %c0_121], %185 {strides = array<i32>} : memref<4x8x1xf32, #tpu.memory_space<vmem>>, vector<4x8x1xf32>,
      %cst_122 = arith.constant 0.000000e+00 : f32
      %187 = vector.broadcast %cst_122 : f32 to vector<4x8x8xf32>
      %c0_123 = arith.constant 0 : index
      %c0_124 = arith.constant 0 : index
      %c0_125 = arith.constant 0 : index
      %188 = vector.load %arg17[%c0_123, %c0_124, %c0_125] : memref<4x8x8xf32, #tpu.memory_space<vmem>>, vector<4x8x8xf32>
      tpu.vector_store %arg17[%c0_123, %c0_124, %c0_125], %187 {strides = array<i32>} : memref<4x8x8xf32, #tpu.memory_space<vmem>>, vector<4x8x8xf32>,
    } else {
    }
    %c0 = arith.constant 0 : index
    %c0_1 = arith.constant 0 : index
    %c0_2 = arith.constant 0 : index
    %3 = vector.load %arg4[%c0, %c0_1, %c0_2] : memref<1x8x64xbf16, #tpu.memory_space<vmem>>, vector<1x8x64xbf16>
    %4 = vector.shape_cast %3 : vector<1x8x64xbf16> to vector<8x64xbf16>
    %c0_3 = arith.constant 0 : index
    %c0_4 = arith.constant 0 : index
    %5 = vector.load %arg14[%c0_3, %c0_4] : memref<8x32xbf16, #tpu.memory_space<vmem>>, vector<8x32xbf16>
    %c0_5 = arith.constant 0 : index
    %c0_6 = arith.constant 0 : index
    %c0_7 = arith.constant 0 : index
    %6 = vector.load %arg5[%c0_5, %c0_6, %c0_7] : memref<1x8x1xf32, #tpu.memory_space<vmem>>, vector<1x8x1xf32>
    %7 = vector.shape_cast %6 : vector<1x8x1xf32> to vector<8x1xf32>
    %cst = arith.constant 5.000000e-01 : f32
    %8 = vector.broadcast %cst : f32 to vector<8x1xf32>
    %9 = arith.cmpf ogt, %7, %8 : vector<8x1xf32>
    %c0_8 = arith.constant 0 : index
    %c0_9 = arith.constant 0 : index
    %c0_10 = arith.constant 0 : index
    %10 = vector.load %arg6[%c0_8, %c0_9, %c0_10] : memref<1x1x8xf32, #tpu.memory_space<vmem>>, vector<1x1x8xf32>
    %11 = vector.shape_cast %10 : vector<1x1x8xf32> to vector<1x8xf32>
    %cst_11 = arith.constant 5.000000e-01 : f32
    %12 = vector.broadcast %cst_11 : f32 to vector<1x8xf32>
    %13 = arith.cmpf ogt, %11, %12 : vector<1x8xf32>
    %14 = vector.broadcast %9 : vector<8x1xi1> to vector<8x8xi1>
    %15 = vector.broadcast %13 : vector<1x8xi1> to vector<8x8xi1>
    %16 = arith.andi %14, %15 : vector<8x8xi1>
    %17 = vector.extract_strided_slice %5 {offsets = [0, 0], sizes = [8, 8], strides = [1, 1]} : vector<8x32xbf16> to vector<8x8xbf16>
    %18 = vector.extract_strided_slice %4 {offsets = [0, 0], sizes = [8, 8], strides = [1, 1]} : vector<8x64xbf16> to vector<8x8xbf16>
    %19 = vector.extract_strided_slice %4 {offsets = [0, 32], sizes = [8, 8], strides = [1, 1]} : vector<8x64xbf16> to vector<8x8xbf16>
    %cst_12 = arith.constant dense<0.000000e+00> : vector<8x8xf32>
    %20 = tpu.matmul %17, %18, %cst_12 {dimension_numbers = #tpu.dot_dimension_numbers<[1], [1], [0], [0], [0, 0, 1, 0], [], []>} : vector<8x8xbf16>, vector<8x8xbf16>, vector<8x8xf32> -> vector<8x8xf32>
    %cst_13 = arith.constant -1.000000e+10 : f32
    %21 = vector.broadcast %cst_13 : f32 to vector<8x8xf32>
    %22 = arith.select %16, %20, %21 : vector<8x8xi1>, vector<8x8xf32>
    %c0_14 = arith.constant 0 : index
    %c0_15 = arith.constant 0 : index
    %c0_16 = arith.constant 0 : index
    %23 = vector.load %arg15[%c0_14, %c0_15, %c0_16] : memref<4x8x1xf32, #tpu.memory_space<vmem>>, vector<1x8x1xf32>
    %24 = vector.shape_cast %23 : vector<1x8x1xf32> to vector<8x1xf32>
    %cst_17 = arith.constant dense<0xFF800000> : vector<8xf32>
    %25 = vector.multi_reduction <maximumf>, %22, %cst_17 [1] : vector<8x8xf32> to vector<8xf32>
    %26 = vector.shape_cast %25 : vector<8xf32> to vector<8x1xf32>
    %27 = arith.maximumf %24, %26 : vector<8x1xf32>
    %28 = arith.subf %24, %27 : vector<8x1xf32>
    %29 = math.exp %28 : vector<8x1xf32>
    %30 = vector.broadcast %27 : vector<8x1xf32> to vector<8x8xf32>
    %31 = arith.subf %22, %30 : vector<8x8xf32>
    %32 = math.exp %31 : vector<8x8xf32>
    %c0_18 = arith.constant 0 : index
    %c0_19 = arith.constant 0 : index
    %c0_20 = arith.constant 0 : index
    %33 = vector.load %arg16[%c0_18, %c0_19, %c0_20] : memref<4x8x1xf32, #tpu.memory_space<vmem>>, vector<1x8x1xf32>
    %34 = vector.shape_cast %33 : vector<1x8x1xf32> to vector<8x1xf32>
    %35 = arith.mulf %29, %34 : vector<8x1xf32>
    %cst_21 = arith.constant dense<0.000000e+00> : vector<8xf32>
    %36 = vector.multi_reduction <add>, %32, %cst_21 [1] : vector<8x8xf32> to vector<8xf32>
    %37 = vector.shape_cast %36 : vector<8xf32> to vector<8x1xf32>
    %38 = arith.addf %35, %37 : vector<8x1xf32>
    %c0_22 = arith.constant 0 : index
    %c0_23 = arith.constant 0 : index
    %c0_24 = arith.constant 0 : index
    %39 = vector.load %arg16[%c0_22, %c0_23, %c0_24] : memref<4x8x1xf32, #tpu.memory_space<vmem>>, vector<1x8x1xf32>
    %40 = vector.shape_cast %39 : vector<1x8x1xf32> to vector<8x1xf32>
    %41 = vector.shape_cast %38 : vector<8x1xf32> to vector<1x8x1xf32>
    tpu.vector_store %arg16[%c0_22, %c0_23, %c0_24], %41 {strides = array<i32>} : memref<4x8x1xf32, #tpu.memory_space<vmem>>, vector<1x8x1xf32>,
    %c0_25 = arith.constant 0 : index
    %c0_26 = arith.constant 0 : index
    %c0_27 = arith.constant 0 : index
    %42 = vector.load %arg17[%c0_25, %c0_26, %c0_27] : memref<4x8x8xf32, #tpu.memory_space<vmem>>, vector<1x8x8xf32>
    %43 = vector.shape_cast %42 : vector<1x8x8xf32> to vector<8x8xf32>
    %44 = vector.broadcast %29 : vector<8x1xf32> to vector<8x8xf32>
    %45 = arith.mulf %44, %43 : vector<8x8xf32>
    %46 = arith.truncf %32 : vector<8x8xf32> to vector<8x8xbf16>
    %cst_28 = arith.constant dense<0.000000e+00> : vector<8x8xf32>
    %47 = tpu.matmul %46, %19, %cst_28 {dimension_numbers = #tpu.dot_dimension_numbers<[1], [0], [0], [1], [0, 0, 1, 1], [], []>} : vector<8x8xbf16>, vector<8x8xbf16>, vector<8x8xf32> -> vector<8x8xf32>
    %48 = arith.addf %45, %47 : vector<8x8xf32>
    %c0_29 = arith.constant 0 : index
    %c0_30 = arith.constant 0 : index
    %c0_31 = arith.constant 0 : index
    %49 = vector.load %arg17[%c0_29, %c0_30, %c0_31] : memref<4x8x8xf32, #tpu.memory_space<vmem>>, vector<1x8x8xf32>
    %50 = vector.shape_cast %49 : vector<1x8x8xf32> to vector<8x8xf32>
    %51 = vector.shape_cast %48 : vector<8x8xf32> to vector<1x8x8xf32>
    tpu.vector_store %arg17[%c0_29, %c0_30, %c0_31], %51 {strides = array<i32>} : memref<4x8x8xf32, #tpu.memory_space<vmem>>, vector<1x8x8xf32>,
    %c0_32 = arith.constant 0 : index
    %c0_33 = arith.constant 0 : index
    %c0_34 = arith.constant 0 : index
    %52 = vector.load %arg15[%c0_32, %c0_33, %c0_34] : memref<4x8x1xf32, #tpu.memory_space<vmem>>, vector<1x8x1xf32>
    %53 = vector.shape_cast %52 : vector<1x8x1xf32> to vector<8x1xf32>
    %54 = vector.shape_cast %27 : vector<8x1xf32> to vector<1x8x1xf32>
    tpu.vector_store %arg15[%c0_32, %c0_33, %c0_34], %54 {strides = array<i32>} : memref<4x8x1xf32, #tpu.memory_space<vmem>>, vector<1x8x1xf32>,
    %55 = vector.extract_strided_slice %5 {offsets = [0, 8], sizes = [8, 8], strides = [1, 1]} : vector<8x32xbf16> to vector<8x8xbf16>
    %56 = vector.extract_strided_slice %4 {offsets = [0, 8], sizes = [8, 8], strides = [1, 1]} : vector<8x64xbf16> to vector<8x8xbf16>
    %57 = vector.extract_strided_slice %4 {offsets = [0, 40], sizes = [8, 8], strides = [1, 1]} : vector<8x64xbf16> to vector<8x8xbf16>
    %cst_35 = arith.constant dense<0.000000e+00> : vector<8x8xf32>
    %58 = tpu.matmul %55, %56, %cst_35 {dimension_numbers = #tpu.dot_dimension_numbers<[1], [1], [0], [0], [0, 0, 1, 0], [], []>} : vector<8x8xbf16>, vector<8x8xbf16>, vector<8x8xf32> -> vector<8x8xf32>
    %cst_36 = arith.constant -1.000000e+10 : f32
    %59 = vector.broadcast %cst_36 : f32 to vector<8x8xf32>
    %60 = arith.select %16, %58, %59 : vector<8x8xi1>, vector<8x8xf32>
    %c1 = arith.constant 1 : index
    %c0_37 = arith.constant 0 : index
    %c0_38 = arith.constant 0 : index
    %61 = vector.load %arg15[%c1, %c0_37, %c0_38] : memref<4x8x1xf32, #tpu.memory_space<vmem>>, vector<1x8x1xf32>
    %62 = vector.shape_cast %61 : vector<1x8x1xf32> to vector<8x1xf32>
    %cst_39 = arith.constant dense<0xFF800000> : vector<8xf32>
    %63 = vector.multi_reduction <maximumf>, %60, %cst_39 [1] : vector<8x8xf32> to vector<8xf32>
    %64 = vector.shape_cast %63 : vector<8xf32> to vector<8x1xf32>
    %65 = arith.maximumf %62, %64 : vector<8x1xf32>
    %66 = arith.subf %62, %65 : vector<8x1xf32>
    %67 = math.exp %66 : vector<8x1xf32>
    %68 = vector.broadcast %65 : vector<8x1xf32> to vector<8x8xf32>
    %69 = arith.subf %60, %68 : vector<8x8xf32>
    %70 = math.exp %69 : vector<8x8xf32>
    %c1_40 = arith.constant 1 : index
    %c0_41 = arith.constant 0 : index
    %c0_42 = arith.constant 0 : index
    %71 = vector.load %arg16[%c1_40, %c0_41, %c0_42] : memref<4x8x1xf32, #tpu.memory_space<vmem>>, vector<1x8x1xf32>
    %72 = vector.shape_cast %71 : vector<1x8x1xf32> to vector<8x1xf32>
    %73 = arith.mulf %67, %72 : vector<8x1xf32>
    %cst_43 = arith.constant dense<0.000000e+00> : vector<8xf32>
    %74 = vector.multi_reduction <add>, %70, %cst_43 [1] : vector<8x8xf32> to vector<8xf32>
    %75 = vector.shape_cast %74 : vector<8xf32> to vector<8x1xf32>
    %76 = arith.addf %73, %75 : vector<8x1xf32>
    %c1_44 = arith.constant 1 : index
    %c0_45 = arith.constant 0 : index
    %c0_46 = arith.constant 0 : index
    %77 = vector.load %arg16[%c1_44, %c0_45, %c0_46] : memref<4x8x1xf32, #tpu.memory_space<vmem>>, vector<1x8x1xf32>
    %78 = vector.shape_cast %77 : vector<1x8x1xf32> to vector<8x1xf32>
    %79 = vector.shape_cast %76 : vector<8x1xf32> to vector<1x8x1xf32>
    tpu.vector_store %arg16[%c1_44, %c0_45, %c0_46], %79 {strides = array<i32>} : memref<4x8x1xf32, #tpu.memory_space<vmem>>, vector<1x8x1xf32>,
    %c1_47 = arith.constant 1 : index
    %c0_48 = arith.constant 0 : index
    %c0_49 = arith.constant 0 : index
    %80 = vector.load %arg17[%c1_47, %c0_48, %c0_49] : memref<4x8x8xf32, #tpu.memory_space<vmem>>, vector<1x8x8xf32>
    %81 = vector.shape_cast %80 : vector<1x8x8xf32> to vector<8x8xf32>
    %82 = vector.broadcast %67 : vector<8x1xf32> to vector<8x8xf32>
    %83 = arith.mulf %82, %81 : vector<8x8xf32>
    %84 = arith.truncf %70 : vector<8x8xf32> to vector<8x8xbf16>
    %cst_50 = arith.constant dense<0.000000e+00> : vector<8x8xf32>
    %85 = tpu.matmul %84, %57, %cst_50 {dimension_numbers = #tpu.dot_dimension_numbers<[1], [0], [0], [1], [0, 0, 1, 1], [], []>} : vector<8x8xbf16>, vector<8x8xbf16>, vector<8x8xf32> -> vector<8x8xf32>
    %86 = arith.addf %83, %85 : vector<8x8xf32>
    %c1_51 = arith.constant 1 : index
    %c0_52 = arith.constant 0 : index
    %c0_53 = arith.constant 0 : index
    %87 = vector.load %arg17[%c1_51, %c0_52, %c0_53] : memref<4x8x8xf32, #tpu.memory_space<vmem>>, vector<1x8x8xf32>
    %88 = vector.shape_cast %87 : vector<1x8x8xf32> to vector<8x8xf32>
    %89 = vector.shape_cast %86 : vector<8x8xf32> to vector<1x8x8xf32>
    tpu.vector_store %arg17[%c1_51, %c0_52, %c0_53], %89 {strides = array<i32>} : memref<4x8x8xf32, #tpu.memory_space<vmem>>, vector<1x8x8xf32>,
    %c1_54 = arith.constant 1 : index
    %c0_55 = arith.constant 0 : index
    %c0_56 = arith.constant 0 : index
    %90 = vector.load %arg15[%c1_54, %c0_55, %c0_56] : memref<4x8x1xf32, #tpu.memory_space<vmem>>, vector<1x8x1xf32>
    %91 = vector.shape_cast %90 : vector<1x8x1xf32> to vector<8x1xf32>
    %92 = vector.shape_cast %65 : vector<8x1xf32> to vector<1x8x1xf32>
    tpu.vector_store %arg15[%c1_54, %c0_55, %c0_56], %92 {strides = array<i32>} : memref<4x8x1xf32, #tpu.memory_space<vmem>>, vector<1x8x1xf32>,
    %93 = vector.extract_strided_slice %5 {offsets = [0, 16], sizes = [8, 8], strides = [1, 1]} : vector<8x32xbf16> to vector<8x8xbf16>
    %94 = vector.extract_strided_slice %4 {offsets = [0, 16], sizes = [8, 8], strides = [1, 1]} : vector<8x64xbf16> to vector<8x8xbf16>
    %95 = vector.extract_strided_slice %4 {offsets = [0, 48], sizes = [8, 8], strides = [1, 1]} : vector<8x64xbf16> to vector<8x8xbf16>
    %cst_57 = arith.constant dense<0.000000e+00> : vector<8x8xf32>
    %96 = tpu.matmul %93, %94, %cst_57 {dimension_numbers = #tpu.dot_dimension_numbers<[1], [1], [0], [0], [0, 0, 1, 0], [], []>} : vector<8x8xbf16>, vector<8x8xbf16>, vector<8x8xf32> -> vector<8x8xf32>
    %cst_58 = arith.constant -1.000000e+10 : f32
    %97 = vector.broadcast %cst_58 : f32 to vector<8x8xf32>
    %98 = arith.select %16, %96, %97 : vector<8x8xi1>, vector<8x8xf32>
    %c2 = arith.constant 2 : index
    %c0_59 = arith.constant 0 : index
    %c0_60 = arith.constant 0 : index
    %99 = vector.load %arg15[%c2, %c0_59, %c0_60] : memref<4x8x1xf32, #tpu.memory_space<vmem>>, vector<1x8x1xf32>
    %100 = vector.shape_cast %99 : vector<1x8x1xf32> to vector<8x1xf32>
    %cst_61 = arith.constant dense<0xFF800000> : vector<8xf32>
    %101 = vector.multi_reduction <maximumf>, %98, %cst_61 [1] : vector<8x8xf32> to vector<8xf32>
    %102 = vector.shape_cast %101 : vector<8xf32> to vector<8x1xf32>
    %103 = arith.maximumf %100, %102 : vector<8x1xf32>
    %104 = arith.subf %100, %103 : vector<8x1xf32>
    %105 = math.exp %104 : vector<8x1xf32>
    %106 = vector.broadcast %103 : vector<8x1xf32> to vector<8x8xf32>
    %107 = arith.subf %98, %106 : vector<8x8xf32>
    %108 = math.exp %107 : vector<8x8xf32>
    %c2_62 = arith.constant 2 : index
    %c0_63 = arith.constant 0 : index
    %c0_64 = arith.constant 0 : index
    %109 = vector.load %arg16[%c2_62, %c0_63, %c0_64] : memref<4x8x1xf32, #tpu.memory_space<vmem>>, vector<1x8x1xf32>
    %110 = vector.shape_cast %109 : vector<1x8x1xf32> to vector<8x1xf32>
    %111 = arith.mulf %105, %110 : vector<8x1xf32>
    %cst_65 = arith.constant dense<0.000000e+00> : vector<8xf32>
    %112 = vector.multi_reduction <add>, %108, %cst_65 [1] : vector<8x8xf32> to vector<8xf32>
    %113 = vector.shape_cast %112 : vector<8xf32> to vector<8x1xf32>
    %114 = arith.addf %111, %113 : vector<8x1xf32>
    %c2_66 = arith.constant 2 : index
    %c0_67 = arith.constant 0 : index
    %c0_68 = arith.constant 0 : index
    %115 = vector.load %arg16[%c2_66, %c0_67, %c0_68] : memref<4x8x1xf32, #tpu.memory_space<vmem>>, vector<1x8x1xf32>
    %116 = vector.shape_cast %115 : vector<1x8x1xf32> to vector<8x1xf32>
    %117 = vector.shape_cast %114 : vector<8x1xf32> to vector<1x8x1xf32>
    tpu.vector_store %arg16[%c2_66, %c0_67, %c0_68], %117 {strides = array<i32>} : memref<4x8x1xf32, #tpu.memory_space<vmem>>, vector<1x8x1xf32>,
    %c2_69 = arith.constant 2 : index
    %c0_70 = arith.constant 0 : index
    %c0_71 = arith.constant 0 : index
    %118 = vector.load %arg17[%c2_69, %c0_70, %c0_71] : memref<4x8x8xf32, #tpu.memory_space<vmem>>, vector<1x8x8xf32>
    %119 = vector.shape_cast %118 : vector<1x8x8xf32> to vector<8x8xf32>
    %120 = vector.broadcast %105 : vector<8x1xf32> to vector<8x8xf32>
    %121 = arith.mulf %120, %119 : vector<8x8xf32>
    %122 = arith.truncf %108 : vector<8x8xf32> to vector<8x8xbf16>
    %cst_72 = arith.constant dense<0.000000e+00> : vector<8x8xf32>
    %123 = tpu.matmul %122, %95, %cst_72 {dimension_numbers = #tpu.dot_dimension_numbers<[1], [0], [0], [1], [0, 0, 1, 1], [], []>} : vector<8x8xbf16>, vector<8x8xbf16>, vector<8x8xf32> -> vector<8x8xf32>
    %124 = arith.addf %121, %123 : vector<8x8xf32>
    %c2_73 = arith.constant 2 : index
    %c0_74 = arith.constant 0 : index
    %c0_75 = arith.constant 0 : index
    %125 = vector.load %arg17[%c2_73, %c0_74, %c0_75] : memref<4x8x8xf32, #tpu.memory_space<vmem>>, vector<1x8x8xf32>
    %126 = vector.shape_cast %125 : vector<1x8x8xf32> to vector<8x8xf32>
    %127 = vector.shape_cast %124 : vector<8x8xf32> to vector<1x8x8xf32>
    tpu.vector_store %arg17[%c2_73, %c0_74, %c0_75], %127 {strides = array<i32>} : memref<4x8x8xf32, #tpu.memory_space<vmem>>, vector<1x8x8xf32>,
    %c2_76 = arith.constant 2 : index
    %c0_77 = arith.constant 0 : index
    %c0_78 = arith.constant 0 : index
    %128 = vector.load %arg15[%c2_76, %c0_77, %c0_78] : memref<4x8x1xf32, #tpu.memory_space<vmem>>, vector<1x8x1xf32>
    %129 = vector.shape_cast %128 : vector<1x8x1xf32> to vector<8x1xf32>
    %130 = vector.shape_cast %103 : vector<8x1xf32> to vector<1x8x1xf32>
    tpu.vector_store %arg15[%c2_76, %c0_77, %c0_78], %130 {strides = array<i32>} : memref<4x8x1xf32, #tpu.memory_space<vmem>>, vector<1x8x1xf32>,
    %131 = vector.extract_strided_slice %5 {offsets = [0, 24], sizes = [8, 8], strides = [1, 1]} : vector<8x32xbf16> to vector<8x8xbf16>
    %132 = vector.extract_strided_slice %4 {offsets = [0, 24], sizes = [8, 8], strides = [1, 1]} : vector<8x64xbf16> to vector<8x8xbf16>
    %133 = vector.extract_strided_slice %4 {offsets = [0, 56], sizes = [8, 8], strides = [1, 1]} : vector<8x64xbf16> to vector<8x8xbf16>
    %cst_79 = arith.constant dense<0.000000e+00> : vector<8x8xf32>
    %134 = tpu.matmul %131, %132, %cst_79 {dimension_numbers = #tpu.dot_dimension_numbers<[1], [1], [0], [0], [0, 0, 1, 0], [], []>} : vector<8x8xbf16>, vector<8x8xbf16>, vector<8x8xf32> -> vector<8x8xf32>
    %cst_80 = arith.constant -1.000000e+10 : f32
    %135 = vector.broadcast %cst_80 : f32 to vector<8x8xf32>
    %136 = arith.select %16, %134, %135 : vector<8x8xi1>, vector<8x8xf32>
    %c3 = arith.constant 3 : index
    %c0_81 = arith.constant 0 : index
    %c0_82 = arith.constant 0 : index
    %137 = vector.load %arg15[%c3, %c0_81, %c0_82] : memref<4x8x1xf32, #tpu.memory_space<vmem>>, vector<1x8x1xf32>
    %138 = vector.shape_cast %137 : vector<1x8x1xf32> to vector<8x1xf32>
    %cst_83 = arith.constant dense<0xFF800000> : vector<8xf32>
    %139 = vector.multi_reduction <maximumf>, %136, %cst_83 [1] : vector<8x8xf32> to vector<8xf32>
    %140 = vector.shape_cast %139 : vector<8xf32> to vector<8x1xf32>
    %141 = arith.maximumf %138, %140 : vector<8x1xf32>
    %142 = arith.subf %138, %141 : vector<8x1xf32>
    %143 = math.exp %142 : vector<8x1xf32>
    %144 = vector.broadcast %141 : vector<8x1xf32> to vector<8x8xf32>
    %145 = arith.subf %136, %144 : vector<8x8xf32>
    %146 = math.exp %145 : vector<8x8xf32>
    %c3_84 = arith.constant 3 : index
    %c0_85 = arith.constant 0 : index
    %c0_86 = arith.constant 0 : index
    %147 = vector.load %arg16[%c3_84, %c0_85, %c0_86] : memref<4x8x1xf32, #tpu.memory_space<vmem>>, vector<1x8x1xf32>
    %148 = vector.shape_cast %147 : vector<1x8x1xf32> to vector<8x1xf32>
    %149 = arith.mulf %143, %148 : vector<8x1xf32>
    %cst_87 = arith.constant dense<0.000000e+00> : vector<8xf32>
    %150 = vector.multi_reduction <add>, %146, %cst_87 [1] : vector<8x8xf32> to vector<8xf32>
    %151 = vector.shape_cast %150 : vector<8xf32> to vector<8x1xf32>
    %152 = arith.addf %149, %151 : vector<8x1xf32>
    %c3_88 = arith.constant 3 : index
    %c0_89 = arith.constant 0 : index
    %c0_90 = arith.constant 0 : index
    %153 = vector.load %arg16[%c3_88, %c0_89, %c0_90] : memref<4x8x1xf32, #tpu.memory_space<vmem>>, vector<1x8x1xf32>
    %154 = vector.shape_cast %153 : vector<1x8x1xf32> to vector<8x1xf32>
    %155 = vector.shape_cast %152 : vector<8x1xf32> to vector<1x8x1xf32>
    tpu.vector_store %arg16[%c3_88, %c0_89, %c0_90], %155 {strides = array<i32>} : memref<4x8x1xf32, #tpu.memory_space<vmem>>, vector<1x8x1xf32>,
    %c3_91 = arith.constant 3 : index
    %c0_92 = arith.constant 0 : index
    %c0_93 = arith.constant 0 : index
    %156 = vector.load %arg17[%c3_91, %c0_92, %c0_93] : memref<4x8x8xf32, #tpu.memory_space<vmem>>, vector<1x8x8xf32>
    %157 = vector.shape_cast %156 : vector<1x8x8xf32> to vector<8x8xf32>
    %158 = vector.broadcast %143 : vector<8x1xf32> to vector<8x8xf32>
    %159 = arith.mulf %158, %157 : vector<8x8xf32>
    %160 = arith.truncf %146 : vector<8x8xf32> to vector<8x8xbf16>
    %cst_94 = arith.constant dense<0.000000e+00> : vector<8x8xf32>
    %161 = tpu.matmul %160, %133, %cst_94 {dimension_numbers = #tpu.dot_dimension_numbers<[1], [0], [0], [1], [0, 0, 1, 1], [], []>} : vector<8x8xbf16>, vector<8x8xbf16>, vector<8x8xf32> -> vector<8x8xf32>
    %162 = arith.addf %159, %161 : vector<8x8xf32>
    %c3_95 = arith.constant 3 : index
    %c0_96 = arith.constant 0 : index
    %c0_97 = arith.constant 0 : index
    %163 = vector.load %arg17[%c3_95, %c0_96, %c0_97] : memref<4x8x8xf32, #tpu.memory_space<vmem>>, vector<1x8x8xf32>
    %164 = vector.shape_cast %163 : vector<1x8x8xf32> to vector<8x8xf32>
    %165 = vector.shape_cast %162 : vector<8x8xf32> to vector<1x8x8xf32>
    tpu.vector_store %arg17[%c3_95, %c0_96, %c0_97], %165 {strides = array<i32>} : memref<4x8x8xf32, #tpu.memory_space<vmem>>, vector<1x8x8xf32>,
    %c3_98 = arith.constant 3 : index
    %c0_99 = arith.constant 0 : index
    %c0_100 = arith.constant 0 : index
    %166 = vector.load %arg15[%c3_98, %c0_99, %c0_100] : memref<4x8x1xf32, #tpu.memory_space<vmem>>, vector<1x8x1xf32>
    %167 = vector.shape_cast %166 : vector<1x8x1xf32> to vector<8x1xf32>
    %168 = vector.shape_cast %141 : vector<8x1xf32> to vector<1x8x1xf32>
    tpu.vector_store %arg15[%c3_98, %c0_99, %c0_100], %168 {strides = array<i32>} : memref<4x8x1xf32, #tpu.memory_space<vmem>>, vector<1x8x1xf32>,
    %c0_i32_101 = arith.constant 0 : i32
    %169 = arith.cmpi eq, %arg2, %c0_i32_101 : i32
    %170 = arith.extui %169 : i1 to i32
    %c0_i32_102 = arith.constant 0 : i32
    %171 = arith.cmpi ne, %170, %c0_i32_102 : i32
    scf.if %171 {
      %c0_103 = arith.constant 0 : index
      %c0_104 = arith.constant 0 : index
      %172 = vector.load %arg9[%c0_103, %c0_104] : memref<32x32xbf16, #tpu.memory_space<vmem>>, vector<32x32xbf16>
      %cst_105 = arith.constant 0.000000e+00 : f32
      %173 = vector.broadcast %cst_105 : f32 to vector<8x32xf32>
      %c0_106 = arith.constant 0 : index
      %c0_107 = arith.constant 0 : index
      %c0_108 = arith.constant 0 : index
      %174 = vector.load %arg17[%c0_106, %c0_107, %c0_108] : memref<4x8x8xf32, #tpu.memory_space<vmem>>, vector<1x8x8xf32>
      %175 = vector.shape_cast %174 : vector<1x8x8xf32> to vector<8x8xf32>
      %c0_109 = arith.constant 0 : index
      %c0_110 = arith.constant 0 : index
      %c0_111 = arith.constant 0 : index
      %176 = vector.load %arg16[%c0_109, %c0_110, %c0_111] : memref<4x8x1xf32, #tpu.memory_space<vmem>>, vector<1x8x1xf32>
      %177 = vector.shape_cast %176 : vector<1x8x1xf32> to vector<8x1xf32>
      %178 = tpu.reciprocal %177 {approx = true} : vector<8x1xf32> -> vector<8x1xf32>
      %179 = vector.broadcast %178 : vector<8x1xf32> to vector<8x8xf32>
      %180 = arith.mulf %175, %179 : vector<8x8xf32>
      %181 = arith.truncf %180 : vector<8x8xf32> to vector<8x8xbf16>
      %182 = vector.extract_strided_slice %172 {offsets = [0, 0], sizes = [8, 32], strides = [1, 1]} : vector<32x32xbf16> to vector<8x32xbf16>
      %cst_112 = arith.constant dense<0.000000e+00> : vector<8x32xf32>
      %183 = tpu.matmul %181, %182, %cst_112 {dimension_numbers = #tpu.dot_dimension_numbers<[1], [0], [0], [1], [0, 0, 1, 1], [], []>} : vector<8x8xbf16>, vector<8x32xbf16>, vector<8x32xf32> -> vector<8x32xf32>
      %184 = arith.addf %173, %183 : vector<8x32xf32>
      %c1_113 = arith.constant 1 : index
      %c0_114 = arith.constant 0 : index
      %c0_115 = arith.constant 0 : index
      %185 = vector.load %arg17[%c1_113, %c0_114, %c0_115] : memref<4x8x8xf32, #tpu.memory_space<vmem>>, vector<1x8x8xf32>
      %186 = vector.shape_cast %185 : vector<1x8x8xf32> to vector<8x8xf32>
      %c1_116 = arith.constant 1 : index
      %c0_117 = arith.constant 0 : index
      %c0_118 = arith.constant 0 : index
      %187 = vector.load %arg16[%c1_116, %c0_117, %c0_118] : memref<4x8x1xf32, #tpu.memory_space<vmem>>, vector<1x8x1xf32>
      %188 = vector.shape_cast %187 : vector<1x8x1xf32> to vector<8x1xf32>
      %189 = tpu.reciprocal %188 {approx = true} : vector<8x1xf32> -> vector<8x1xf32>
      %190 = vector.broadcast %189 : vector<8x1xf32> to vector<8x8xf32>
      %191 = arith.mulf %186, %190 : vector<8x8xf32>
      %192 = arith.truncf %191 : vector<8x8xf32> to vector<8x8xbf16>
      %193 = vector.extract_strided_slice %172 {offsets = [8, 0], sizes = [8, 32], strides = [1, 1]} : vector<32x32xbf16> to vector<8x32xbf16>
      %cst_119 = arith.constant dense<0.000000e+00> : vector<8x32xf32>
      %194 = tpu.matmul %192, %193, %cst_119 {dimension_numbers = #tpu.dot_dimension_numbers<[1], [0], [0], [1], [0, 0, 1, 1], [], []>} : vector<8x8xbf16>, vector<8x32xbf16>, vector<8x32xf32> -> vector<8x32xf32>
      %195 = arith.addf %184, %194 : vector<8x32xf32>
      %c2_120 = arith.constant 2 : index
      %c0_121 = arith.constant 0 : index
      %c0_122 = arith.constant 0 : index
      %196 = vector.load %arg17[%c2_120, %c0_121, %c0_122] : memref<4x8x8xf32, #tpu.memory_space<vmem>>, vector<1x8x8xf32>
      %197 = vector.shape_cast %196 : vector<1x8x8xf32> to vector<8x8xf32>
      %c2_123 = arith.constant 2 : index
      %c0_124 = arith.constant 0 : index
      %c0_125 = arith.constant 0 : index
      %198 = vector.load %arg16[%c2_123, %c0_124, %c0_125] : memref<4x8x1xf32, #tpu.memory_space<vmem>>, vector<1x8x1xf32>
      %199 = vector.shape_cast %198 : vector<1x8x1xf32> to vector<8x1xf32>
      %200 = tpu.reciprocal %199 {approx = true} : vector<8x1xf32> -> vector<8x1xf32>
      %201 = vector.broadcast %200 : vector<8x1xf32> to vector<8x8xf32>
      %202 = arith.mulf %197, %201 : vector<8x8xf32>
      %203 = arith.truncf %202 : vector<8x8xf32> to vector<8x8xbf16>
      %204 = vector.extract_strided_slice %172 {offsets = [16, 0], sizes = [8, 32], strides = [1, 1]} : vector<32x32xbf16> to vector<8x32xbf16>
      %cst_126 = arith.constant dense<0.000000e+00> : vector<8x32xf32>
      %205 = tpu.matmul %203, %204, %cst_126 {dimension_numbers = #tpu.dot_dimension_numbers<[1], [0], [0], [1], [0, 0, 1, 1], [], []>} : vector<8x8xbf16>, vector<8x32xbf16>, vector<8x32xf32> -> vector<8x32xf32>
      %206 = arith.addf %195, %205 : vector<8x32xf32>
      %c3_127 = arith.constant 3 : index
      %c0_128 = arith.constant 0 : index
      %c0_129 = arith.constant 0 : index
      %207 = vector.load %arg17[%c3_127, %c0_128, %c0_129] : memref<4x8x8xf32, #tpu.memory_space<vmem>>, vector<1x8x8xf32>
      %208 = vector.shape_cast %207 : vector<1x8x8xf32> to vector<8x8xf32>
      %c3_130 = arith.constant 3 : index
      %c0_131 = arith.constant 0 : index
      %c0_132 = arith.constant 0 : index
      %209 = vector.load %arg16[%c3_130, %c0_131, %c0_132] : memref<4x8x1xf32, #tpu.memory_space<vmem>>, vector<1x8x1xf32>
      %210 = vector.shape_cast %209 : vector<1x8x1xf32> to vector<8x1xf32>
      %211 = tpu.reciprocal %210 {approx = true} : vector<8x1xf32> -> vector<8x1xf32>
      %212 = vector.broadcast %211 : vector<8x1xf32> to vector<8x8xf32>
      %213 = arith.mulf %208, %212 : vector<8x8xf32>
      %214 = arith.truncf %213 : vector<8x8xf32> to vector<8x8xbf16>
      %215 = vector.extract_strided_slice %172 {offsets = [24, 0], sizes = [8, 32], strides = [1, 1]} : vector<32x32xbf16> to vector<8x32xbf16>
      %cst_133 = arith.constant dense<0.000000e+00> : vector<8x32xf32>
      %216 = tpu.matmul %214, %215, %cst_133 {dimension_numbers = #tpu.dot_dimension_numbers<[1], [0], [0], [1], [0, 0, 1, 1], [], []>} : vector<8x8xbf16>, vector<8x32xbf16>, vector<8x32xf32> -> vector<8x32xf32>
      %217 = arith.addf %206, %216 : vector<8x32xf32>
      %c0_134 = arith.constant 0 : index
      %c0_135 = arith.constant 0 : index
      %218 = vector.load %arg10[%c0_134, %c0_135] : memref<1x32xf32, #tpu.memory_space<vmem>>, vector<1x32xf32>
      %219 = vector.broadcast %218 : vector<1x32xf32> to vector<8x32xf32>
      %220 = arith.addf %217, %219 : vector<8x32xf32>
      %c0_136 = arith.constant 0 : index
      %c0_137 = arith.constant 0 : index
      %c0_138 = arith.constant 0 : index
      %221 = vector.load %arg3[%c0_136, %c0_137, %c0_138] : memref<1x8x32xbf16, #tpu.memory_space<vmem>>, vector<1x8x32xbf16>
      %222 = vector.shape_cast %221 : vector<1x8x32xbf16> to vector<8x32xbf16>
      %223 = arith.extf %222 : vector<8x32xbf16> to vector<8x32xf32>
      %224 = arith.addf %223, %220 : vector<8x32xf32>
      %cst_139 = arith.constant dense<0.000000e+00> : vector<8xf32>
      %225 = vector.multi_reduction <add>, %224, %cst_139 [1] : vector<8x32xf32> to vector<8xf32>
      %226 = vector.shape_cast %225 : vector<8xf32> to vector<8x1xf32>
      %cst_140 = arith.constant 3.200000e+01 : f32
      %227 = vector.broadcast %cst_140 : f32 to vector<8x1xf32>
      %228 = arith.divf %226, %227 : vector<8x1xf32>
      %229 = vector.broadcast %228 : vector<8x1xf32> to vector<8x32xf32>
      %230 = arith.subf %224, %229 : vector<8x32xf32>
      %231 = arith.mulf %230, %230 : vector<8x32xf32>
      %cst_141 = arith.constant dense<0.000000e+00> : vector<8xf32>
      %232 = vector.multi_reduction <add>, %231, %cst_141 [1] : vector<8x32xf32> to vector<8xf32>
      %233 = vector.shape_cast %232 : vector<8xf32> to vector<8x1xf32>
      %cst_142 = arith.constant 3.200000e+01 : f32
      %234 = vector.broadcast %cst_142 : f32 to vector<8x1xf32>
      %235 = arith.divf %233, %234 : vector<8x1xf32>
      %236 = vector.broadcast %228 : vector<8x1xf32> to vector<8x32xf32>
      %237 = arith.subf %224, %236 : vector<8x32xf32>
      %cst_143 = arith.constant 9.99999974E-6 : f32
      %238 = vector.broadcast %cst_143 : f32 to vector<8x1xf32>
      %239 = arith.addf %235, %238 : vector<8x1xf32>
      %240 = math.rsqrt %239 : vector<8x1xf32>
      %241 = vector.broadcast %240 : vector<8x1xf32> to vector<8x32xf32>
      %242 = arith.mulf %237, %241 : vector<8x32xf32>
      %c0_144 = arith.constant 0 : index
      %c0_145 = arith.constant 0 : index
      %243 = vector.load %arg11[%c0_144, %c0_145] : memref<1x32xf32, #tpu.memory_space<vmem>>, vector<1x32xf32>
      %244 = vector.broadcast %243 : vector<1x32xf32> to vector<8x32xf32>
      %245 = arith.mulf %242, %244 : vector<8x32xf32>
      %c0_146 = arith.constant 0 : index
      %c0_147 = arith.constant 0 : index
      %246 = vector.load %arg12[%c0_146, %c0_147] : memref<1x32xf32, #tpu.memory_space<vmem>>, vector<1x32xf32>
      %247 = vector.broadcast %246 : vector<1x32xf32> to vector<8x32xf32>
      %248 = arith.addf %245, %247 : vector<8x32xf32>
      %249 = arith.truncf %248 : vector<8x32xf32> to vector<8x32xbf16>
      %c0_148 = arith.constant 0 : index
      %c0_149 = arith.constant 0 : index
      %c0_150 = arith.constant 0 : index
      %250 = vector.load %arg13[%c0_148, %c0_149, %c0_150] : memref<1x8x32xbf16, #tpu.memory_space<vmem>>, vector<1x8x32xbf16>
      %251 = vector.shape_cast %250 : vector<1x8x32xbf16> to vector<8x32xbf16>
      %252 = vector.shape_cast %249 : vector<8x32xbf16> to vector<1x8x32xbf16>
      tpu.vector_store %arg13[%c0_148, %c0_149, %c0_150], %252 {strides = array<i32>} : memref<1x8x32xbf16, #tpu.memory_space<vmem>>, vector<1x8x32xbf16>,
    } else {
    }
    return
  }
  func.func @transform_0(%arg0: i32, %arg1: i32, %arg2: i32) -> (i32, i32, i32) {
    %c0_i32 = arith.constant 0 : i32
    %c0_i32_0 = arith.constant 0 : i32
    return %arg0, %arg1, %c0_i32 : i32, i32, i32
  }
  func.func @transform_1(%arg0: i32, %arg1: i32, %arg2: i32) -> (i32, i32, i32) {
    %c0_i32 = arith.constant 0 : i32
    %c0_i32_0 = arith.constant 0 : i32
    return %arg0, %arg2, %c0_i32 : i32, i32, i32
  }
  func.func @transform_2(%arg0: i32, %arg1: i32, %arg2: i32) -> (i32, i32, i32) {
    %c0_i32 = arith.constant 0 : i32
    %c0_i32_0 = arith.constant 0 : i32
    return %arg0, %arg1, %c0_i32 : i32, i32, i32
  }
  func.func @transform_3(%arg0: i32, %arg1: i32, %arg2: i32) -> (i32, i32, i32) {
    %c0_i32 = arith.constant 0 : i32
    %c0_i32_0 = arith.constant 0 : i32
    return %arg0, %c0_i32, %arg2 : i32, i32, i32
  }
  func.func @transform_4(%arg0: i32, %arg1: i32, %arg2: i32) -> (i32, i32) {
    %c0_i32 = arith.constant 0 : i32
    %c0_i32_0 = arith.constant 0 : i32
    %c0_i32_1 = arith.constant 0 : i32
    return %c0_i32, %c0_i32_0 : i32, i32
  }
  func.func @transform_5(%arg0: i32, %arg1: i32, %arg2: i32) -> (i32, i32) {
    %c0_i32 = arith.constant 0 : i32
    %c0_i32_0 = arith.constant 0 : i32
    %c0_i32_1 = arith.constant 0 : i32
    return %c0_i32, %c0_i32_0 : i32, i32
  }
  func.func @transform_6(%arg0: i32, %arg1: i32, %arg2: i32) -> (i32, i32) {
    %c0_i32 = arith.constant 0 : i32
    %c0_i32_0 = arith.constant 0 : i32
    %c0_i32_1 = arith.constant 0 : i32
    return %c0_i32, %c0_i32_0 : i32, i32
  }
  func.func @transform_7(%arg0: i32, %arg1: i32, %arg2: i32) -> (i32, i32) {
    %c0_i32 = arith.constant 0 : i32
    %c0_i32_0 = arith.constant 0 : i32
    %c0_i32_1 = arith.constant 0 : i32
    return %c0_i32, %c0_i32_0 : i32, i32
  }
  func.func @transform_8(%arg0: i32, %arg1: i32, %arg2: i32) -> (i32, i32) {
    %c0_i32 = arith.constant 0 : i32
    %c0_i32_0 = arith.constant 0 : i32
    %c0_i32_1 = arith.constant 0 : i32
    return %c0_i32, %c0_i32_0 : i32, i32
  }
  func.func @transform_9(%arg0: i32, %arg1: i32, %arg2: i32) -> (i32, i32) {
    %c0_i32 = arith.constant 0 : i32
    %c0_i32_0 = arith.constant 0 : i32
    %c0_i32_1 = arith.constant 0 : i32
    return %c0_i32, %c0_i32_0 : i32, i32
  }
  func.func @transform_10(%arg0: i32, %arg1: i32, %arg2: i32) -> (i32, i32, i32) {
    %c0_i32 = arith.constant 0 : i32
    %c0_i32_0 = arith.constant 0 : i32
    return %arg0, %arg1, %c0_i32 : i32, i32, i32
  }
}

module attributes {stable_mosaic.version = 11 : i64} {
  func.func @_linear_kernel(%arg0: i32, %arg1: i32, %arg2: memref<16x32xbf16, #tpu.memory_space<vmem>>, %arg3: memref<32x16xbf16, #tpu.memory_space<vmem>>, %arg4: memref<1x16xf32, #tpu.memory_space<vmem>>, %arg5: memref<16x16xf32, #tpu.memory_space<vmem>>) attributes {dimension_semantics = [#tpu.dimension_semantics<parallel>, #tpu.dimension_semantics<parallel>], iteration_bounds = array<i64: 1, 1>, scalar_prefetch = 0 : i64, scratch_operands = 0 : i64, tpu.core_type = #tpu.core_type<tc>, window_params = [{transform_indices = @transform_0, window_bounds = array<i64: 16, 32>}, {transform_indices = @transform_1, window_bounds = array<i64: 32, 16>}, {transform_indices = @transform_2, window_bounds = array<i64: 1, 16>}, {transform_indices = @transform_3, window_bounds = array<i64: 16, 16>}]} {
    %c0 = arith.constant 0 : index
    %c0_0 = arith.constant 0 : index
    %0 = vector.load %arg2[%c0, %c0_0] : memref<16x32xbf16, #tpu.memory_space<vmem>>, vector<16x32xbf16>
    %c0_1 = arith.constant 0 : index
    %c0_2 = arith.constant 0 : index
    %1 = vector.load %arg3[%c0_1, %c0_2] : memref<32x16xbf16, #tpu.memory_space<vmem>>, vector<32x16xbf16>
    %cst = arith.constant dense<0.000000e+00> : vector<16x16xf32>
    %2 = tpu.matmul %0, %1, %cst {dimension_numbers = #tpu.dot_dimension_numbers<[1], [0], [0], [1], [0, 0, 1, 1], [], []>} : vector<16x32xbf16>, vector<32x16xbf16>, vector<16x16xf32> -> vector<16x16xf32>
    %c0_3 = arith.constant 0 : index
    %c0_4 = arith.constant 0 : index
    %3 = vector.load %arg4[%c0_3, %c0_4] : memref<1x16xf32, #tpu.memory_space<vmem>>, vector<1x16xf32>
    %4 = vector.broadcast %3 : vector<1x16xf32> to vector<16x16xf32>
    %5 = arith.addf %2, %4 : vector<16x16xf32>
    %c0_5 = arith.constant 0 : index
    %c0_6 = arith.constant 0 : index
    %6 = vector.load %arg5[%c0_5, %c0_6] : memref<16x16xf32, #tpu.memory_space<vmem>>, vector<16x16xf32>
    tpu.vector_store %arg5[%c0_5, %c0_6], %5 {strides = array<i32>} : memref<16x16xf32, #tpu.memory_space<vmem>>, vector<16x16xf32>,
    return
  }
  func.func @transform_0(%arg0: i32, %arg1: i32) -> (i32, i32) {
    %c0_i32 = arith.constant 0 : i32
    %c0_i32_0 = arith.constant 0 : i32
    return %arg0, %c0_i32 : i32, i32
  }
  func.func @transform_1(%arg0: i32, %arg1: i32) -> (i32, i32) {
    %c0_i32 = arith.constant 0 : i32
    %c0_i32_0 = arith.constant 0 : i32
    return %c0_i32, %arg1 : i32, i32
  }
  func.func @transform_2(%arg0: i32, %arg1: i32) -> (i32, i32) {
    %c0_i32 = arith.constant 0 : i32
    %c0_i32_0 = arith.constant 0 : i32
    return %c0_i32, %arg1 : i32, i32
  }
  func.func @transform_3(%arg0: i32, %arg1: i32) -> (i32, i32) {
    %c0_i32 = arith.constant 0 : i32
    return %arg0, %arg1 : i32, i32
  }
}

</mosaic_0001>

<llo_original>
// kernel: decoder_forward.11
$region0: #{decoder_forward.11}
  #allocation0 [shape = 'u32[]', space=smem, size = 0x4, offset = 0x4, fixed_abs, tag = 'smem constant byte address 0x4 - core index']
  #allocation1 [shape = 'u32[144,128]{1,0:T(1,128)}', space=vmem, size = 0x12000, scoped, tag = 'internal scratch']
  %s0 = inlined_call_operand.vmem [shape: bf16[16,32], index: 0, kind: input, shape index: {}]
  %s1 = inlined_call_operand.vmem [shape: bf16[32,64], index: 1, kind: input, shape index: {}]
  %s2 = inlined_call_operand.vmem [shape: f32[1,64], index: 2, kind: input, shape index: {}]
  %s3 = inlined_call_operand.vmem [shape: bf16[16,64], index: 3, kind: output, shape index: {}]
  %s4 = sld [smem:[#allocation0]]
  $region22: #{decoder_forward.11} parent=0
    _
  %s6 = ssub.s32 1, %s4
  %s7 = scalar_select 0, %s6, %s4
  // Predicated region
  $region2: #{decoder_forward.11} parent=0 // pred_check
    _
  $region3: #{decoder_forward.11} parent=0 // pred_check_branch
    %9 = sbr.rel (0) target = $region5
  $region4: #{decoder_forward.11} parent=0 // pred_region
    _
  $region5: #{decoder_forward.11} parent=0 // pred_fallthru
    _
  // Predicated region
  $region6: #{decoder_forward.11} parent=0 // pred_check
    _
  $region7: #{decoder_forward.11} parent=0 // pred_check_branch
    %11 = sbr.rel (0) target = $region9
  $region8: #{decoder_forward.11} parent=0 // pred_region
    _
  $region9: #{decoder_forward.11} parent=0 // pred_fallthru
    _
  // Predicated region
  $region10: #{decoder_forward.11} parent=0 // pred_check
    _
  $region11: #{decoder_forward.11} parent=0 // pred_check_branch
    %13 = sbr.rel (0) target = $region13
  $region12: #{decoder_forward.11} parent=0 // pred_region
    _
  $region13: #{decoder_forward.11} parent=0 // pred_fallthru
    _
  %v15 = vld [vmem:[%s0] sm:$0xf]
  %v16 = vld [vmem:[%s0 + $0x4] sm:$0xf]
  %v17 = vld [vmem:[%s1] sm:$0xf]
  %v18 = vld [vmem:[%s1 + $0x4] sm:$0xf]
  %v19 = vld [vmem:[%s1 + $0x8] sm:$0xf]
  %v20 = vld [vmem:[%s1 + $0xc] sm:$0xf]
  %v21 = vld [vmem:[%s2] sm:$0x1]
  %v23 = vlaneseq
  %v24 = vshrl.u32 %v23, 7
  %v25 = vsub.s32 0, %v24
  %v26 = vrot.slane %v21, %v25
  %v30 = vunpack.c.l.b16 %v15
  %v31 = vunpack.c.l.b16 %v16
  %v32 = vpack.c.b16 %v31, %v30
  %v37 = vunpack.c.l.b16 %v17
  %v38 = vunpack.c.l.b16 %v18
  %v39 = vunpack.c.l.b16 %v19
  %v40 = vunpack.c.l.b16 %v20
  %v41 = vpack.c.b16 %v38, %v37
  %v42 = vpack.c.b16 %v40, %v39
  %vm45 = vcmask 261120
  %v47 = vsel %vm45, %v32, 0
  %49 = vmatprep.subr.bf16.mxu0 0
  %50 = vmatpush1.bf16.msra.mxu0 %v41
  %51 = vmatprep.subr.bf16.mxu0 0
  %52 = vmatpush1.bf16.msra.mxu0 %v42
  %53 = vmatprep.subr.bf16.mxu0 0
  %54 = vmatpush1.bf16.msra.mxu0 0
  %55 = vmatprep.subr.bf16.mxu0 0
  %56 = vmatpush1.bf16.msra.mxu0 0
  %57 = vmatprep.subr.bf16.mxu0 0
  %58 = vmatpush1.bf16.msra.mxu0 0
  %59 = vmatprep.subr.bf16.mxu0 0
  %60 = vmatpush1.bf16.msra.mxu0 0
  %61 = vmatprep.subr.bf16.mxu0 0
  %62 = vmatpush1.bf16.msra.mxu0 0
  %63 = vmatprep.subr.bf16.mxu0 0
  %64 = vmatpush1.bf16.msra.mxu0 0
  %65 = vmatprep.subr.bf16.mxu0 0
  %66 = vmatpush1.bf16.msra.mxu0 0
  %67 = vmatprep.subr.bf16.mxu0 0
  %68 = vmatpush1.bf16.msra.mxu0 0
  %69 = vmatprep.subr.bf16.mxu0 0
  %70 = vmatpush1.bf16.msra.mxu0 0
  %71 = vmatprep.subr.bf16.mxu0 0
  %72 = vmatpush1.bf16.msra.mxu0 0
  %73 = vmatprep.subr.bf16.mxu0 0
  %74 = vmatpush1.bf16.msra.mxu0 0
  %75 = vmatprep.subr.bf16.mxu0 0
  %76 = vmatpush1.bf16.msra.mxu0 0
  %77 = vmatprep.subr.bf16.mxu0 0
  %78 = vmatpush1.bf16.msra.mxu0 0
  %79 = vmatprep.subr.bf16.mxu0 0
  %80 = vmatpush1.bf16.msra.mxu0 0
  %81 = vmatprep.mubr.bf16.mxu0 0
  %82 = vmatmul.mubr.bf16.gmra.mrb[0].mxu0 %v47
  %v83 = vpop.f32.mrb[0].mxu0
  %v84 = vadd.f32 %v26, %v83
  %v85 = vpop.f32.mrb[0].mxu0
  %v86 = vpop.f32.mrb[0].mxu0
  %v87 = vadd.f32 %v26, %v86
  %v88 = vpop.f32.mrb[0].mxu0
  %89 = vdwg.mxu0
  %v90 = vpack.c.bf16 %v87, %v84
  %v92 = vunpack.c.l.b16 %v90
  %v93 = vunpack.c.h.b16 %v90
  %v94 = vpack.c.b16 %v92, %v92
  %v95 = vpack.c.b16 %v93, %v93
  %vm98 = vcmask 519168
  %99 = vst.msk [vmem:[%s3] sm:$0xf] %vm98, %v94
  %100 = vst.msk [vmem:[%s3 + $0x4] sm:$0xf] %vm98, %v95
  // Predicated region
  $region14: #{decoder_forward.11} parent=0 // pred_check
    _
  $region15: #{decoder_forward.11} parent=0 // pred_check_branch
    %102 = sbr.rel (0) target = $region17
  $region16: #{decoder_forward.11} parent=0 // pred_region
    _
  $region17: #{decoder_forward.11} parent=0 // pred_fallthru
    _
  // Predicated region
  $region18: #{decoder_forward.11} parent=0 // pred_check
    _
  $region19: #{decoder_forward.11} parent=0 // pred_check_branch
    %104 = sbr.rel (0) target = $region21
  $region20: #{decoder_forward.11} parent=0 // pred_region
    _
  $region21: #{decoder_forward.11} parent=0 // pred_fallthru
    _

// kernel: decoder_forward.15
$region0: #{decoder_forward.15}
  #allocation0 [shape = 'u32[]', space=smem, size = 0x4, offset = 0x4, fixed_abs, tag = 'smem constant byte address 0x4 - core index']
  #allocation1 [shape = 'u32[144,128]{1,0:T(1,128)}', space=vmem, size = 0x12000, scoped, tag = 'internal scratch']
  #allocation2 [shape = 'f32[16,32]{1,0:T(8,128)}', space=vmem, size = 0x2000, scoped, tag = 'scratch operand']
  %s0 = inlined_call_operand.vmem [shape: bf16[16,32], index: 0, kind: input, shape index: {}]
  %s1 = inlined_call_operand.vmem [shape: bf16[32,64], index: 1, kind: input, shape index: {}]
  %s2 = inlined_call_operand.vmem [shape: f32[1,64], index: 2, kind: input, shape index: {}]
  %s3 = inlined_call_operand.vmem [shape: bf16[64,32], index: 3, kind: input, shape index: {}]
  %s4 = inlined_call_operand.vmem [shape: f32[1,32], index: 4, kind: input, shape index: {}]
  %s5 = inlined_call_operand.vmem [shape: f32[1,32], index: 5, kind: input, shape index: {}]
  %s6 = inlined_call_operand.vmem [shape: f32[1,32], index: 6, kind: input, shape index: {}]
  %s7 = inlined_call_operand.vmem [shape: bf16[16,32], index: 7, kind: output, shape index: {}]
  %s8 = sld [smem:[#allocation0]]
  $region46: #{decoder_forward.15} parent=0
    _
  %s10 = ssub.s32 1, %s8
  %s11 = scalar_select 0, %s10, %s8
  // Predicated region
  $region2: #{decoder_forward.15} parent=0 // pred_check
    _
  $region3: #{decoder_forward.15} parent=0 // pred_check_branch
    %13 = sbr.rel (0) target = $region5
  $region4: #{decoder_forward.15} parent=0 // pred_region
    _
  $region5: #{decoder_forward.15} parent=0 // pred_fallthru
    _
  // Predicated region
  $region6: #{decoder_forward.15} parent=0 // pred_check
    _
  $region7: #{decoder_forward.15} parent=0 // pred_check_branch
    %15 = sbr.rel (0) target = $region9
  $region8: #{decoder_forward.15} parent=0 // pred_region
    _
  $region9: #{decoder_forward.15} parent=0 // pred_fallthru
    _
  // Predicated region
  $region10: #{decoder_forward.15} parent=0 // pred_check
    _
  $region11: #{decoder_forward.15} parent=0 // pred_check_branch
    %17 = sbr.rel (0) target = $region13
  $region12: #{decoder_forward.15} parent=0 // pred_region
    _
  $region13: #{decoder_forward.15} parent=0 // pred_fallthru
    _
  // Predicated region
  $region14: #{decoder_forward.15} parent=0 // pred_check
    _
  $region15: #{decoder_forward.15} parent=0 // pred_check_branch
    %19 = sbr.rel (0) target = $region17
  $region16: #{decoder_forward.15} parent=0 // pred_region
    _
  $region17: #{decoder_forward.15} parent=0 // pred_fallthru
    _
  // Predicated region
  $region18: #{decoder_forward.15} parent=0 // pred_check
    _
  $region19: #{decoder_forward.15} parent=0 // pred_check_branch
    %21 = sbr.rel (0) target = $region21
  $region20: #{decoder_forward.15} parent=0 // pred_region
    _
  $region21: #{decoder_forward.15} parent=0 // pred_fallthru
    _
  // Predicated region
  $region22: #{decoder_forward.15} parent=0 // pred_check
    _
  $region23: #{decoder_forward.15} parent=0 // pred_check_branch
    %23 = sbr.rel (0) target = $region25
  $region24: #{decoder_forward.15} parent=0 // pred_region
    _
  $region25: #{decoder_forward.15} parent=0 // pred_fallthru
    _
  // Predicated region
  $region26: #{decoder_forward.15} parent=0 // pred_check
    _
  $region27: #{decoder_forward.15} parent=0 // pred_check_branch
    %25 = sbr.rel (0) target = $region29
  $region28: #{decoder_forward.15} parent=0 // pred_region
    _
  $region29: #{decoder_forward.15} parent=0 // pred_fallthru
    _
  %p27 = scmp.eq.s32.totalorder 0, 0
  // Predicated region
  $region30: #{decoder_forward.15} parent=0 // pred_check
    %p28 = pneg %p27
  $region31: #{decoder_forward.15} parent=0 // pred_check_branch
    %30 = sbr.rel (%p28) target = $region33
  $region32: #{decoder_forward.15} parent=0 // pred_region
    %vm31 = vcmask 261120
    %32 = vst.msk [vmem:[#allocation2] sm:$0xff] %vm31, 0.0
    %33 = vst.msk [vmem:[#allocation2 + $0x8] sm:$0xff] %vm31, 0.0
  $region33: #{decoder_forward.15} parent=0 // pred_fallthru
    _
  %v34 = vld [vmem:[%s0] sm:$0xf]
  %v35 = vld [vmem:[%s0 + $0x4] sm:$0xf]
  %v36 = vld [vmem:[%s1] sm:$0xf]
  %v37 = vld [vmem:[%s1 + $0x4] sm:$0xf]
  %v38 = vld [vmem:[%s1 + $0x8] sm:$0xf]
  %v39 = vld [vmem:[%s1 + $0xc] sm:$0xf]
  %v40 = vld [vmem:[%s2] sm:$0x1]
  %v42 = vlaneseq
  %v43 = vshrl.u32 %v42, 7
  %v44 = vsub.s32 0, %v43
  %v45 = vrot.slane %v40, %v44
  %v49 = vunpack.c.l.b16 %v34
  %v50 = vunpack.c.l.b16 %v35
  %v51 = vpack.c.b16 %v50, %v49
  %v56 = vunpack.c.l.b16 %v36
  %v57 = vunpack.c.l.b16 %v37
  %v58 = vunpack.c.l.b16 %v38
  %v59 = vunpack.c.l.b16 %v39
  %v60 = vpack.c.b16 %v57, %v56
  %v61 = vpack.c.b16 %v59, %v58
  %vm64 = vcmask 261120
  %v66 = vsel %vm64, %v51, 0
  %68 = vmatprep.subr.bf16.mxu0 0
  %69 = vmatpush1.bf16.msra.mxu0 %v60
  %70 = vmatprep.subr.bf16.mxu0 0
  %71 = vmatpush1.bf16.msra.mxu0 %v61
  %72 = vmatprep.subr.bf16.mxu0 0
  %73 = vmatpush1.bf16.msra.mxu0 0
  %74 = vmatprep.subr.bf16.mxu0 0
  %75 = vmatpush1.bf16.msra.mxu0 0
  %76 = vmatprep.subr.bf16.mxu0 0
  %77 = vmatpush1.bf16.msra.mxu0 0
  %78 = vmatprep.subr.bf16.mxu0 0
  %79 = vmatpush1.bf16.msra.mxu0 0
  %80 = vmatprep.subr.bf16.mxu0 0
  %81 = vmatpush1.bf16.msra.mxu0 0
  %82 = vmatprep.subr.bf16.mxu0 0
  %83 = vmatpush1.bf16.msra.mxu0 0
  %84 = vmatprep.subr.bf16.mxu0 0
  %85 = vmatpush1.bf16.msra.mxu0 0
  %86 = vmatprep.subr.bf16.mxu0 0
  %87 = vmatpush1.bf16.msra.mxu0 0
  %88 = vmatprep.subr.bf16.mxu0 0
  %89 = vmatpush1.bf16.msra.mxu0 0
  %90 = vmatprep.subr.bf16.mxu0 0
  %91 = vmatpush1.bf16.msra.mxu0 0
  %92 = vmatprep.subr.bf16.mxu0 0
  %93 = vmatpush1.bf16.msra.mxu0 0
  %94 = vmatprep.subr.bf16.mxu0 0
  %95 = vmatpush1.bf16.msra.mxu0 0
  %96 = vmatprep.subr.bf16.mxu0 0
  %97 = vmatpush1.bf16.msra.mxu0 0
  %98 = vmatprep.subr.bf16.mxu0 0
  %99 = vmatpush1.bf16.msra.mxu0 0
  %100 = vmatprep.mubr.bf16.mxu0 0
  %101 = vmatmul.mubr.bf16.gmra.mrb[0].mxu0 %v66
  %v102 = vpop.f32.mrb[0].mxu0
  %v103 = vadd.f32 %v45, %v102
  %v104 = vpop.f32.mrb[0].mxu0
  %v105 = vpop.f32.mrb[0].mxu0
  %v106 = vadd.f32 %v45, %v105
  %v107 = vpop.f32.mrb[0].mxu0
  %108 = vdwg.mxu0
  %v109 = vmax.f32 %v103, 0.0
  %v110 = vmax.f32 %v106, 0.0
  %v111 = vld [vmem:[#allocation2] sm:$0xff]
  %v112 = vld [vmem:[#allocation2 + $0x8] sm:$0xff]
  %v113 = vpack.c.bf16 %v110, %v109
  %v114 = vld [vmem:[%s3] sm:$0xf]
  %v115 = vld [vmem:[%s3 + $0x4] sm:$0xf]
  %v116 = vld [vmem:[%s3 + $0x8] sm:$0xf]
  %v117 = vld [vmem:[%s3 + $0xc] sm:$0xf]
  %v118 = vld [vmem:[%s3 + $0x10] sm:$0xf]
  %v119 = vld [vmem:[%s3 + $0x14] sm:$0xf]
  %v120 = vld [vmem:[%s3 + $0x18] sm:$0xf]
  %v121 = vld [vmem:[%s3 + $0x1c] sm:$0xf]
  %v130 = vunpack.c.l.b16 %v114
  %v131 = vunpack.c.l.b16 %v115
  %v132 = vunpack.c.l.b16 %v116
  %v133 = vunpack.c.l.b16 %v117
  %v134 = vunpack.c.l.b16 %v118
  %v135 = vunpack.c.l.b16 %v119
  %v136 = vunpack.c.l.b16 %v120
  %v137 = vunpack.c.l.b16 %v121
  %v138 = vpack.c.b16 %v131, %v130
  %v139 = vpack.c.b16 %v133, %v132
  %v140 = vpack.c.b16 %v135, %v134
  %v141 = vpack.c.b16 %v137, %v136
  %vm146 = vcmask 523264
  %v148 = vsel %vm146, %v113, 0
  %150 = vmatprep.subr.bf16.mxu0 0
  %151 = vmatpush1.bf16.msra.mxu0 %v138
  %152 = vmatprep.subr.bf16.mxu0 0
  %153 = vmatpush1.bf16.msra.mxu0 %v139
  %154 = vmatprep.subr.bf16.mxu0 0
  %155 = vmatpush1.bf16.msra.mxu0 %v140
  %156 = vmatprep.subr.bf16.mxu0 0
  %157 = vmatpush1.bf16.msra.mxu0 %v141
  %158 = vmatprep.subr.bf16.mxu0 0
  %159 = vmatpush1.bf16.msra.mxu0 0
  %160 = vmatprep.subr.bf16.mxu0 0
  %161 = vmatpush1.bf16.msra.mxu0 0
  %162 = vmatprep.subr.bf16.mxu0 0
  %163 = vmatpush1.bf16.msra.mxu0 0
  %164 = vmatprep.subr.bf16.mxu0 0
  %165 = vmatpush1.bf16.msra.mxu0 0
  %166 = vmatprep.subr.bf16.mxu0 0
  %167 = vmatpush1.bf16.msra.mxu0 0
  %168 = vmatprep.subr.bf16.mxu0 0
  %169 = vmatpush1.bf16.msra.mxu0 0
  %170 = vmatprep.subr.bf16.mxu0 0
  %171 = vmatpush1.bf16.msra.mxu0 0
  %172 = vmatprep.subr.bf16.mxu0 0
  %173 = vmatpush1.bf16.msra.mxu0 0
  %174 = vmatprep.subr.bf16.mxu0 0
  %175 = vmatpush1.bf16.msra.mxu0 0
  %176 = vmatprep.subr.bf16.mxu0 0
  %177 = vmatpush1.bf16.msra.mxu0 0
  %178 = vmatprep.subr.bf16.mxu0 0
  %179 = vmatpush1.bf16.msra.mxu0 0
  %180 = vmatprep.subr.bf16.mxu0 0
  %181 = vmatpush1.bf16.msra.mxu0 0
  %182 = vmatprep.mubr.bf16.mxu0 0
  %183 = vmatmul.mubr.bf16.gmra.mrb[0].mxu0 %v148
  %v184 = vpop.f32.mrb[0].mxu0
  %v185 = vadd.f32 0.0, %v184
  %v186 = vpop.f32.mrb[0].mxu0
  %v187 = vpop.f32.mrb[0].mxu0
  %v188 = vadd.f32 0.0, %v187
  %v189 = vpop.f32.mrb[0].mxu0
  %190 = vdwg.mxu0
  %v191 = vadd.f32 %v111, %v185
  %v192 = vadd.f32 %v112, %v188
  %193 = vst.msk [vmem:[#allocation2] sm:$0xff] %vm64, %v191
  %194 = vst.msk [vmem:[#allocation2 + $0x8] sm:$0xff] %vm64, %v192
  // Predicated region
  $region34: #{decoder_forward.15} parent=0 // pred_check
    %p195 = pneg %p27
  $region35: #{decoder_forward.15} parent=0 // pred_check_branch
    %197 = sbr.rel (%p195) target = $region37
  $region36: #{decoder_forward.15} parent=0 // pred_region
    %v198 = vunpack.c.l.bf16 %v34
    %v199 = vunpack.c.l.bf16 %v35
    %v200 = vld [vmem:[#allocation2] sm:$0xff]
    %v201 = vld [vmem:[#allocation2 + $0x8] sm:$0xff]
    %v202 = vadd.f32 %v198, %v200
    %v203 = vadd.f32 %v199, %v201
    %v204 = vld [vmem:[%s4] sm:$0x1]
    %v206 = vlaneseq
    %v207 = vshrl.u32 %v206, 7
    %v208 = vsub.s32 0, %v207
    %v209 = vrot.slane %v204, %v208
    %v211 = vadd.f32 %v202, %v209
    %v212 = vadd.f32 %v203, %v209
    %v213 = vsel %vm64, %v211, 0.0
    %214 = vadd.xlane.f32.xlu0 %v213
    %v215 = vpop.xlane.xlu0 %214
    %v216 = vsel %vm64, %v212, 0.0
    %217 = vadd.xlane.f32.xlu0 %v216
    %v218 = vpop.xlane.xlu0 %217
    %v219 = vrcp.pop 32.0
    %v220 = vmul.f32 %v215, %v219
    %v221 = vmul.f32 %v218, %v219
    %v222 = vsub.f32 %v211, %v220
    %v223 = vsub.f32 %v212, %v221
    %v224 = vmul.f32 %v222, %v222
    %v225 = vmul.f32 %v223, %v223
    %v226 = vsel %vm64, %v224, 0.0
    %227 = vadd.xlane.f32.xlu0 %v226
    %v228 = vpop.xlane.xlu0 %227
    %v229 = vsel %vm64, %v225, 0.0
    %230 = vadd.xlane.f32.xlu0 %v229
    %v231 = vpop.xlane.xlu0 %230
    %v232 = vmul.f32 %v228, %v219
    %v233 = vmul.f32 %v231, %v219
    %v234 = vadd.f32 %v232, 1e-05
    %v235 = vadd.f32 %v233, 1e-05
    %v236 = vrsqrt.pop %v234
    %v237 = vrsqrt.pop %v235
    %v238 = vmul.f32 %v222, %v236
    %v239 = vmul.f32 %v223, %v237
    %v240 = vld [vmem:[%s5] sm:$0x1]
    %v242 = vlaneseq
    %v243 = vshrl.u32 %v242, 7
    %v244 = vsub.s32 0, %v243
    %v245 = vrot.slane %v240, %v244
    %v247 = vmul.f32 %v238, %v245
    %v248 = vmul.f32 %v239, %v245
    %v249 = vld [vmem:[%s6] sm:$0x1]
    %v251 = vlaneseq
    %v252 = vshrl.u32 %v251, 7
    %v253 = vsub.s32 0, %v252
    %v254 = vrot.slane %v249, %v253
    %v256 = vadd.f32 %v247, %v254
    %v257 = vadd.f32 %v248, %v254
    %v258 = vpack.c.bf16 %v257, %v256
    %v260 = vunpack.c.l.b16 %v258
    %v261 = vunpack.c.h.b16 %v258
    %v262 = vpack.c.b16 %v260, %v260
    %v263 = vpack.c.b16 %v261, %v261
    %vm266 = vcmask 257024
    %267 = vst.msk [vmem:[%s7] sm:$0xf] %vm266, %v262
    %268 = vst.msk [vmem:[%s7 + $0x4] sm:$0xf] %vm266, %v263
  $region37: #{decoder_forward.15} parent=0 // pred_fallthru
    _
  // Predicated region
  $region38: #{decoder_forward.15} parent=0 // pred_check
    _
  $region39: #{decoder_forward.15} parent=0 // pred_check_branch
    %270 = sbr.rel (0) target = $region41
  $region40: #{decoder_forward.15} parent=0 // pred_region
    _
  $region41: #{decoder_forward.15} parent=0 // pred_fallthru
    _
  // Predicated region
  $region42: #{decoder_forward.15} parent=0 // pred_check
    _
  $region43: #{decoder_forward.15} parent=0 // pred_check_branch
    %272 = sbr.rel (0) target = $region45
  $region44: #{decoder_forward.15} parent=0 // pred_region
    _
  $region45: #{decoder_forward.15} parent=0 // pred_fallthru
    _

// kernel: decoder_forward.21
$region0: #{decoder_forward.21}
  #allocation0 [shape = 'u32[]', space=smem, size = 0x4, offset = 0x4, fixed_abs, tag = 'smem constant byte address 0x4 - core index']
  #allocation1 [shape = 'u32[144,128]{1,0:T(1,128)}', space=vmem, size = 0x12000, scoped, tag = 'internal scratch']
  %s0 = inlined_call_operand.vmem [shape: bf16[16,32], index: 0, kind: input, shape index: {}]
  %s1 = inlined_call_operand.vmem [shape: bf16[32,16], index: 1, kind: input, shape index: {}]
  %s2 = inlined_call_operand.vmem [shape: f32[1,16], index: 2, kind: input, shape index: {}]
  %s3 = inlined_call_operand.hbm [shape: f32[16,16], index: 3, kind: output, shape index: {}]
  %s4 = sld [smem:[#allocation0]]
  $region22: #{decoder_forward.21} parent=0
    _
  %s6 = ssub.s32 1, %s4
  %s7 = scalar_select 0, %s6, %s4
  $region1: #{decoder_forward.21} parent=0
    #allocation2 [shape = 'u8[8192]{0}', space=vmem, size = 0x2000, scoped, tag = 'output window, operand 0, single buffered']
    #allocation3 [shape = 's32[1]{0}', space=sflag, size = 0x4, scoped, tag = 'scoped memory for decoder_forward.21']
    %8 = vsyncpa [#allocation3], 0
    // Predicated region
    $region2: #{decoder_forward.21} parent=1 // pred_check
      _
    $region3: #{decoder_forward.21} parent=1 // pred_check_branch
      %10 = sbr.rel (0) target = $region5
    $region4: #{decoder_forward.21} parent=1 // pred_region
      _
    $region5: #{decoder_forward.21} parent=1 // pred_fallthru
      _
    // Predicated region
    $region6: #{decoder_forward.21} parent=1 // pred_check
      _
    $region7: #{decoder_forward.21} parent=1 // pred_check_branch
      %12 = sbr.rel (0) target = $region9
    $region8: #{decoder_forward.21} parent=1 // pred_region
      _
    $region9: #{decoder_forward.21} parent=1 // pred_fallthru
      _
    // Predicated region
    $region10: #{decoder_forward.21} parent=1 // pred_check
      _
    $region11: #{decoder_forward.21} parent=1 // pred_check_branch
      %14 = sbr.rel (0) target = $region13
    $region12: #{decoder_forward.21} parent=1 // pred_region
      _
    $region13: #{decoder_forward.21} parent=1 // pred_fallthru
      _
    %v16 = vld [vmem:[%s0] sm:$0xf]
    %v17 = vld [vmem:[%s0 + $0x4] sm:$0xf]
    %v18 = vld [vmem:[%s1] sm:$0xf]
    %v19 = vld [vmem:[%s1 + $0x4] sm:$0xf]
    %v20 = vld [vmem:[%s1 + $0x8] sm:$0xf]
    %v21 = vld [vmem:[%s1 + $0xc] sm:$0xf]
    %v22 = vld [vmem:[%s2] sm:$0x1]
    %v24 = vlaneseq
    %v25 = vshrl.u32 %v24, 7
    %v26 = vsub.s32 0, %v25
    %v27 = vrot.slane %v22, %v26
    %v31 = vunpack.c.l.b16 %v16
    %v32 = vunpack.c.l.b16 %v17
    %v33 = vpack.c.b16 %v32, %v31
    %v38 = vunpack.c.l.b16 %v18
    %v39 = vunpack.c.l.b16 %v19
    %v40 = vunpack.c.l.b16 %v20
    %v41 = vunpack.c.l.b16 %v21
    %v42 = vpack.c.b16 %v39, %v38
    %v43 = vpack.c.b16 %v41, %v40
    %vm46 = vcmask 261120
    %v48 = vsel %vm46, %v33, 0
    %50 = vmatprep.subr.bf16.mxu0 0
    %51 = vmatpush1.bf16.msra.mxu0 %v42
    %52 = vmatprep.subr.bf16.mxu0 0
    %53 = vmatpush1.bf16.msra.mxu0 %v43
    %54 = vmatprep.subr.bf16.mxu0 0
    %55 = vmatpush1.bf16.msra.mxu0 0
    %56 = vmatprep.subr.bf16.mxu0 0
    %57 = vmatpush1.bf16.msra.mxu0 0
    %58 = vmatprep.subr.bf16.mxu0 0
    %59 = vmatpush1.bf16.msra.mxu0 0
    %60 = vmatprep.subr.bf16.mxu0 0
    %61 = vmatpush1.bf16.msra.mxu0 0
    %62 = vmatprep.subr.bf16.mxu0 0
    %63 = vmatpush1.bf16.msra.mxu0 0
    %64 = vmatprep.subr.bf16.mxu0 0
    %65 = vmatpush1.bf16.msra.mxu0 0
    %66 = vmatprep.subr.bf16.mxu0 0
    %67 = vmatpush1.bf16.msra.mxu0 0
    %68 = vmatprep.subr.bf16.mxu0 0
    %69 = vmatpush1.bf16.msra.mxu0 0
    %70 = vmatprep.subr.bf16.mxu0 0
    %71 = vmatpush1.bf16.msra.mxu0 0
    %72 = vmatprep.subr.bf16.mxu0 0
    %73 = vmatpush1.bf16.msra.mxu0 0
    %74 = vmatprep.subr.bf16.mxu0 0
    %75 = vmatpush1.bf16.msra.mxu0 0
    %76 = vmatprep.subr.bf16.mxu0 0
    %77 = vmatpush1.bf16.msra.mxu0 0
    %78 = vmatprep.subr.bf16.mxu0 0
    %79 = vmatpush1.bf16.msra.mxu0 0
    %80 = vmatprep.subr.bf16.mxu0 0
    %81 = vmatpush1.bf16.msra.mxu0 0
    %82 = vmatprep.mubr.bf16.mxu0 0
    %83 = vmatmul.mubr.bf16.gmra.mrb[0].mxu0 %v48
    %v84 = vpop.f32.mrb[0].mxu0
    %v85 = vadd.f32 %v27, %v84
    %v86 = vpop.f32.mrb[0].mxu0
    %v87 = vpop.f32.mrb[0].mxu0
    %v88 = vadd.f32 %v27, %v87
    %v89 = vpop.f32.mrb[0].mxu0
    %90 = vdwg.mxu0
    %vm91 = vcmask 130048
    %92 = vst.msk [vmem:[#allocation2] sm:$0xff] %vm91, %v85
    %93 = vst.msk [vmem:[#allocation2 + $0x8] sm:$0xff] %vm91, %v88
    // Predicated region
    $region14: #{decoder_forward.21} parent=1 // pred_check
      _
    $region15: #{decoder_forward.21} parent=1 // pred_check_branch
      %95 = sbr.rel (0) target = $region17
    $region16: #{decoder_forward.21} parent=1 // pred_region
      %s97 = ssub.s32 256, 256
      %98 = vsyncadd [#allocation3], %s97
      %s99 = sshll.u32 [#allocation2], 4
      %s100 = int_to_ptr.vmem [resolvable:$true] %s99
      %105 = dma.vmem_to_hbm [thread:$0]  %s100, 256, %s3, [#allocation3], 128, 128, 8
    $region17: #{decoder_forward.21} parent=1 // pred_fallthru
      _
    // Predicated region
    $region18: #{decoder_forward.21} parent=1 // pred_check
      _
    $region19: #{decoder_forward.21} parent=1 // pred_check_branch
      %107 = sbr.rel (0) target = $region21
    $region20: #{decoder_forward.21} parent=1 // pred_region
      %108 = dma.done [#allocation3], 256
    $region21: #{decoder_forward.21} parent=1 // pred_fallthru
      _
    %109 = vsyncpa [#allocation3], 1

// kernel: decoder_forward.12
$region0: #{decoder_forward.12}
  #allocation0 [shape = 'u32[]', space=smem, size = 0x4, offset = 0x4, fixed_abs, tag = 'smem constant byte address 0x4 - core index']
  #allocation1 [shape = 'u32[144,128]{1,0:T(1,128)}', space=vmem, size = 0x12000, scoped, tag = 'internal scratch']
  #allocation2 [shape = 'bf16[8,32]{1,0:T(8,128)(2,1)}', space=vmem, size = 0x800, scoped, tag = 'scratch operand']
  #allocation3 [shape = 'f32[4,8,1]{2,1,0:T(8,128)}', space=vmem, size = 0x4000, scoped, tag = 'scratch operand']
  #allocation4 [shape = 'f32[4,8,1]{2,1,0:T(8,128)}', space=vmem, size = 0x4000, scoped, tag = 'scratch operand']
  #allocation5 [shape = 'f32[4,8,8]{2,1,0:T(8,128)}', space=vmem, size = 0x4000, scoped, tag = 'scratch operand']
  %s0 = inlined_call_operand.vmem [shape: bf16[2,8,32], index: 0, kind: input, shape index: {}]
  %s1 = inlined_call_operand.vmem [shape: bf16[2,8,64], index: 1, kind: input, shape index: {}]
  %s2 = inlined_call_operand.vmem [shape: f32[2,8,1], index: 2, kind: input, shape index: {}]
  %s3 = inlined_call_operand.vmem [shape: f32[2,1,8], index: 3, kind: input, shape index: {}]
  %s4 = inlined_call_operand.vmem [shape: bf16[32,32], index: 4, kind: input, shape index: {}]
  %s5 = inlined_call_operand.vmem [shape: f32[1,32], index: 5, kind: input, shape index: {}]
  %s6 = inlined_call_operand.vmem [shape: bf16[32,32], index: 6, kind: input, shape index: {}]
  %s7 = inlined_call_operand.vmem [shape: f32[1,32], index: 7, kind: input, shape index: {}]
  %s8 = inlined_call_operand.vmem [shape: f32[1,32], index: 8, kind: input, shape index: {}]
  %s9 = inlined_call_operand.vmem [shape: f32[1,32], index: 9, kind: input, shape index: {}]
  %s10 = inlined_call_operand.vmem [shape: bf16[2,8,32], index: 10, kind: output, shape index: {}]
  %s11 = sld [smem:[#allocation0]]
  $region81: #{decoder_forward.12} parent=0
    _
  %s13 = ssub.s32 1, %s11
  %s14 = scalar_select 0, %s13, %s11
  loop: start=0, step=1, limit=4
  $region2: #{decoder_forward.12} parent=0 // loop_pre_header
    _
  $region3: #{decoder_forward.12} parent=0 // loop_header
    %s16 = sphi 0, %s20
    %p17 = scmp.ge.s32.totalorder %s16, 4
    %s23 = sphi 0, %s42
    %s24 = sphi 0, %s38
    %s25 = sphi 0, %s34
    %s26 = sphi 0, %s23
    %s27 = sphi 0, %s24
    %s28 = sphi 0, %s25
    %s29 = sphi 0, %s26
    %s30 = sphi 0, %s27
    %s31 = sphi 0, %s28
    %s47 = sphi 0, %s49
    %s50 = sphi 0, %s47
    %s51 = sphi 0, %s50
    %s67 = sphi 0, %s51
    %s75 = sphi 0, %s77
    %s78 = sphi 0, %s75
    %s79 = sphi 0, %s78
    %s95 = sphi 0, %s79
    %s103 = sphi 0, %s105
    %s106 = sphi 0, %s103
    %s107 = sphi 0, %s106
    %s123 = sphi 0, %s107
    %s131 = sphi 0, %s133
    %s134 = sphi 0, %s131
    %s135 = sphi 0, %s134
    %s151 = sphi 0, %s135
    %s155 = sphi 0, %s155
    %s157 = sphi 0, %s155
    %s158 = sphi 0, %s157
    %s172 = sphi 0, %s158
    %s176 = sphi 0, %s176
    %s178 = sphi 0, %s176
    %s179 = sphi 0, %s178
    %s193 = sphi 0, %s179
    %s197 = sphi 0, %s197
    %s199 = sphi 0, %s197
    %s200 = sphi 0, %s199
    %s214 = sphi 0, %s200
    %s218 = sphi 0, %s218
    %s220 = sphi 0, %s218
    %s221 = sphi 0, %s220
    %s235 = sphi 0, %s221
    %s239 = sphi 0, %s239
    %s241 = sphi 0, %s239
    %s242 = sphi 0, %s241
    %s256 = sphi 0, %s242
    %s260 = sphi 0, %s260
    %s262 = sphi 0, %s260
    %s263 = sphi 0, %s262
    %s277 = sphi 0, %s263
    %s285 = sphi 0, %s287
    %s288 = sphi 0, %s285
    %s289 = sphi 0, %s288
    %s305 = sphi 0, %s289
  $region4: #{decoder_forward.12} parent=0 // loop_header_branch
    %19 = sbr.rel (%p17) target = $region8
  $region5: #{decoder_forward.12} parent=0 // loop_body
    %s21 = ssub.s32 %s16, 1
    %s22 = ssub.s32 %s16, 2
    %s32 = sadd.s32 1, %s25
    %p33 = scmp.ge.s32.totalorder %s32, 1
    %s34 = scalar_select %p33, 0, %s32
    %s35 = sadd.s32 1, %s24
    %s36 = scalar_select %p33, %s35, %s24
    %p37 = scmp.ge.s32.totalorder %s36, 1
    %s38 = scalar_select %p37, 0, %s36
    %s39 = sadd.s32 1, %s23
    %s40 = scalar_select %p37, %s39, %s23
    %p41 = scmp.ge.s32.totalorder %s40, 2
    %s42 = scalar_select %p41, 0, %s40
    %s43 = ssub.s32 %s23, %s42
    %s44 = ssub.s32 %s24, %s38
    %s45 = sor.u32 %s43, %s44
    %p46 = scmp.eq.s32.totalorder %s45, 0
    %s48 = sadd.s32 %s47, 1
    %s49 = scalar_select %p46, %s47, %s48
    %p52 = pneg %p46
    %p53 = scmp.eq.s32.totalorder %s16, 1
    %p54 = por %p52, %p53
    %p55 = scmp.ne.s32.totalorder %s47, %s50
    %p56 = scmp.eq.s32.totalorder %s16, 0
    %p57 = por %p55, %p56
    %p58 = scmp.ne.s32.totalorder %s47, %s50
    %p59 = scmp.eq.s32.totalorder %s21, 1
    %p60 = por %p58, %p59
    %p61 = scmp.ne.s32.totalorder %s50, %s51
    %p62 = scmp.eq.s32.totalorder %s21, 0
    %p63 = por %p61, %p62
    %p64 = scmp.ne.s32.totalorder %s50, %s51
    %p65 = scmp.eq.s32.totalorder %s22, 1
    %p66 = por %p64, %p65
    %p68 = scmp.ne.s32.totalorder %s51, %s67
    %p69 = scmp.eq.s32.totalorder %s22, 0
    %p70 = por %p68, %p69
    %s71 = ssub.s32 %s23, %s42
    %s72 = ssub.s32 %s25, %s34
    %s73 = sor.u32 %s71, %s72
    %p74 = scmp.eq.s32.totalorder %s73, 0
    %s76 = sadd.s32 %s75, 1
    %s77 = scalar_select %p74, %s75, %s76
    %p80 = pneg %p74
    %p81 = scmp.eq.s32.totalorder %s16, 1
    %p82 = por %p80, %p81
    %p83 = scmp.ne.s32.totalorder %s75, %s78
    %p84 = scmp.eq.s32.totalorder %s16, 0
    %p85 = por %p83, %p84
    %p86 = scmp.ne.s32.totalorder %s75, %s78
    %p87 = scmp.eq.s32.totalorder %s21, 1
    %p88 = por %p86, %p87
    %p89 = scmp.ne.s32.totalorder %s78, %s79
    %p90 = scmp.eq.s32.totalorder %s21, 0
    %p91 = por %p89, %p90
    %p92 = scmp.ne.s32.totalorder %s78, %s79
    %p93 = scmp.eq.s32.totalorder %s22, 1
    %p94 = por %p92, %p93
    %p96 = scmp.ne.s32.totalorder %s79, %s95
    %p97 = scmp.eq.s32.totalorder %s22, 0
    %p98 = por %p96, %p97
    %s99 = ssub.s32 %s23, %s42
    %s100 = ssub.s32 %s24, %s38
    %s101 = sor.u32 %s99, %s100
    %p102 = scmp.eq.s32.totalorder %s101, 0
    %s104 = sadd.s32 %s103, 1
    %s105 = scalar_select %p102, %s103, %s104
    %p108 = pneg %p102
    %p109 = scmp.eq.s32.totalorder %s16, 1
    %p110 = por %p108, %p109
    %p111 = scmp.ne.s32.totalorder %s103, %s106
    %p112 = scmp.eq.s32.totalorder %s16, 0
    %p113 = por %p111, %p112
    %p114 = scmp.ne.s32.totalorder %s103, %s106
    %p115 = scmp.eq.s32.totalorder %s21, 1
    %p116 = por %p114, %p115
    %p117 = scmp.ne.s32.totalorder %s106, %s107
    %p118 = scmp.eq.s32.totalorder %s21, 0
    %p119 = por %p117, %p118
    %p120 = scmp.ne.s32.totalorder %s106, %s107
    %p121 = scmp.eq.s32.totalorder %s22, 1
    %p122 = por %p120, %p121
    %p124 = scmp.ne.s32.totalorder %s107, %s123
    %p125 = scmp.eq.s32.totalorder %s22, 0
    %p126 = por %p124, %p125
    %s127 = ssub.s32 %s23, %s42
    %s128 = ssub.s32 %s25, %s34
    %s129 = sor.u32 %s127, %s128
    %p130 = scmp.eq.s32.totalorder %s129, 0
    %s132 = sadd.s32 %s131, 1
    %s133 = scalar_select %p130, %s131, %s132
    %p136 = pneg %p130
    %p137 = scmp.eq.s32.totalorder %s16, 1
    %p138 = por %p136, %p137
    %p139 = scmp.ne.s32.totalorder %s131, %s134
    %p140 = scmp.eq.s32.totalorder %s16, 0
    %p141 = por %p139, %p140
    %p142 = scmp.ne.s32.totalorder %s131, %s134
    %p143 = scmp.eq.s32.totalorder %s21, 1
    %p144 = por %p142, %p143
    %p145 = scmp.ne.s32.totalorder %s134, %s135
    %p146 = scmp.eq.s32.totalorder %s21, 0
    %p147 = por %p145, %p146
    %p148 = scmp.ne.s32.totalorder %s134, %s135
    %p149 = scmp.eq.s32.totalorder %s22, 1
    %p150 = por %p148, %p149
    %p152 = scmp.ne.s32.totalorder %s135, %s151
    %p153 = scmp.eq.s32.totalorder %s22, 0
    %p154 = por %p152, %p153
    %s156 = sadd.s32 %s155, 1
    %p159 = scmp.eq.s32.totalorder %s16, 1
    %p160 = scmp.ne.s32.totalorder %s155, %s157
    %p161 = scmp.eq.s32.totalorder %s16, 0
    %p162 = por %p160, %p161
    %p163 = scmp.ne.s32.totalorder %s155, %s157
    %p164 = scmp.eq.s32.totalorder %s21, 1
    %p165 = por %p163, %p164
    %p166 = scmp.ne.s32.totalorder %s157, %s158
    %p167 = scmp.eq.s32.totalorder %s21, 0
    %p168 = por %p166, %p167
    %p169 = scmp.ne.s32.totalorder %s157, %s158
    %p170 = scmp.eq.s32.totalorder %s22, 1
    %p171 = por %p169, %p170
    %p173 = scmp.ne.s32.totalorder %s158, %s172
    %p174 = scmp.eq.s32.totalorder %s22, 0
    %p175 = por %p173, %p174
    %s177 = sadd.s32 %s176, 1
    %p180 = scmp.eq.s32.totalorder %s16, 1
    %p181 = scmp.ne.s32.totalorder %s176, %s178
    %p182 = scmp.eq.s32.totalorder %s16, 0
    %p183 = por %p181, %p182
    %p184 = scmp.ne.s32.totalorder %s176, %s178
    %p185 = scmp.eq.s32.totalorder %s21, 1
    %p186 = por %p184, %p185
    %p187 = scmp.ne.s32.totalorder %s178, %s179
    %p188 = scmp.eq.s32.totalorder %s21, 0
    %p189 = por %p187, %p188
    %p190 = scmp.ne.s32.totalorder %s178, %s179
    %p191 = scmp.eq.s32.totalorder %s22, 1
    %p192 = por %p190, %p191
    %p194 = scmp.ne.s32.totalorder %s179, %s193
    %p195 = scmp.eq.s32.totalorder %s22, 0
    %p196 = por %p194, %p195
    %s198 = sadd.s32 %s197, 1
    %p201 = scmp.eq.s32.totalorder %s16, 1
    %p202 = scmp.ne.s32.totalorder %s197, %s199
    %p203 = scmp.eq.s32.totalorder %s16, 0
    %p204 = por %p202, %p203
    %p205 = scmp.ne.s32.totalorder %s197, %s199
    %p206 = scmp.eq.s32.totalorder %s21, 1
    %p207 = por %p205, %p206
    %p208 = scmp.ne.s32.totalorder %s199, %s200
    %p209 = scmp.eq.s32.totalorder %s21, 0
    %p210 = por %p208, %p209
    %p211 = scmp.ne.s32.totalorder %s199, %s200
    %p212 = scmp.eq.s32.totalorder %s22, 1
    %p213 = por %p211, %p212
    %p215 = scmp.ne.s32.totalorder %s200, %s214
    %p216 = scmp.eq.s32.totalorder %s22, 0
    %p217 = por %p215, %p216
    %s219 = sadd.s32 %s218, 1
    %p222 = scmp.eq.s32.totalorder %s16, 1
    %p223 = scmp.ne.s32.totalorder %s218, %s220
    %p224 = scmp.eq.s32.totalorder %s16, 0
    %p225 = por %p223, %p224
    %p226 = scmp.ne.s32.totalorder %s218, %s220
    %p227 = scmp.eq.s32.totalorder %s21, 1
    %p228 = por %p226, %p227
    %p229 = scmp.ne.s32.totalorder %s220, %s221
    %p230 = scmp.eq.s32.totalorder %s21, 0
    %p231 = por %p229, %p230
    %p232 = scmp.ne.s32.totalorder %s220, %s221
    %p233 = scmp.eq.s32.totalorder %s22, 1
    %p234 = por %p232, %p233
    %p236 = scmp.ne.s32.totalorder %s221, %s235
    %p237 = scmp.eq.s32.totalorder %s22, 0
    %p238 = por %p236, %p237
    %s240 = sadd.s32 %s239, 1
    %p243 = scmp.eq.s32.totalorder %s16, 1
    %p244 = scmp.ne.s32.totalorder %s239, %s241
    %p245 = scmp.eq.s32.totalorder %s16, 0
    %p246 = por %p244, %p245
    %p247 = scmp.ne.s32.totalorder %s239, %s241
    %p248 = scmp.eq.s32.totalorder %s21, 1
    %p249 = por %p247, %p248
    %p250 = scmp.ne.s32.totalorder %s241, %s242
    %p251 = scmp.eq.s32.totalorder %s21, 0
    %p252 = por %p250, %p251
    %p253 = scmp.ne.s32.totalorder %s241, %s242
    %p254 = scmp.eq.s32.totalorder %s22, 1
    %p255 = por %p253, %p254
    %p257 = scmp.ne.s32.totalorder %s242, %s256
    %p258 = scmp.eq.s32.totalorder %s22, 0
    %p259 = por %p257, %p258
    %s261 = sadd.s32 %s260, 1
    %p264 = scmp.eq.s32.totalorder %s16, 1
    %p265 = scmp.ne.s32.totalorder %s260, %s262
    %p266 = scmp.eq.s32.totalorder %s16, 0
    %p267 = por %p265, %p266
    %p268 = scmp.ne.s32.totalorder %s260, %s262
    %p269 = scmp.eq.s32.totalorder %s21, 1
    %p270 = por %p268, %p269
    %p271 = scmp.ne.s32.totalorder %s262, %s263
    %p272 = scmp.eq.s32.totalorder %s21, 0
    %p273 = por %p271, %p272
    %p274 = scmp.ne.s32.totalorder %s262, %s263
    %p275 = scmp.eq.s32.totalorder %s22, 1
    %p276 = por %p274, %p275
    %p278 = scmp.ne.s32.totalorder %s263, %s277
    %p279 = scmp.eq.s32.totalorder %s22, 0
    %p280 = por %p278, %p279
    %s281 = ssub.s32 %s23, %s42
    %s282 = ssub.s32 %s24, %s38
    %s283 = sor.u32 %s281, %s282
    %p284 = scmp.eq.s32.totalorder %s283, 0
    %s286 = sadd.s32 %s285, 1
    %s287 = scalar_select %p284, %s285, %s286
    %p290 = pneg %p284
    %p291 = scmp.eq.s32.totalorder %s16, 1
    %p292 = por %p290, %p291
    %p293 = scmp.ne.s32.totalorder %s285, %s288
    %p294 = scmp.eq.s32.totalorder %s16, 0
    %p295 = por %p293, %p294
    %p296 = scmp.ne.s32.totalorder %s285, %s288
    %p297 = scmp.eq.s32.totalorder %s21, 1
    %p298 = por %p296, %p297
    %p299 = scmp.ne.s32.totalorder %s288, %s289
    %p300 = scmp.eq.s32.totalorder %s21, 0
    %p301 = por %p299, %p300
    %p302 = scmp.ne.s32.totalorder %s288, %s289
    %p303 = scmp.eq.s32.totalorder %s22, 1
    %p304 = por %p302, %p303
    %p306 = scmp.ne.s32.totalorder %s289, %s305
    %p307 = scmp.eq.s32.totalorder %s22, 0
    %p308 = por %p306, %p307
    %p309 = scmp.le.s32.totalorder 1, %s16
    %p310 = scmp.lt.s32.totalorder %s16, 3
    %p311 = pnand %p309, %p310
    %p312 = pneg %p311
    // Predicated region
    $region9: #{decoder_forward.12} parent=5 // pred_check
      _
    $region10: #{decoder_forward.12} parent=5 // pred_check_branch
      %314 = sbr.rel (%p311) target = $region12
    $region11: #{decoder_forward.12} parent=5 // pred_region
      %s315 = ssub.s32 %s16, 1
      // Predicated region
      $region13: #{decoder_forward.12} parent=11 // pred_check
        %p316 = pneg %p168
      $region14: #{decoder_forward.12} parent=11 // pred_check_branch
        %318 = sbr.rel (%p316) target = $region16
      $region15: #{decoder_forward.12} parent=11 // pred_region
        _
      $region16: #{decoder_forward.12} parent=11 // pred_fallthru
        _
      // Predicated region
      $region17: #{decoder_forward.12} parent=11 // pred_check
        %p319 = pneg %p189
      $region18: #{decoder_forward.12} parent=11 // pred_check_branch
        %321 = sbr.rel (%p319) target = $region20
      $region19: #{decoder_forward.12} parent=11 // pred_region
        _
      $region20: #{decoder_forward.12} parent=11 // pred_fallthru
        _
      // Predicated region
      $region21: #{decoder_forward.12} parent=11 // pred_check
        %p322 = pneg %p210
      $region22: #{decoder_forward.12} parent=11 // pred_check_branch
        %324 = sbr.rel (%p322) target = $region24
      $region23: #{decoder_forward.12} parent=11 // pred_region
        _
      $region24: #{decoder_forward.12} parent=11 // pred_fallthru
        _
      // Predicated region
      $region25: #{decoder_forward.12} parent=11 // pred_check
        %p325 = pneg %p231
      $region26: #{decoder_forward.12} parent=11 // pred_check_branch
        %327 = sbr.rel (%p325) target = $region28
      $region27: #{decoder_forward.12} parent=11 // pred_region
        _
      $region28: #{decoder_forward.12} parent=11 // pred_fallthru
        _
      // Predicated region
      $region29: #{decoder_forward.12} parent=11 // pred_check
        %p328 = pneg %p252
      $region30: #{decoder_forward.12} parent=11 // pred_check_branch
        %330 = sbr.rel (%p328) target = $region32
      $region31: #{decoder_forward.12} parent=11 // pred_region
        _
      $region32: #{decoder_forward.12} parent=11 // pred_fallthru
        _
      // Predicated region
      $region33: #{decoder_forward.12} parent=11 // pred_check
        %p331 = pneg %p273
      $region34: #{decoder_forward.12} parent=11 // pred_check_branch
        %333 = sbr.rel (%p331) target = $region36
      $region35: #{decoder_forward.12} parent=11 // pred_region
        _
      $region36: #{decoder_forward.12} parent=11 // pred_fallthru
        _
    $region12: #{decoder_forward.12} parent=5 // pred_fallthru
      _
    %p334 = scmp.lt.s32.totalorder %s16, 2
    // Predicated region
    $region37: #{decoder_forward.12} parent=5 // pred_check
      %p335 = pneg %p334
    $region38: #{decoder_forward.12} parent=5 // pred_check_branch
      %337 = sbr.rel (%p335) target = $region40
    $region39: #{decoder_forward.12} parent=5 // pred_region
      // Predicated region
      $region41: #{decoder_forward.12} parent=39 // pred_check
        %p338 = pneg %p57
      $region42: #{decoder_forward.12} parent=39 // pred_check_branch
        %340 = sbr.rel (%p338) target = $region44
      $region43: #{decoder_forward.12} parent=39 // pred_region
        %p341 = scmp.lt.s32.totalorder %s23, 1
        %s342 = scalar_select %p341, %s23, 1
        %p343 = scmp.lt.s32.totalorder %s24, 0
        %s344 = scalar_select %p343, %s24, 0
        %s345 = sadd.s32 %s344, %s342
        %s346 = smul.addr %s345, 4
        %s347 = scalar_lea.vmem %s0, %s346
      $region44: #{decoder_forward.12} parent=39 // pred_fallthru
        _
      // Predicated region
      $region45: #{decoder_forward.12} parent=39 // pred_check
        %p348 = pneg %p85
      $region46: #{decoder_forward.12} parent=39 // pred_check_branch
        %350 = sbr.rel (%p348) target = $region48
      $region47: #{decoder_forward.12} parent=39 // pred_region
        %p351 = scmp.lt.s32.totalorder %s23, 1
        %s352 = scalar_select %p351, %s23, 1
        %p353 = scmp.lt.s32.totalorder %s25, 0
        %s354 = scalar_select %p353, %s25, 0
        %s355 = sadd.s32 %s354, %s352
        %s356 = smul.addr %s355, 4
        %s357 = scalar_lea.vmem %s1, %s356
      $region48: #{decoder_forward.12} parent=39 // pred_fallthru
        _
      // Predicated region
      $region49: #{decoder_forward.12} parent=39 // pred_check
        %p358 = pneg %p113
      $region50: #{decoder_forward.12} parent=39 // pred_check_branch
        %360 = sbr.rel (%p358) target = $region52
      $region51: #{decoder_forward.12} parent=39 // pred_region
        %p361 = scmp.lt.s32.totalorder %s23, 1
        %s362 = scalar_select %p361, %s23, 1
        %p363 = scmp.lt.s32.totalorder %s24, 0
        %s364 = scalar_select %p363, %s24, 0
        %s365 = sadd.s32 %s364, %s362
        %s366 = smul.addr %s365, 8
        %s367 = scalar_lea.vmem %s2, %s366
      $region52: #{decoder_forward.12} parent=39 // pred_fallthru
        _
      // Predicated region
      $region53: #{decoder_forward.12} parent=39 // pred_check
        %p368 = pneg %p141
      $region54: #{decoder_forward.12} parent=39 // pred_check_branch
        %370 = sbr.rel (%p368) target = $region56
      $region55: #{decoder_forward.12} parent=39 // pred_region
        %p371 = scmp.lt.s32.totalorder %s23, 1
        %s372 = scalar_select %p371, %s23, 1
        %p373 = scmp.lt.s32.totalorder %s25, 0
        %s374 = scalar_select %p373, %s25, 0
        %s375 = sadd.s32 %s374, %s372
        %s376 = scalar_lea.vmem %s3, %s375
      $region56: #{decoder_forward.12} parent=39 // pred_fallthru
        _
    $region40: #{decoder_forward.12} parent=5 // pred_fallthru
      _
    %p377 = scmp.le.s32.totalorder 1, %s16
    %p378 = scmp.lt.s32.totalorder %s16, 3
    %p379 = pnand %p377, %p378
    %p380 = pneg %p379
    // Predicated region
    $region57: #{decoder_forward.12} parent=5 // pred_check
      _
    $region58: #{decoder_forward.12} parent=5 // pred_check_branch
      %382 = sbr.rel (%p379) target = $region60
    $region59: #{decoder_forward.12} parent=5 // pred_region
      %s383 = ssub.s32 %s16, 1
      %p384 = scmp.lt.s32.totalorder %s26, 1
      %s385 = scalar_select %p384, %s26, 1
      %p386 = scmp.lt.s32.totalorder %s27, 0
      %s387 = scalar_select %p386, %s27, 0
      %s388 = sadd.s32 %s387, %s385
      %s389 = smul.addr %s388, 4
      %s390 = scalar_lea.vmem %s0, %s389
      %p391 = pneg %p63
      %p392 = pneg %p60
      %p393 = scmp.lt.s32.totalorder %s26, 1
      %s394 = scalar_select %p393, %s26, 1
      %p395 = scmp.lt.s32.totalorder %s28, 0
      %s396 = scalar_select %p395, %s28, 0
      %s397 = sadd.s32 %s396, %s394
      %s398 = smul.addr %s397, 4
      %s399 = scalar_lea.vmem %s1, %s398
      %p400 = pneg %p91
      %p401 = pneg %p88
      %p402 = scmp.lt.s32.totalorder %s26, 1
      %s403 = scalar_select %p402, %s26, 1
      %p404 = scmp.lt.s32.totalorder %s27, 0
      %s405 = scalar_select %p404, %s27, 0
      %s406 = sadd.s32 %s405, %s403
      %s407 = smul.addr %s406, 8
      %s408 = scalar_lea.vmem %s2, %s407
      %p409 = pneg %p119
      %p410 = pneg %p116
      %p411 = scmp.lt.s32.totalorder %s26, 1
      %s412 = scalar_select %p411, %s26, 1
      %p413 = scmp.lt.s32.totalorder %s28, 0
      %s414 = scalar_select %p413, %s28, 0
      %s415 = sadd.s32 %s414, %s412
      %s416 = scalar_lea.vmem %s3, %s415
      %p417 = pneg %p147
      %p418 = pneg %p144
      %p419 = pneg %p168
      %p420 = pneg %p165
      %p421 = pneg %p189
      %p422 = pneg %p186
      %p423 = pneg %p210
      %p424 = pneg %p207
      %p425 = pneg %p231
      %p426 = pneg %p228
      %p427 = pneg %p252
      %p428 = pneg %p249
      %p429 = pneg %p273
      %p430 = pneg %p270
      %p431 = pneg %p301
      %p432 = pneg %p298
      %p433 = scmp.lt.s32.totalorder %s26, 1
      %s434 = scalar_select %p433, %s26, 1
      %p435 = scmp.lt.s32.totalorder %s27, 0
      %s436 = scalar_select %p435, %s27, 0
      %s437 = sadd.s32 %s436, %s434
      %s438 = smul.addr %s437, 4
      %s439 = scalar_lea.vmem %s10, %s438
      %p440 = scmp.lt.s32.totalorder %s26, 1
      %s441 = scalar_select %p440, %s26, 1
      %p442 = scmp.lt.s32.totalorder %s27, 0
      %s443 = scalar_select %p442, %s27, 0
      %s444 = sadd.s32 %s443, %s441
      %s445 = smul.addr %s444, 4
      %s446 = scalar_lea.vmem %s0, %s445
      %p447 = scmp.lt.s32.totalorder %s26, 1
      %s448 = scalar_select %p447, %s26, 1
      %p449 = scmp.lt.s32.totalorder %s28, 0
      %s450 = scalar_select %p449, %s28, 0
      %s451 = sadd.s32 %s450, %s448
      %s452 = smul.addr %s451, 4
      %s453 = scalar_lea.vmem %s1, %s452
      %p454 = scmp.lt.s32.totalorder %s26, 1
      %s455 = scalar_select %p454, %s26, 1
      %p456 = scmp.lt.s32.totalorder %s27, 0
      %s457 = scalar_select %p456, %s27, 0
      %s458 = sadd.s32 %s457, %s455
      %s459 = smul.addr %s458, 8
      %s460 = scalar_lea.vmem %s2, %s459
      %p461 = scmp.lt.s32.totalorder %s26, 1
      %s462 = scalar_select %p461, %s26, 1
      %p463 = scmp.lt.s32.totalorder %s28, 0
      %s464 = scalar_select %p463, %s28, 0
      %s465 = sadd.s32 %s464, %s462
      %s466 = scalar_lea.vmem %s3, %s465
      %p467 = scmp.lt.s32.totalorder %s26, 1
      %s468 = scalar_select %p467, %s26, 1
      %p469 = scmp.lt.s32.totalorder %s27, 0
      %s470 = scalar_select %p469, %s27, 0
      %s471 = sadd.s32 %s470, %s468
      %s472 = smul.addr %s471, 4
      %s473 = scalar_lea.vmem %s10, %s472
      %p475 = scmp.eq.s32.totalorder %s28, 0
      // Predicated region
      $region61: #{decoder_forward.12} parent=59 // pred_check
        %p476 = pneg %p475
      $region62: #{decoder_forward.12} parent=59 // pred_check_branch
        %478 = sbr.rel (%p476) target = $region64
      $region63: #{decoder_forward.12} parent=59 // pred_region
        %v479 = vld [vmem:[%s446] sm:$0xf]
        %v480 = vld [vmem:[%s4] sm:$0xf]
        %v481 = vld [vmem:[%s4 + $0x4] sm:$0xf]
        %v482 = vld [vmem:[%s4 + $0x8] sm:$0xf]
        %v483 = vld [vmem:[%s4 + $0xc] sm:$0xf]
        %v484 = vld [vmem:[%s5] sm:$0x1]
        %v486 = vlaneseq
        %v487 = vshrl.u32 %v486, 7
        %v488 = vsub.s32 0, %v487
        %v489 = vrot.slane %v484, %v488
        %v495 = vunpack.c.l.b16 %v480
        %v496 = vunpack.c.l.b16 %v481
        %v497 = vunpack.c.l.b16 %v482
        %v498 = vunpack.c.l.b16 %v483
        %v499 = vpack.c.b16 %v496, %v495
        %v500 = vpack.c.b16 %v498, %v497
        %vm503 = vcmask 261120
        %v505 = vsel %vm503, %v479, 0
        %507 = vmatprep.subr.bf16.mxu0 0
        %508 = vmatpush1.bf16.msra.mxu0 %v499
        %509 = vmatprep.subr.bf16.mxu0 0
        %510 = vmatpush1.bf16.msra.mxu0 %v500
        %511 = vmatprep.subr.bf16.mxu0 0
        %512 = vmatpush1.bf16.msra.mxu0 0
        %513 = vmatprep.subr.bf16.mxu0 0
        %514 = vmatpush1.bf16.msra.mxu0 0
        %515 = vmatprep.subr.bf16.mxu0 0
        %516 = vmatpush1.bf16.msra.mxu0 0
        %517 = vmatprep.subr.bf16.mxu0 0
        %518 = vmatpush1.bf16.msra.mxu0 0
        %519 = vmatprep.subr.bf16.mxu0 0
        %520 = vmatpush1.bf16.msra.mxu0 0
        %521 = vmatprep.subr.bf16.mxu0 0
        %522 = vmatpush1.bf16.msra.mxu0 0
        %523 = vmatprep.subr.bf16.mxu0 0
        %524 = vmatpush1.bf16.msra.mxu0 0
        %525 = vmatprep.subr.bf16.mxu0 0
        %526 = vmatpush1.bf16.msra.mxu0 0
        %527 = vmatprep.subr.bf16.mxu0 0
        %528 = vmatpush1.bf16.msra.mxu0 0
        %529 = vmatprep.subr.bf16.mxu0 0
        %530 = vmatpush1.bf16.msra.mxu0 0
        %531 = vmatprep.subr.bf16.mxu0 0
        %532 = vmatpush1.bf16.msra.mxu0 0
        %533 = vmatprep.subr.bf16.mxu0 0
        %534 = vmatpush1.bf16.msra.mxu0 0
        %535 = vmatprep.subr.bf16.mxu0 0
        %536 = vmatpush1.bf16.msra.mxu0 0
        %537 = vmatprep.subr.bf16.mxu0 0
        %538 = vmatpush1.bf16.msra.mxu0 0
        %539 = vmatprep.mubr.bf16.mxu0 0
        %540 = vmatmul.mubr.bf16.gmra.mrb[0].mxu0 %v505
        %v541 = vpop.f32.mrb[0].mxu0
        %v542 = vadd.f32 %v489, %v541
        %v543 = vpop.f32.mrb[0].mxu0
        %v544 = vpop.f32.mrb[0].mxu0
        %v545 = vpop.f32.mrb[0].mxu0
        %546 = vdwg.mxu0
        %v547 = vmul.f32 %v542, 0.35355338
        %v548 = vpack.c.bf16 %v547, %v547
        %vm549 = vcmask 257024
        %550 = vst.msk [vmem:[#allocation2] sm:$0xf] %vm549, %v548
        %vm551 = vcmask 7168
        %552 = vst.msk [vmem:[#allocation3] sm:$0xff] %vm551, -1e+10
        %553 = vst.msk [vmem:[#allocation3 + $0x8] sm:$0xff] %vm551, -1e+10
        %554 = vst.msk [vmem:[#allocation3 + $0x10] sm:$0xff] %vm551, -1e+10
        %555 = vst.msk [vmem:[#allocation3 + $0x18] sm:$0xff] %vm551, -1e+10
        %556 = vst.msk [vmem:[#allocation4] sm:$0xff] %vm551, 0.0
        %557 = vst.msk [vmem:[#allocation4 + $0x8] sm:$0xff] %vm551, 0.0
        %558 = vst.msk [vmem:[#allocation4 + $0x10] sm:$0xff] %vm551, 0.0
        %559 = vst.msk [vmem:[#allocation4 + $0x18] sm:$0xff] %vm551, 0.0
        %vm560 = vcmask 64512
        %561 = vst.msk [vmem:[#allocation5] sm:$0xff] %vm560, 0.0
        %562 = vst.msk [vmem:[#allocation5 + $0x8] sm:$0xff] %vm560, 0.0
        %563 = vst.msk [vmem:[#allocation5 + $0x10] sm:$0xff] %vm560, 0.0
        %564 = vst.msk [vmem:[#allocation5 + $0x18] sm:$0xff] %vm560, 0.0
      $region64: #{decoder_forward.12} parent=59 // pred_fallthru
        _
      %v565 = vld [vmem:[%s453] sm:$0xf]
      %v566 = vld [vmem:[#allocation2] sm:$0xf]
      %v567 = vld [vmem:[%s460] sm:$0xff]
      %vm568 = vcmp.gt.f32.partialorder %v567, 0.5
      %v569 = vld [vmem:[%s466] sm:$0x1]
      %vm570 = vcmp.gt.f32.partialorder %v569, 0.5
      %v571 = vsel %vm568, 1, 0
      %572 = vset.pattern.permute.xlu0 0
      %573 = vperm.xlu0 %572, %v571
      %v574 = vpop.permute.xlu0 %573
      %vm575 = vcmp.eq.s32.totalorder %v574, 1
      %v576 = vsel %vm570, 1, 0
      %v577 = vlaneseq
      %v578 = vshrl.u32 %v577, 7
      %v579 = vsub.s32 0, %v578
      %v580 = vrot.slane %v576, %v579
      %vm581 = vcmp.eq.s32.totalorder %v580, 1
      %vm582 = vmand %vm575, %vm581
      %s583 = smul.u32 %s27, 8
      %v584 = vlaneseq
      %v585 = vshrl.u32 %v584, 7
      %v586 = vstv %s583
      %v587 = vadd.s32 %v586, %v585
      %s588 = smul.u32 %s28, 8
      %v589 = vlaneseq
      %v590 = vand.u32 %v589, 127
      %v591 = vstv %s588
      %v592 = vadd.s32 %v591, %v590
      %vm593 = vcmp.le.s32.totalorder %v592, %v587
      %vm594 = vmand %vm582, %vm593
      %vm595 = vcmask 64512
      %v597 = vsel %vm595, %v566, 0
      %v600 = vsel %vm595, %v565, 0
      %602 = vmatprep.subr.bf16.mxu0 0
      %603 = vmatpush1.bf16.xpose.msra.mxu0 %v600
      %604 = vmatprep.subr.bf16.mxu0 0
      %605 = vmatpush1.bf16.xpose.msra.mxu0 0
      %606 = vmatprep.subr.bf16.mxu0 0
      %607 = vmatpush1.bf16.xpose.msra.mxu0 0
      %608 = vmatprep.subr.bf16.mxu0 0
      %609 = vmatpush1.bf16.xpose.msra.mxu0 0
      %610 = vmatprep.subr.bf16.mxu0 0
      %611 = vmatpush1.bf16.xpose.msra.mxu0 0
      %612 = vmatprep.subr.bf16.mxu0 0
      %613 = vmatpush1.bf16.xpose.msra.mxu0 0
      %614 = vmatprep.subr.bf16.mxu0 0
      %615 = vmatpush1.bf16.xpose.msra.mxu0 0
      %616 = vmatprep.subr.bf16.mxu0 0
      %617 = vmatpush1.bf16.xpose.msra.mxu0 0
      %618 = vmatprep.subr.bf16.mxu0 0
      %619 = vmatpush1.bf16.xpose.msra.mxu0 0
      %620 = vmatprep.subr.bf16.mxu0 0
      %621 = vmatpush1.bf16.xpose.msra.mxu0 0
      %622 = vmatprep.subr.bf16.mxu0 0
      %623 = vmatpush1.bf16.xpose.msra.mxu0 0
      %624 = vmatprep.subr.bf16.mxu0 0
      %625 = vmatpush1.bf16.xpose.msra.mxu0 0
      %626 = vmatprep.subr.bf16.mxu0 0
      %627 = vmatpush1.bf16.xpose.msra.mxu0 0
      %628 = vmatprep.subr.bf16.mxu0 0
      %629 = vmatpush1.bf16.xpose.msra.mxu0 0
      %630 = vmatprep.subr.bf16.mxu0 0
      %631 = vmatpush1.bf16.xpose.msra.mxu0 0
      %632 = vmatprep.subr.bf16.mxu0 0
      %633 = vmatpush1.bf16.xpose.msra.mxu0 0
      %634 = vmatprep.mubr.bf16.mxu0 0
      %635 = vmatmul.mubr.bf16.gmra.mrb[0].mxu0 %v597
      %v636 = vpop.f32.mrb[0].mxu0
      %v637 = vadd.f32 0.0, %v636
      %v638 = vpop.f32.mrb[0].mxu0
      %v639 = vpop.f32.mrb[0].mxu0
      %v640 = vpop.f32.mrb[0].mxu0
      %641 = vdwg.mxu0
      %v642 = vsel %vm594, %v637, -1e+10
      %v643 = vld [vmem:[#allocation3] sm:$0xff]
      %v644 = vsel %vm595, %v642, -inf
      %645 = vmax.xlane.f32.xlu0 %v644
      %v646 = vpop.xlane.xlu0 %645
      %v647 = vmax.f32 %v643, %v646
      %v648 = vsub.f32 %v643, %v647
      %v649 = vmul.f32 %v648, 1.442695
      %v650 = vpow.pop %v649
      %652 = vset.pattern.permute.xlu0 0
      %653 = vperm.xlu0 %652, %v647
      %v654 = vpop.permute.xlu0 %653
      %v656 = vsub.f32 %v642, %v654
      %v657 = vmul.f32 %v656, 1.442695
      %v658 = vpow.pop %v657
      %v659 = vld [vmem:[#allocation4] sm:$0xff]
      %v660 = vmul.f32 %v650, %v659
      %v661 = vsel %vm595, %v658, 0.0
      %662 = vadd.xlane.f32.xlu0 %v661
      %v663 = vpop.xlane.xlu0 %662
      %v664 = vadd.f32 %v660, %v663
      %vm665 = vcmask 7168
      %666 = vst.msk [vmem:[#allocation4] sm:$0xff] %vm665, %v664
      %v667 = vld [vmem:[#allocation5] sm:$0xff]
      %669 = vset.pattern.permute.xlu0 0
      %670 = vperm.xlu0 %669, %v650
      %v671 = vpop.permute.xlu0 %670
      %v673 = vmul.f32 %v671, %v667
      %v674 = vpack.c.bf16 %v658, %v658
      %v676 = vunpack.c.l.b16 %v565
      %v677 = vpack.c.b16 %v676, %v676
      %678 = vrot.lane.b32.xlu0 %v677, 96
      %v679 = vpop.permute.xlu0 %678
      %v681 = vsel %vm595, %v674, 0
      %vm683 = vcmask 1043456
      %v685 = vsel %vm683, %v679, 0
      %687 = vmatprep.subr.bf16.mxu0 0
      %688 = vmatpush1.bf16.msra.mxu0 %v685
      %689 = vmatprep.subr.bf16.mxu0 0
      %690 = vmatpush1.bf16.msra.mxu0 0
      %691 = vmatprep.subr.bf16.mxu0 0
      %692 = vmatpush1.bf16.msra.mxu0 0
      %693 = vmatprep.subr.bf16.mxu0 0
      %694 = vmatpush1.bf16.msra.mxu0 0
      %695 = vmatprep.subr.bf16.mxu0 0
      %696 = vmatpush1.bf16.msra.mxu0 0
      %697 = vmatprep.subr.bf16.mxu0 0
      %698 = vmatpush1.bf16.msra.mxu0 0
      %699 = vmatprep.subr.bf16.mxu0 0
      %700 = vmatpush1.bf16.msra.mxu0 0
      %701 = vmatprep.subr.bf16.mxu0 0
      %702 = vmatpush1.bf16.msra.mxu0 0
      %703 = vmatprep.subr.bf16.mxu0 0
      %704 = vmatpush1.bf16.msra.mxu0 0
      %705 = vmatprep.subr.bf16.mxu0 0
      %706 = vmatpush1.bf16.msra.mxu0 0
      %707 = vmatprep.subr.bf16.mxu0 0
      %708 = vmatpush1.bf16.msra.mxu0 0
      %709 = vmatprep.subr.bf16.mxu0 0
      %710 = vmatpush1.bf16.msra.mxu0 0
      %711 = vmatprep.subr.bf16.mxu0 0
      %712 = vmatpush1.bf16.msra.mxu0 0
      %713 = vmatprep.subr.bf16.mxu0 0
      %714 = vmatpush1.bf16.msra.mxu0 0
      %715 = vmatprep.subr.bf16.mxu0 0
      %716 = vmatpush1.bf16.msra.mxu0 0
      %717 = vmatprep.subr.bf16.mxu0 0
      %718 = vmatpush1.bf16.msra.mxu0 0
      %719 = vmatprep.mubr.bf16.mxu0 0
      %720 = vmatmul.mubr.bf16.gmra.mrb[0].mxu0 %v681
      %v721 = vpop.f32.mrb[0].mxu0
      %v722 = vadd.f32 0.0, %v721
      %v723 = vpop.f32.mrb[0].mxu0
      %v724 = vpop.f32.mrb[0].mxu0
      %v725 = vpop.f32.mrb[0].mxu0
      %726 = vdwg.mxu0
      %v727 = vadd.f32 %v673, %v722
      %728 = vst.msk [vmem:[#allocation5] sm:$0xff] %vm595, %v727
      %729 = vst.msk [vmem:[#allocation3] sm:$0xff] %vm665, %v647
      %v731 = vunpack.c.l.b16 %v566
      %v732 = vpack.c.b16 %v731, %v731
      %733 = vrot.lane.b32.xlu0 %v732, 120
      %v734 = vpop.permute.xlu0 %733
      %735 = vrot.lane.b32.xlu0 %v677, 120
      %v736 = vpop.permute.xlu0 %735
      %v738 = vsel %vm595, %v734, 0
      %v741 = vsel %vm595, %v736, 0
      %743 = vmatprep.subr.bf16.mxu0 0
      %744 = vmatpush1.bf16.xpose.msra.mxu0 %v741
      %745 = vmatprep.subr.bf16.mxu0 0
      %746 = vmatpush1.bf16.xpose.msra.mxu0 0
      %747 = vmatprep.subr.bf16.mxu0 0
      %748 = vmatpush1.bf16.xpose.msra.mxu0 0
      %749 = vmatprep.subr.bf16.mxu0 0
      %750 = vmatpush1.bf16.xpose.msra.mxu0 0
      %751 = vmatprep.subr.bf16.mxu0 0
      %752 = vmatpush1.bf16.xpose.msra.mxu0 0
      %753 = vmatprep.subr.bf16.mxu0 0
      %754 = vmatpush1.bf16.xpose.msra.mxu0 0
      %755 = vmatprep.subr.bf16.mxu0 0
      %756 = vmatpush1.bf16.xpose.msra.mxu0 0
      %757 = vmatprep.subr.bf16.mxu0 0
      %758 = vmatpush1.bf16.xpose.msra.mxu0 0
      %759 = vmatprep.subr.bf16.mxu0 0
      %760 = vmatpush1.bf16.xpose.msra.mxu0 0
      %761 = vmatprep.subr.bf16.mxu0 0
      %762 = vmatpush1.bf16.xpose.msra.mxu0 0
      %763 = vmatprep.subr.bf16.mxu0 0
      %764 = vmatpush1.bf16.xpose.msra.mxu0 0
      %765 = vmatprep.subr.bf16.mxu0 0
      %766 = vmatpush1.bf16.xpose.msra.mxu0 0
      %767 = vmatprep.subr.bf16.mxu0 0
      %768 = vmatpush1.bf16.xpose.msra.mxu0 0
      %769 = vmatprep.subr.bf16.mxu0 0
      %770 = vmatpush1.bf16.xpose.msra.mxu0 0
      %771 = vmatprep.subr.bf16.mxu0 0
      %772 = vmatpush1.bf16.xpose.msra.mxu0 0
      %773 = vmatprep.subr.bf16.mxu0 0
      %774 = vmatpush1.bf16.xpose.msra.mxu0 0
      %775 = vmatprep.mubr.bf16.mxu0 0
      %776 = vmatmul.mubr.bf16.gmra.mrb[0].mxu0 %v738
      %v777 = vpop.f32.mrb[0].mxu0
      %v778 = vadd.f32 0.0, %v777
      %v779 = vpop.f32.mrb[0].mxu0
      %v780 = vpop.f32.mrb[0].mxu0
      %v781 = vpop.f32.mrb[0].mxu0
      %782 = vdwg.mxu0
      %v783 = vsel %vm594, %v778, -1e+10
      %s784 = scalar_lea.vmem [#allocation3], 8
      %v785 = vld [vmem:[%s784] sm:$0xff]
      %v786 = vsel %vm595, %v783, -inf
      %787 = vmax.xlane.f32.xlu0 %v786
      %v788 = vpop.xlane.xlu0 %787
      %v789 = vmax.f32 %v785, %v788
      %v790 = vsub.f32 %v785, %v789
      %v791 = vmul.f32 %v790, 1.442695
      %v792 = vpow.pop %v791
      %794 = vset.pattern.permute.xlu0 0
      %795 = vperm.xlu0 %794, %v789
      %v796 = vpop.permute.xlu0 %795
      %v798 = vsub.f32 %v783, %v796
      %v799 = vmul.f32 %v798, 1.442695
      %v800 = vpow.pop %v799
      %s801 = scalar_lea.vmem [#allocation4], 8
      %v802 = vld [vmem:[%s801] sm:$0xff]
      %v803 = vmul.f32 %v792, %v802
      %v804 = vsel %vm595, %v800, 0.0
      %805 = vadd.xlane.f32.xlu0 %v804
      %v806 = vpop.xlane.xlu0 %805
      %v807 = vadd.f32 %v803, %v806
      %808 = vst.msk [vmem:[%s801] sm:$0xff] %vm665, %v807
      %s809 = scalar_lea.vmem [#allocation5], 8
      %v810 = vld [vmem:[%s809] sm:$0xff]
      %812 = vset.pattern.permute.xlu0 0
      %813 = vperm.xlu0 %812, %v792
      %v814 = vpop.permute.xlu0 %813
      %v816 = vmul.f32 %v814, %v810
      %v817 = vpack.c.bf16 %v800, %v800
      %818 = vrot.lane.b32.xlu0 %v677, 88
      %v819 = vpop.permute.xlu0 %818
      %v821 = vsel %vm595, %v817, 0
      %v824 = vsel %vm683, %v819, 0
      %826 = vmatprep.subr.bf16.mxu0 0
      %827 = vmatpush1.bf16.msra.mxu0 %v824
      %828 = vmatprep.subr.bf16.mxu0 0
      %829 = vmatpush1.bf16.msra.mxu0 0
      %830 = vmatprep.subr.bf16.mxu0 0
      %831 = vmatpush1.bf16.msra.mxu0 0
      %832 = vmatprep.subr.bf16.mxu0 0
      %833 = vmatpush1.bf16.msra.mxu0 0
      %834 = vmatprep.subr.bf16.mxu0 0
      %835 = vmatpush1.bf16.msra.mxu0 0
      %836 = vmatprep.subr.bf16.mxu0 0
      %837 = vmatpush1.bf16.msra.mxu0 0
      %838 = vmatprep.subr.bf16.mxu0 0
      %839 = vmatpush1.bf16.msra.mxu0 0
      %840 = vmatprep.subr.bf16.mxu0 0
      %841 = vmatpush1.bf16.msra.mxu0 0
      %842 = vmatprep.subr.bf16.mxu0 0
      %843 = vmatpush1.bf16.msra.mxu0 0
      %844 = vmatprep.subr.bf16.mxu0 0
      %845 = vmatpush1.bf16.msra.mxu0 0
      %846 = vmatprep.subr.bf16.mxu0 0
      %847 = vmatpush1.bf16.msra.mxu0 0
      %848 = vmatprep.subr.bf16.mxu0 0
      %849 = vmatpush1.bf16.msra.mxu0 0
      %850 = vmatprep.subr.bf16.mxu0 0
      %851 = vmatpush1.bf16.msra.mxu0 0
      %852 = vmatprep.subr.bf16.mxu0 0
      %853 = vmatpush1.bf16.msra.mxu0 0
      %854 = vmatprep.subr.bf16.mxu0 0
      %855 = vmatpush1.bf16.msra.mxu0 0
      %856 = vmatprep.subr.bf16.mxu0 0
      %857 = vmatpush1.bf16.msra.mxu0 0
      %858 = vmatprep.mubr.bf16.mxu0 0
      %859 = vmatmul.mubr.bf16.gmra.mrb[0].mxu0 %v821
      %v860 = vpop.f32.mrb[0].mxu0
      %v861 = vadd.f32 0.0, %v860
      %v862 = vpop.f32.mrb[0].mxu0
      %v863 = vpop.f32.mrb[0].mxu0
      %v864 = vpop.f32.mrb[0].mxu0
      %865 = vdwg.mxu0
      %v866 = vadd.f32 %v816, %v861
      %867 = vst.msk [vmem:[%s809] sm:$0xff] %vm595, %v866
      %868 = vst.msk [vmem:[%s784] sm:$0xff] %vm665, %v789
      %869 = vrot.lane.b32.xlu0 %v732, 112
      %v870 = vpop.permute.xlu0 %869
      %871 = vrot.lane.b32.xlu0 %v677, 112
      %v872 = vpop.permute.xlu0 %871
      %v874 = vsel %vm595, %v870, 0
      %v877 = vsel %vm595, %v872, 0
      %879 = vmatprep.subr.bf16.mxu0 0
      %880 = vmatpush1.bf16.xpose.msra.mxu0 %v877
      %881 = vmatprep.subr.bf16.mxu0 0
      %882 = vmatpush1.bf16.xpose.msra.mxu0 0
      %883 = vmatprep.subr.bf16.mxu0 0
      %884 = vmatpush1.bf16.xpose.msra.mxu0 0
      %885 = vmatprep.subr.bf16.mxu0 0
      %886 = vmatpush1.bf16.xpose.msra.mxu0 0
      %887 = vmatprep.subr.bf16.mxu0 0
      %888 = vmatpush1.bf16.xpose.msra.mxu0 0
      %889 = vmatprep.subr.bf16.mxu0 0
      %890 = vmatpush1.bf16.xpose.msra.mxu0 0
      %891 = vmatprep.subr.bf16.mxu0 0
      %892 = vmatpush1.bf16.xpose.msra.mxu0 0
      %893 = vmatprep.subr.bf16.mxu0 0
      %894 = vmatpush1.bf16.xpose.msra.mxu0 0
      %895 = vmatprep.subr.bf16.mxu0 0
      %896 = vmatpush1.bf16.xpose.msra.mxu0 0
      %897 = vmatprep.subr.bf16.mxu0 0
      %898 = vmatpush1.bf16.xpose.msra.mxu0 0
      %899 = vmatprep.subr.bf16.mxu0 0
      %900 = vmatpush1.bf16.xpose.msra.mxu0 0
      %901 = vmatprep.subr.bf16.mxu0 0
      %902 = vmatpush1.bf16.xpose.msra.mxu0 0
      %903 = vmatprep.subr.bf16.mxu0 0
      %904 = vmatpush1.bf16.xpose.msra.mxu0 0
      %905 = vmatprep.subr.bf16.mxu0 0
      %906 = vmatpush1.bf16.xpose.msra.mxu0 0
      %907 = vmatprep.subr.bf16.mxu0 0
      %908 = vmatpush1.bf16.xpose.msra.mxu0 0
      %909 = vmatprep.subr.bf16.mxu0 0
      %910 = vmatpush1.bf16.xpose.msra.mxu0 0
      %911 = vmatprep.mubr.bf16.mxu0 0
      %912 = vmatmul.mubr.bf16.gmra.mrb[0].mxu0 %v874
      %v913 = vpop.f32.mrb[0].mxu0
      %v914 = vadd.f32 0.0, %v913
      %v915 = vpop.f32.mrb[0].mxu0
      %v916 = vpop.f32.mrb[0].mxu0
      %v917 = vpop.f32.mrb[0].mxu0
      %918 = vdwg.mxu0
      %v919 = vsel %vm594, %v914, -1e+10
      %s920 = scalar_lea.vmem [#allocation3], 16
      %v921 = vld [vmem:[%s920] sm:$0xff]
      %v922 = vsel %vm595, %v919, -inf
      %923 = vmax.xlane.f32.xlu0 %v922
      %v924 = vpop.xlane.xlu0 %923
      %v925 = vmax.f32 %v921, %v924
      %v926 = vsub.f32 %v921, %v925
      %v927 = vmul.f32 %v926, 1.442695
      %v928 = vpow.pop %v927
      %930 = vset.pattern.permute.xlu0 0
      %931 = vperm.xlu0 %930, %v925
      %v932 = vpop.permute.xlu0 %931
      %v934 = vsub.f32 %v919, %v932
      %v935 = vmul.f32 %v934, 1.442695
      %v936 = vpow.pop %v935
      %s937 = scalar_lea.vmem [#allocation4], 16
      %v938 = vld [vmem:[%s937] sm:$0xff]
      %v939 = vmul.f32 %v928, %v938
      %v940 = vsel %vm595, %v936, 0.0
      %941 = vadd.xlane.f32.xlu0 %v940
      %v942 = vpop.xlane.xlu0 %941
      %v943 = vadd.f32 %v939, %v942
      %944 = vst.msk [vmem:[%s937] sm:$0xff] %vm665, %v943
      %s945 = scalar_lea.vmem [#allocation5], 16
      %v946 = vld [vmem:[%s945] sm:$0xff]
      %948 = vset.pattern.permute.xlu0 0
      %949 = vperm.xlu0 %948, %v928
      %v950 = vpop.permute.xlu0 %949
      %v952 = vmul.f32 %v950, %v946
      %v953 = vpack.c.bf16 %v936, %v936
      %954 = vrot.lane.b32.xlu0 %v677, 80
      %v955 = vpop.permute.xlu0 %954
      %v957 = vsel %vm595, %v953, 0
      %v960 = vsel %vm683, %v955, 0
      %962 = vmatprep.subr.bf16.mxu0 0
      %963 = vmatpush1.bf16.msra.mxu0 %v960
      %964 = vmatprep.subr.bf16.mxu0 0
      %965 = vmatpush1.bf16.msra.mxu0 0
      %966 = vmatprep.subr.bf16.mxu0 0
      %967 = vmatpush1.bf16.msra.mxu0 0
      %968 = vmatprep.subr.bf16.mxu0 0
      %969 = vmatpush1.bf16.msra.mxu0 0
      %970 = vmatprep.subr.bf16.mxu0 0
      %971 = vmatpush1.bf16.msra.mxu0 0
      %972 = vmatprep.subr.bf16.mxu0 0
      %973 = vmatpush1.bf16.msra.mxu0 0
      %974 = vmatprep.subr.bf16.mxu0 0
      %975 = vmatpush1.bf16.msra.mxu0 0
      %976 = vmatprep.subr.bf16.mxu0 0
      %977 = vmatpush1.bf16.msra.mxu0 0
      %978 = vmatprep.subr.bf16.mxu0 0
      %979 = vmatpush1.bf16.msra.mxu0 0
      %980 = vmatprep.subr.bf16.mxu0 0
      %981 = vmatpush1.bf16.msra.mxu0 0
      %982 = vmatprep.subr.bf16.mxu0 0
      %983 = vmatpush1.bf16.msra.mxu0 0
      %984 = vmatprep.subr.bf16.mxu0 0
      %985 = vmatpush1.bf16.msra.mxu0 0
      %986 = vmatprep.subr.bf16.mxu0 0
      %987 = vmatpush1.bf16.msra.mxu0 0
      %988 = vmatprep.subr.bf16.mxu0 0
      %989 = vmatpush1.bf16.msra.mxu0 0
      %990 = vmatprep.subr.bf16.mxu0 0
      %991 = vmatpush1.bf16.msra.mxu0 0
      %992 = vmatprep.subr.bf16.mxu0 0
      %993 = vmatpush1.bf16.msra.mxu0 0
      %994 = vmatprep.mubr.bf16.mxu0 0
      %995 = vmatmul.mubr.bf16.gmra.mrb[0].mxu0 %v957
      %v996 = vpop.f32.mrb[0].mxu0
      %v997 = vadd.f32 0.0, %v996
      %v998 = vpop.f32.mrb[0].mxu0
      %v999 = vpop.f32.mrb[0].mxu0
      %v1000 = vpop.f32.mrb[0].mxu0
      %1001 = vdwg.mxu0
      %v1002 = vadd.f32 %v952, %v997
      %1003 = vst.msk [vmem:[%s945] sm:$0xff] %vm595, %v1002
      %1004 = vst.msk [vmem:[%s920] sm:$0xff] %vm665, %v925
      %1005 = vrot.lane.b32.xlu0 %v732, 104
      %v1006 = vpop.permute.xlu0 %1005
      %1007 = vrot.lane.b32.xlu0 %v677, 104
      %v1008 = vpop.permute.xlu0 %1007
      %v1010 = vsel %vm595, %v1006, 0
      %v1013 = vsel %vm595, %v1008, 0
      %1015 = vmatprep.subr.bf16.mxu0 0
      %1016 = vmatpush1.bf16.xpose.msra.mxu0 %v1013
      %1017 = vmatprep.subr.bf16.mxu0 0
      %1018 = vmatpush1.bf16.xpose.msra.mxu0 0
      %1019 = vmatprep.subr.bf16.mxu0 0
      %1020 = vmatpush1.bf16.xpose.msra.mxu0 0
      %1021 = vmatprep.subr.bf16.mxu0 0
      %1022 = vmatpush1.bf16.xpose.msra.mxu0 0
      %1023 = vmatprep.subr.bf16.mxu0 0
      %1024 = vmatpush1.bf16.xpose.msra.mxu0 0
      %1025 = vmatprep.subr.bf16.mxu0 0
      %1026 = vmatpush1.bf16.xpose.msra.mxu0 0
      %1027 = vmatprep.subr.bf16.mxu0 0
      %1028 = vmatpush1.bf16.xpose.msra.mxu0 0
      %1029 = vmatprep.subr.bf16.mxu0 0
      %1030 = vmatpush1.bf16.xpose.msra.mxu0 0
      %1031 = vmatprep.subr.bf16.mxu0 0
      %1032 = vmatpush1.bf16.xpose.msra.mxu0 0
      %1033 = vmatprep.subr.bf16.mxu0 0
      %1034 = vmatpush1.bf16.xpose.msra.mxu0 0
      %1035 = vmatprep.subr.bf16.mxu0 0
      %1036 = vmatpush1.bf16.xpose.msra.mxu0 0
      %1037 = vmatprep.subr.bf16.mxu0 0
      %1038 = vmatpush1.bf16.xpose.msra.mxu0 0
      %1039 = vmatprep.subr.bf16.mxu0 0
      %1040 = vmatpush1.bf16.xpose.msra.mxu0 0
      %1041 = vmatprep.subr.bf16.mxu0 0
      %1042 = vmatpush1.bf16.xpose.msra.mxu0 0
      %1043 = vmatprep.subr.bf16.mxu0 0
      %1044 = vmatpush1.bf16.xpose.msra.mxu0 0
      %1045 = vmatprep.subr.bf16.mxu0 0
      %1046 = vmatpush1.bf16.xpose.msra.mxu0 0
      %1047 = vmatprep.mubr.bf16.mxu0 0
      %1048 = vmatmul.mubr.bf16.gmra.mrb[0].mxu0 %v1010
      %v1049 = vpop.f32.mrb[0].mxu0
      %v1050 = vadd.f32 0.0, %v1049
      %v1051 = vpop.f32.mrb[0].mxu0
      %v1052 = vpop.f32.mrb[0].mxu0
      %v1053 = vpop.f32.mrb[0].mxu0
      %1054 = vdwg.mxu0
      %v1055 = vsel %vm594, %v1050, -1e+10
      %s1056 = scalar_lea.vmem [#allocation3], 24
      %v1057 = vld [vmem:[%s1056] sm:$0xff]
      %v1058 = vsel %vm595, %v1055, -inf
      %1059 = vmax.xlane.f32.xlu0 %v1058
      %v1060 = vpop.xlane.xlu0 %1059
      %v1061 = vmax.f32 %v1057, %v1060
      %v1062 = vsub.f32 %v1057, %v1061
      %v1063 = vmul.f32 %v1062, 1.442695
      %v1064 = vpow.pop %v1063
      %1066 = vset.pattern.permute.xlu0 0
      %1067 = vperm.xlu0 %1066, %v1061
      %v1068 = vpop.permute.xlu0 %1067
      %v1070 = vsub.f32 %v1055, %v1068
      %v1071 = vmul.f32 %v1070, 1.442695
      %v1072 = vpow.pop %v1071
      %s1073 = scalar_lea.vmem [#allocation4], 24
      %v1074 = vld [vmem:[%s1073] sm:$0xff]
      %v1075 = vmul.f32 %v1064, %v1074
      %v1076 = vsel %vm595, %v1072, 0.0
      %1077 = vadd.xlane.f32.xlu0 %v1076
      %v1078 = vpop.xlane.xlu0 %1077
      %v1079 = vadd.f32 %v1075, %v1078
      %1080 = vst.msk [vmem:[%s1073] sm:$0xff] %vm665, %v1079
      %s1081 = scalar_lea.vmem [#allocation5], 24
      %v1082 = vld [vmem:[%s1081] sm:$0xff]
      %1084 = vset.pattern.permute.xlu0 0
      %1085 = vperm.xlu0 %1084, %v1064
      %v1086 = vpop.permute.xlu0 %1085
      %v1088 = vmul.f32 %v1086, %v1082
      %v1089 = vpack.c.bf16 %v1072, %v1072
      %1090 = vrot.lane.b32.xlu0 %v677, 72
      %v1091 = vpop.permute.xlu0 %1090
      %v1093 = vsel %vm595, %v1089, 0
      %v1096 = vsel %vm683, %v1091, 0
      %1098 = vmatprep.subr.bf16.mxu0 0
      %1099 = vmatpush1.bf16.msra.mxu0 %v1096
      %1100 = vmatprep.subr.bf16.mxu0 0
      %1101 = vmatpush1.bf16.msra.mxu0 0
      %1102 = vmatprep.subr.bf16.mxu0 0
      %1103 = vmatpush1.bf16.msra.mxu0 0
      %1104 = vmatprep.subr.bf16.mxu0 0
      %1105 = vmatpush1.bf16.msra.mxu0 0
      %1106 = vmatprep.subr.bf16.mxu0 0
      %1107 = vmatpush1.bf16.msra.mxu0 0
      %1108 = vmatprep.subr.bf16.mxu0 0
      %1109 = vmatpush1.bf16.msra.mxu0 0
      %1110 = vmatprep.subr.bf16.mxu0 0
      %1111 = vmatpush1.bf16.msra.mxu0 0
      %1112 = vmatprep.subr.bf16.mxu0 0
      %1113 = vmatpush1.bf16.msra.mxu0 0
      %1114 = vmatprep.subr.bf16.mxu0 0
      %1115 = vmatpush1.bf16.msra.mxu0 0
      %1116 = vmatprep.subr.bf16.mxu0 0
      %1117 = vmatpush1.bf16.msra.mxu0 0
      %1118 = vmatprep.subr.bf16.mxu0 0
      %1119 = vmatpush1.bf16.msra.mxu0 0
      %1120 = vmatprep.subr.bf16.mxu0 0
      %1121 = vmatpush1.bf16.msra.mxu0 0
      %1122 = vmatprep.subr.bf16.mxu0 0
      %1123 = vmatpush1.bf16.msra.mxu0 0
      %1124 = vmatprep.subr.bf16.mxu0 0
      %1125 = vmatpush1.bf16.msra.mxu0 0
      %1126 = vmatprep.subr.bf16.mxu0 0
      %1127 = vmatpush1.bf16.msra.mxu0 0
      %1128 = vmatprep.subr.bf16.mxu0 0
      %1129 = vmatpush1.bf16.msra.mxu0 0
      %1130 = vmatprep.mubr.bf16.mxu0 0
      %1131 = vmatmul.mubr.bf16.gmra.mrb[0].mxu0 %v1093
      %v1132 = vpop.f32.mrb[0].mxu0
      %v1133 = vadd.f32 0.0, %v1132
      %v1134 = vpop.f32.mrb[0].mxu0
      %v1135 = vpop.f32.mrb[0].mxu0
      %v1136 = vpop.f32.mrb[0].mxu0
      %1137 = vdwg.mxu0
      %v1138 = vadd.f32 %v1088, %v1133
      %1139 = vst.msk [vmem:[%s1081] sm:$0xff] %vm595, %v1138
      %1140 = vst.msk [vmem:[%s1056] sm:$0xff] %vm665, %v1061
      // Predicated region
      $region65: #{decoder_forward.12} parent=59 // pred_check
        %p1141 = pneg %p475
      $region66: #{decoder_forward.12} parent=59 // pred_check_branch
        %1143 = sbr.rel (%p1141) target = $region68
      $region67: #{decoder_forward.12} parent=59 // pred_region
        %v1144 = vld [vmem:[%s6] sm:$0xf]
        %v1145 = vld [vmem:[%s6 + $0x4] sm:$0xf]
        %v1146 = vld [vmem:[%s6 + $0x8] sm:$0xf]
        %v1147 = vld [vmem:[%s6 + $0xc] sm:$0xf]
        %v1148 = vld [vmem:[#allocation5] sm:$0xff]
        %v1149 = vld [vmem:[#allocation4] sm:$0xff]
        %v1150 = vrcp.pop %v1149
        %1152 = vset.pattern.permute.xlu0 0
        %1153 = vperm.xlu0 %1152, %v1150
        %v1154 = vpop.permute.xlu0 %1153
        %v1156 = vmul.f32 %v1148, %v1154
        %v1157 = vpack.c.bf16 %v1156, %v1156
        %v1158 = vld [vmem:[%s809] sm:$0xff]
        %v1159 = vld [vmem:[%s801] sm:$0xff]
        %v1160 = vrcp.pop %v1159
        %1162 = vset.pattern.permute.xlu0 0
        %1163 = vperm.xlu0 %1162, %v1160
        %v1164 = vpop.permute.xlu0 %1163
        %v1166 = vmul.f32 %v1158, %v1164
        %v1167 = vpack.c.bf16 %v1166, %v1166
        %v1169 = vsel %vm595, %v1167, 0
        %v1172 = vsel %vm683, %v1145, 0
        %1174 = vmatprep.subr.bf16.mxu0 0
        %1175 = vmatpush1.bf16.msra.mxu0 %v1172
        %1176 = vmatprep.subr.bf16.mxu0 0
        %1177 = vmatpush1.bf16.msra.mxu0 0
        %1178 = vmatprep.subr.bf16.mxu0 0
        %1179 = vmatpush1.bf16.msra.mxu0 0
        %1180 = vmatprep.subr.bf16.mxu0 0
        %1181 = vmatpush1.bf16.msra.mxu0 0
        %1182 = vmatprep.subr.bf16.mxu0 0
        %1183 = vmatpush1.bf16.msra.mxu0 0
        %1184 = vmatprep.subr.bf16.mxu0 0
        %1185 = vmatpush1.bf16.msra.mxu0 0
        %1186 = vmatprep.subr.bf16.mxu0 0
        %1187 = vmatpush1.bf16.msra.mxu0 0
        %1188 = vmatprep.subr.bf16.mxu0 0
        %1189 = vmatpush1.bf16.msra.mxu0 0
        %1190 = vmatprep.subr.bf16.mxu0 0
        %1191 = vmatpush1.bf16.msra.mxu0 0
        %1192 = vmatprep.subr.bf16.mxu0 0
        %1193 = vmatpush1.bf16.msra.mxu0 0
        %1194 = vmatprep.subr.bf16.mxu0 0
        %1195 = vmatpush1.bf16.msra.mxu0 0
        %1196 = vmatprep.subr.bf16.mxu0 0
        %1197 = vmatpush1.bf16.msra.mxu0 0
        %1198 = vmatprep.subr.bf16.mxu0 0
        %1199 = vmatpush1.bf16.msra.mxu0 0
        %1200 = vmatprep.subr.bf16.mxu0 0
        %1201 = vmatpush1.bf16.msra.mxu0 0
        %1202 = vmatprep.subr.bf16.mxu0 0
        %1203 = vmatpush1.bf16.msra.mxu0 0
        %1204 = vmatprep.subr.bf16.mxu0 0
        %1205 = vmatpush1.bf16.msra.mxu0 0
        %1206 = vmatprep.mubr.bf16.mxu0 0
        %1207 = vmatmul.mubr.bf16.gmra.mrb[0].mxu0 %v1169
        %v1208 = vpop.f32.mrb[0].mxu0
        %v1209 = vadd.f32 0.0, %v1208
        %v1210 = vpop.f32.mrb[0].mxu0
        %v1211 = vpop.f32.mrb[0].mxu0
        %v1212 = vpop.f32.mrb[0].mxu0
        %1213 = vdwg.mxu0
        %v1215 = vsel %vm595, %v1157, 0
        %v1218 = vsel %vm683, %v1144, 0
        %1220 = vmatprep.subr.bf16.mxu0 0
        %1221 = vmatpush1.bf16.msra.mxu0 %v1218
        %1222 = vmatprep.subr.bf16.mxu0 0
        %1223 = vmatpush1.bf16.msra.mxu0 0
        %1224 = vmatprep.subr.bf16.mxu0 0
        %1225 = vmatpush1.bf16.msra.mxu0 0
        %1226 = vmatprep.subr.bf16.mxu0 0
        %1227 = vmatpush1.bf16.msra.mxu0 0
        %1228 = vmatprep.subr.bf16.mxu0 0
        %1229 = vmatpush1.bf16.msra.mxu0 0
        %1230 = vmatprep.subr.bf16.mxu0 0
        %1231 = vmatpush1.bf16.msra.mxu0 0
        %1232 = vmatprep.subr.bf16.mxu0 0
        %1233 = vmatpush1.bf16.msra.mxu0 0
        %1234 = vmatprep.subr.bf16.mxu0 0
        %1235 = vmatpush1.bf16.msra.mxu0 0
        %1236 = vmatprep.subr.bf16.mxu0 0
        %1237 = vmatpush1.bf16.msra.mxu0 0
        %1238 = vmatprep.subr.bf16.mxu0 0
        %1239 = vmatpush1.bf16.msra.mxu0 0
        %1240 = vmatprep.subr.bf16.mxu0 0
        %1241 = vmatpush1.bf16.msra.mxu0 0
        %1242 = vmatprep.subr.bf16.mxu0 0
        %1243 = vmatpush1.bf16.msra.mxu0 0
        %1244 = vmatprep.subr.bf16.mxu0 0
        %1245 = vmatpush1.bf16.msra.mxu0 0
        %1246 = vmatprep.subr.bf16.mxu0 0
        %1247 = vmatpush1.bf16.msra.mxu0 0
        %1248 = vmatprep.subr.bf16.mxu0 0
        %1249 = vmatpush1.bf16.msra.mxu0 0
        %1250 = vmatprep.subr.bf16.mxu0 0
        %1251 = vmatpush1.bf16.msra.mxu0 0
        %1252 = vmatprep.mubr.bf16.mxu0 0
        %1253 = vmatmul.mubr.bf16.gmra.mrb[0].mxu0 %v1215
        %v1254 = vpop.f32.mrb[0].mxu0
        %v1255 = vadd.f32 %v1209, %v1254
        %v1256 = vpop.f32.mrb[0].mxu0
        %v1257 = vpop.f32.mrb[0].mxu0
        %v1258 = vpop.f32.mrb[0].mxu0
        %1259 = vdwg.mxu0
        %v1260 = vld [vmem:[%s945] sm:$0xff]
        %v1261 = vld [vmem:[%s937] sm:$0xff]
        %v1262 = vrcp.pop %v1261
        %1264 = vset.pattern.permute.xlu0 0
        %1265 = vperm.xlu0 %1264, %v1262
        %v1266 = vpop.permute.xlu0 %1265
        %v1268 = vmul.f32 %v1260, %v1266
        %v1269 = vpack.c.bf16 %v1268, %v1268
        %v1271 = vsel %vm595, %v1269, 0
        %v1274 = vsel %vm683, %v1146, 0
        %1276 = vmatprep.subr.bf16.mxu0 0
        %1277 = vmatpush1.bf16.msra.mxu0 %v1274
        %1278 = vmatprep.subr.bf16.mxu0 0
        %1279 = vmatpush1.bf16.msra.mxu0 0
        %1280 = vmatprep.subr.bf16.mxu0 0
        %1281 = vmatpush1.bf16.msra.mxu0 0
        %1282 = vmatprep.subr.bf16.mxu0 0
        %1283 = vmatpush1.bf16.msra.mxu0 0
        %1284 = vmatprep.subr.bf16.mxu0 0
        %1285 = vmatpush1.bf16.msra.mxu0 0
        %1286 = vmatprep.subr.bf16.mxu0 0
        %1287 = vmatpush1.bf16.msra.mxu0 0
        %1288 = vmatprep.subr.bf16.mxu0 0
        %1289 = vmatpush1.bf16.msra.mxu0 0
        %1290 = vmatprep.subr.bf16.mxu0 0
        %1291 = vmatpush1.bf16.msra.mxu0 0
        %1292 = vmatprep.subr.bf16.mxu0 0
        %1293 = vmatpush1.bf16.msra.mxu0 0
        %1294 = vmatprep.subr.bf16.mxu0 0
        %1295 = vmatpush1.bf16.msra.mxu0 0
        %1296 = vmatprep.subr.bf16.mxu0 0
        %1297 = vmatpush1.bf16.msra.mxu0 0
        %1298 = vmatprep.subr.bf16.mxu0 0
        %1299 = vmatpush1.bf16.msra.mxu0 0
        %1300 = vmatprep.subr.bf16.mxu0 0
        %1301 = vmatpush1.bf16.msra.mxu0 0
        %1302 = vmatprep.subr.bf16.mxu0 0
        %1303 = vmatpush1.bf16.msra.mxu0 0
        %1304 = vmatprep.subr.bf16.mxu0 0
        %1305 = vmatpush1.bf16.msra.mxu0 0
        %1306 = vmatprep.subr.bf16.mxu0 0
        %1307 = vmatpush1.bf16.msra.mxu0 0
        %1308 = vmatprep.mubr.bf16.mxu0 0
        %1309 = vmatmul.mubr.bf16.gmra.mrb[0].mxu0 %v1271
        %v1310 = vpop.f32.mrb[0].mxu0
        %v1311 = vadd.f32 0.0, %v1310
        %v1312 = vpop.f32.mrb[0].mxu0
        %v1313 = vpop.f32.mrb[0].mxu0
        %v1314 = vpop.f32.mrb[0].mxu0
        %1315 = vdwg.mxu0
        %v1316 = vadd.f32 %v1255, %v1311
        %v1317 = vld [vmem:[%s1081] sm:$0xff]
        %v1318 = vld [vmem:[%s1073] sm:$0xff]
        %v1319 = vrcp.pop %v1318
        %1321 = vset.pattern.permute.xlu0 0
        %1322 = vperm.xlu0 %1321, %v1319
        %v1323 = vpop.permute.xlu0 %1322
        %v1325 = vmul.f32 %v1317, %v1323
        %v1326 = vpack.c.bf16 %v1325, %v1325
        %v1328 = vsel %vm595, %v1326, 0
        %v1331 = vsel %vm683, %v1147, 0
        %1333 = vmatprep.subr.bf16.mxu0 0
        %1334 = vmatpush1.bf16.msra.mxu0 %v1331
        %1335 = vmatprep.subr.bf16.mxu0 0
        %1336 = vmatpush1.bf16.msra.mxu0 0
        %1337 = vmatprep.subr.bf16.mxu0 0
        %1338 = vmatpush1.bf16.msra.mxu0 0
        %1339 = vmatprep.subr.bf16.mxu0 0
        %1340 = vmatpush1.bf16.msra.mxu0 0
        %1341 = vmatprep.subr.bf16.mxu0 0
        %1342 = vmatpush1.bf16.msra.mxu0 0
        %1343 = vmatprep.subr.bf16.mxu0 0
        %1344 = vmatpush1.bf16.msra.mxu0 0
        %1345 = vmatprep.subr.bf16.mxu0 0
        %1346 = vmatpush1.bf16.msra.mxu0 0
        %1347 = vmatprep.subr.bf16.mxu0 0
        %1348 = vmatpush1.bf16.msra.mxu0 0
        %1349 = vmatprep.subr.bf16.mxu0 0
        %1350 = vmatpush1.bf16.msra.mxu0 0
        %1351 = vmatprep.subr.bf16.mxu0 0
        %1352 = vmatpush1.bf16.msra.mxu0 0
        %1353 = vmatprep.subr.bf16.mxu0 0
        %1354 = vmatpush1.bf16.msra.mxu0 0
        %1355 = vmatprep.subr.bf16.mxu0 0
        %1356 = vmatpush1.bf16.msra.mxu0 0
        %1357 = vmatprep.subr.bf16.mxu0 0
        %1358 = vmatpush1.bf16.msra.mxu0 0
        %1359 = vmatprep.subr.bf16.mxu0 0
        %1360 = vmatpush1.bf16.msra.mxu0 0
        %1361 = vmatprep.subr.bf16.mxu0 0
        %1362 = vmatpush1.bf16.msra.mxu0 0
        %1363 = vmatprep.subr.bf16.mxu0 0
        %1364 = vmatpush1.bf16.msra.mxu0 0
        %1365 = vmatprep.mubr.bf16.mxu0 0
        %1366 = vmatmul.mubr.bf16.gmra.mrb[0].mxu0 %v1328
        %v1367 = vpop.f32.mrb[0].mxu0
        %v1368 = vadd.f32 0.0, %v1367
        %v1369 = vpop.f32.mrb[0].mxu0
        %v1370 = vpop.f32.mrb[0].mxu0
        %v1371 = vpop.f32.mrb[0].mxu0
        %1372 = vdwg.mxu0
        %v1373 = vadd.f32 %v1316, %v1368
        %v1374 = vld [vmem:[%s7] sm:$0x1]
        %v1376 = vlaneseq
        %v1377 = vshrl.u32 %v1376, 7
        %v1378 = vsub.s32 0, %v1377
        %v1379 = vrot.slane %v1374, %v1378
        %v1381 = vadd.f32 %v1373, %v1379
        %v1382 = vld [vmem:[%s446] sm:$0xf]
        %v1383 = vunpack.c.l.bf16 %v1382
        %v1384 = vadd.f32 %v1383, %v1381
        %vm1385 = vcmask 261120
        %v1386 = vsel %vm1385, %v1384, 0.0
        %1387 = vadd.xlane.f32.xlu0 %v1386
        %v1388 = vpop.xlane.xlu0 %1387
        %v1389 = vrcp.pop 32.0
        %v1390 = vmul.f32 %v1388, %v1389
        %v1391 = vsub.f32 %v1384, %v1390
        %v1392 = vmul.f32 %v1391, %v1391
        %v1393 = vsel %vm1385, %v1392, 0.0
        %1394 = vadd.xlane.f32.xlu0 %v1393
        %v1395 = vpop.xlane.xlu0 %1394
        %v1396 = vmul.f32 %v1395, %v1389
        %v1397 = vadd.f32 %v1396, 1e-05
        %v1398 = vrsqrt.pop %v1397
        %v1399 = vmul.f32 %v1391, %v1398
        %v1400 = vld [vmem:[%s8] sm:$0x1]
        %v1402 = vlaneseq
        %v1403 = vshrl.u32 %v1402, 7
        %v1404 = vsub.s32 0, %v1403
        %v1405 = vrot.slane %v1400, %v1404
        %v1407 = vmul.f32 %v1399, %v1405
        %v1408 = vld [vmem:[%s9] sm:$0x1]
        %v1410 = vlaneseq
        %v1411 = vshrl.u32 %v1410, 7
        %v1412 = vsub.s32 0, %v1411
        %v1413 = vrot.slane %v1408, %v1412
        %v1415 = vadd.f32 %v1407, %v1413
        %v1416 = vpack.c.bf16 %v1415, %v1415
        %vm1417 = vcmask 257024
        %1418 = vst.msk [vmem:[%s473] sm:$0xf] %vm1417, %v1416
      $region68: #{decoder_forward.12} parent=59 // pred_fallthru
        _
      %p1419 = scmp.lt.s32.totalorder %s26, 1
      %s1420 = scalar_select %p1419, %s26, 1
      %p1421 = scmp.lt.s32.totalorder %s27, 0
      %s1422 = scalar_select %p1421, %s27, 0
      %s1423 = sadd.s32 %s1422, %s1420
      %s1424 = smul.addr %s1423, 4
      %s1425 = scalar_lea.vmem %s10, %s1424
      // Predicated region
      $region69: #{decoder_forward.12} parent=59 // pred_check
        %p1426 = pneg %p298
      $region70: #{decoder_forward.12} parent=59 // pred_check_branch
        %1428 = sbr.rel (%p1426) target = $region72
      $region71: #{decoder_forward.12} parent=59 // pred_region
        _
      $region72: #{decoder_forward.12} parent=59 // pred_fallthru
        _
    $region60: #{decoder_forward.12} parent=5 // pred_fallthru
      _
    %p1429 = scmp.le.s32.totalorder 2, %s16
    // Predicated region
    $region73: #{decoder_forward.12} parent=5 // pred_check
      %p1430 = pneg %p1429
    $region74: #{decoder_forward.12} parent=5 // pred_check_branch
      %1432 = sbr.rel (%p1430) target = $region76
    $region75: #{decoder_forward.12} parent=5 // pred_region
      %s1433 = ssub.s32 %s16, 2
      // Predicated region
      $region77: #{decoder_forward.12} parent=75 // pred_check
        %p1434 = pneg %p304
      $region78: #{decoder_forward.12} parent=75 // pred_check_branch
        %1436 = sbr.rel (%p1434) target = $region80
      $region79: #{decoder_forward.12} parent=75 // pred_region
        %p1437 = scmp.lt.s32.totalorder %s29, 1
        %s1438 = scalar_select %p1437, %s29, 1
        %p1439 = scmp.lt.s32.totalorder %s30, 0
        %s1440 = scalar_select %p1439, %s30, 0
        %s1441 = sadd.s32 %s1440, %s1438
        %s1442 = smul.addr %s1441, 4
        %s1443 = scalar_lea.vmem %s10, %s1442
      $region80: #{decoder_forward.12} parent=75 // pred_fallthru
        _
    $region76: #{decoder_forward.12} parent=5 // pred_fallthru
      _
  $region6: #{decoder_forward.12} parent=0 // loop_footer
    %s20 = sadd.s32 1, %s16
  $region7: #{decoder_forward.12} parent=0 // loop_footer_branch
    %15 = sbr.rel target = $region3
  $region8: #{decoder_forward.12} parent=0 // loop_exit
    _

// kernel: decoder_forward.14
$region0: #{decoder_forward.14}
  #allocation0 [shape = 'u32[]', space=smem, size = 0x4, offset = 0x4, fixed_abs, tag = 'smem constant byte address 0x4 - core index']
  #allocation1 [shape = 'u32[144,128]{1,0:T(1,128)}', space=vmem, size = 0x12000, scoped, tag = 'internal scratch']
  #allocation2 [shape = 'bf16[8,32]{1,0:T(8,128)(2,1)}', space=vmem, size = 0x800, scoped, tag = 'scratch operand']
  #allocation3 [shape = 'f32[4,8,1]{2,1,0:T(8,128)}', space=vmem, size = 0x4000, scoped, tag = 'scratch operand']
  #allocation4 [shape = 'f32[4,8,1]{2,1,0:T(8,128)}', space=vmem, size = 0x4000, scoped, tag = 'scratch operand']
  #allocation5 [shape = 'f32[4,8,8]{2,1,0:T(8,128)}', space=vmem, size = 0x4000, scoped, tag = 'scratch operand']
  %s0 = inlined_call_operand.vmem [shape: bf16[2,8,32], index: 0, kind: input, shape index: {}]
  %s1 = inlined_call_operand.vmem [shape: bf16[2,8,64], index: 1, kind: input, shape index: {}]
  %s2 = inlined_call_operand.vmem [shape: f32[2,8,1], index: 2, kind: input, shape index: {}]
  %s3 = inlined_call_operand.vmem [shape: f32[2,1,8], index: 3, kind: input, shape index: {}]
  %s4 = inlined_call_operand.vmem [shape: bf16[32,32], index: 4, kind: input, shape index: {}]
  %s5 = inlined_call_operand.vmem [shape: f32[1,32], index: 5, kind: input, shape index: {}]
  %s6 = inlined_call_operand.vmem [shape: bf16[32,32], index: 6, kind: input, shape index: {}]
  %s7 = inlined_call_operand.vmem [shape: f32[1,32], index: 7, kind: input, shape index: {}]
  %s8 = inlined_call_operand.vmem [shape: f32[1,32], index: 8, kind: input, shape index: {}]
  %s9 = inlined_call_operand.vmem [shape: f32[1,32], index: 9, kind: input, shape index: {}]
  %s10 = inlined_call_operand.vmem [shape: bf16[2,8,32], index: 10, kind: output, shape index: {}]
  %s11 = sld [smem:[#allocation0]]
  $region81: #{decoder_forward.14} parent=0
    _
  %s13 = ssub.s32 1, %s11
  %s14 = scalar_select 0, %s13, %s11
  loop: start=0, step=1, limit=4
  $region2: #{decoder_forward.14} parent=0 // loop_pre_header
    _
  $region3: #{decoder_forward.14} parent=0 // loop_header
    %s16 = sphi 0, %s20
    %p17 = scmp.ge.s32.totalorder %s16, 4
    %s23 = sphi 0, %s42
    %s24 = sphi 0, %s38
    %s25 = sphi 0, %s34
    %s26 = sphi 0, %s23
    %s27 = sphi 0, %s24
    %s28 = sphi 0, %s25
    %s29 = sphi 0, %s26
    %s30 = sphi 0, %s27
    %s31 = sphi 0, %s28
    %s47 = sphi 0, %s49
    %s50 = sphi 0, %s47
    %s51 = sphi 0, %s50
    %s67 = sphi 0, %s51
    %s75 = sphi 0, %s77
    %s78 = sphi 0, %s75
    %s79 = sphi 0, %s78
    %s95 = sphi 0, %s79
    %s103 = sphi 0, %s105
    %s106 = sphi 0, %s103
    %s107 = sphi 0, %s106
    %s123 = sphi 0, %s107
    %s131 = sphi 0, %s133
    %s134 = sphi 0, %s131
    %s135 = sphi 0, %s134
    %s151 = sphi 0, %s135
    %s155 = sphi 0, %s155
    %s157 = sphi 0, %s155
    %s158 = sphi 0, %s157
    %s172 = sphi 0, %s158
    %s176 = sphi 0, %s176
    %s178 = sphi 0, %s176
    %s179 = sphi 0, %s178
    %s193 = sphi 0, %s179
    %s197 = sphi 0, %s197
    %s199 = sphi 0, %s197
    %s200 = sphi 0, %s199
    %s214 = sphi 0, %s200
    %s218 = sphi 0, %s218
    %s220 = sphi 0, %s218
    %s221 = sphi 0, %s220
    %s235 = sphi 0, %s221
    %s239 = sphi 0, %s239
    %s241 = sphi 0, %s239
    %s242 = sphi 0, %s241
    %s256 = sphi 0, %s242
    %s260 = sphi 0, %s260
    %s262 = sphi 0, %s260
    %s263 = sphi 0, %s262
    %s277 = sphi 0, %s263
    %s285 = sphi 0, %s287
    %s288 = sphi 0, %s285
    %s289 = sphi 0, %s288
    %s305 = sphi 0, %s289
  $region4: #{decoder_forward.14} parent=0 // loop_header_branch
    %19 = sbr.rel (%p17) target = $region8
  $region5: #{decoder_forward.14} parent=0 // loop_body
    %s21 = ssub.s32 %s16, 1
    %s22 = ssub.s32 %s16, 2
    %s32 = sadd.s32 1, %s25
    %p33 = scmp.ge.s32.totalorder %s32, 1
    %s34 = scalar_select %p33, 0, %s32
    %s35 = sadd.s32 1, %s24
    %s36 = scalar_select %p33, %s35, %s24
    %p37 = scmp.ge.s32.totalorder %s36, 1
    %s38 = scalar_select %p37, 0, %s36
    %s39 = sadd.s32 1, %s23
    %s40 = scalar_select %p37, %s39, %s23
    %p41 = scmp.ge.s32.totalorder %s40, 2
    %s42 = scalar_select %p41, 0, %s40
    %s43 = ssub.s32 %s23, %s42
    %s44 = ssub.s32 %s24, %s38
    %s45 = sor.u32 %s43, %s44
    %p46 = scmp.eq.s32.totalorder %s45, 0
    %s48 = sadd.s32 %s47, 1
    %s49 = scalar_select %p46, %s47, %s48
    %p52 = pneg %p46
    %p53 = scmp.eq.s32.totalorder %s16, 1
    %p54 = por %p52, %p53
    %p55 = scmp.ne.s32.totalorder %s47, %s50
    %p56 = scmp.eq.s32.totalorder %s16, 0
    %p57 = por %p55, %p56
    %p58 = scmp.ne.s32.totalorder %s47, %s50
    %p59 = scmp.eq.s32.totalorder %s21, 1
    %p60 = por %p58, %p59
    %p61 = scmp.ne.s32.totalorder %s50, %s51
    %p62 = scmp.eq.s32.totalorder %s21, 0
    %p63 = por %p61, %p62
    %p64 = scmp.ne.s32.totalorder %s50, %s51
    %p65 = scmp.eq.s32.totalorder %s22, 1
    %p66 = por %p64, %p65
    %p68 = scmp.ne.s32.totalorder %s51, %s67
    %p69 = scmp.eq.s32.totalorder %s22, 0
    %p70 = por %p68, %p69
    %s71 = ssub.s32 %s23, %s42
    %s72 = ssub.s32 %s25, %s34
    %s73 = sor.u32 %s71, %s72
    %p74 = scmp.eq.s32.totalorder %s73, 0
    %s76 = sadd.s32 %s75, 1
    %s77 = scalar_select %p74, %s75, %s76
    %p80 = pneg %p74
    %p81 = scmp.eq.s32.totalorder %s16, 1
    %p82 = por %p80, %p81
    %p83 = scmp.ne.s32.totalorder %s75, %s78
    %p84 = scmp.eq.s32.totalorder %s16, 0
    %p85 = por %p83, %p84
    %p86 = scmp.ne.s32.totalorder %s75, %s78
    %p87 = scmp.eq.s32.totalorder %s21, 1
    %p88 = por %p86, %p87
    %p89 = scmp.ne.s32.totalorder %s78, %s79
    %p90 = scmp.eq.s32.totalorder %s21, 0
    %p91 = por %p89, %p90
    %p92 = scmp.ne.s32.totalorder %s78, %s79
    %p93 = scmp.eq.s32.totalorder %s22, 1
    %p94 = por %p92, %p93
    %p96 = scmp.ne.s32.totalorder %s79, %s95
    %p97 = scmp.eq.s32.totalorder %s22, 0
    %p98 = por %p96, %p97
    %s99 = ssub.s32 %s23, %s42
    %s100 = ssub.s32 %s24, %s38
    %s101 = sor.u32 %s99, %s100
    %p102 = scmp.eq.s32.totalorder %s101, 0
    %s104 = sadd.s32 %s103, 1
    %s105 = scalar_select %p102, %s103, %s104
    %p108 = pneg %p102
    %p109 = scmp.eq.s32.totalorder %s16, 1
    %p110 = por %p108, %p109
    %p111 = scmp.ne.s32.totalorder %s103, %s106
    %p112 = scmp.eq.s32.totalorder %s16, 0
    %p113 = por %p111, %p112
    %p114 = scmp.ne.s32.totalorder %s103, %s106
    %p115 = scmp.eq.s32.totalorder %s21, 1
    %p116 = por %p114, %p115
    %p117 = scmp.ne.s32.totalorder %s106, %s107
    %p118 = scmp.eq.s32.totalorder %s21, 0
    %p119 = por %p117, %p118
    %p120 = scmp.ne.s32.totalorder %s106, %s107
    %p121 = scmp.eq.s32.totalorder %s22, 1
    %p122 = por %p120, %p121
    %p124 = scmp.ne.s32.totalorder %s107, %s123
    %p125 = scmp.eq.s32.totalorder %s22, 0
    %p126 = por %p124, %p125
    %s127 = ssub.s32 %s23, %s42
    %s128 = ssub.s32 %s25, %s34
    %s129 = sor.u32 %s127, %s128
    %p130 = scmp.eq.s32.totalorder %s129, 0
    %s132 = sadd.s32 %s131, 1
    %s133 = scalar_select %p130, %s131, %s132
    %p136 = pneg %p130
    %p137 = scmp.eq.s32.totalorder %s16, 1
    %p138 = por %p136, %p137
    %p139 = scmp.ne.s32.totalorder %s131, %s134
    %p140 = scmp.eq.s32.totalorder %s16, 0
    %p141 = por %p139, %p140
    %p142 = scmp.ne.s32.totalorder %s131, %s134
    %p143 = scmp.eq.s32.totalorder %s21, 1
    %p144 = por %p142, %p143
    %p145 = scmp.ne.s32.totalorder %s134, %s135
    %p146 = scmp.eq.s32.totalorder %s21, 0
    %p147 = por %p145, %p146
    %p148 = scmp.ne.s32.totalorder %s134, %s135
    %p149 = scmp.eq.s32.totalorder %s22, 1
    %p150 = por %p148, %p149
    %p152 = scmp.ne.s32.totalorder %s135, %s151
    %p153 = scmp.eq.s32.totalorder %s22, 0
    %p154 = por %p152, %p153
    %s156 = sadd.s32 %s155, 1
    %p159 = scmp.eq.s32.totalorder %s16, 1
    %p160 = scmp.ne.s32.totalorder %s155, %s157
    %p161 = scmp.eq.s32.totalorder %s16, 0
    %p162 = por %p160, %p161
    %p163 = scmp.ne.s32.totalorder %s155, %s157
    %p164 = scmp.eq.s32.totalorder %s21, 1
    %p165 = por %p163, %p164
    %p166 = scmp.ne.s32.totalorder %s157, %s158
    %p167 = scmp.eq.s32.totalorder %s21, 0
    %p168 = por %p166, %p167
    %p169 = scmp.ne.s32.totalorder %s157, %s158
    %p170 = scmp.eq.s32.totalorder %s22, 1
    %p171 = por %p169, %p170
    %p173 = scmp.ne.s32.totalorder %s158, %s172
    %p174 = scmp.eq.s32.totalorder %s22, 0
    %p175 = por %p173, %p174
    %s177 = sadd.s32 %s176, 1
    %p180 = scmp.eq.s32.totalorder %s16, 1
    %p181 = scmp.ne.s32.totalorder %s176, %s178
    %p182 = scmp.eq.s32.totalorder %s16, 0
    %p183 = por %p181, %p182
    %p184 = scmp.ne.s32.totalorder %s176, %s178
    %p185 = scmp.eq.s32.totalorder %s21, 1
    %p186 = por %p184, %p185
    %p187 = scmp.ne.s32.totalorder %s178, %s179
    %p188 = scmp.eq.s32.totalorder %s21, 0
    %p189 = por %p187, %p188
    %p190 = scmp.ne.s32.totalorder %s178, %s179
    %p191 = scmp.eq.s32.totalorder %s22, 1
    %p192 = por %p190, %p191
    %p194 = scmp.ne.s32.totalorder %s179, %s193
    %p195 = scmp.eq.s32.totalorder %s22, 0
    %p196 = por %p194, %p195
    %s198 = sadd.s32 %s197, 1
    %p201 = scmp.eq.s32.totalorder %s16, 1
    %p202 = scmp.ne.s32.totalorder %s197, %s199
    %p203 = scmp.eq.s32.totalorder %s16, 0
    %p204 = por %p202, %p203
    %p205 = scmp.ne.s32.totalorder %s197, %s199
    %p206 = scmp.eq.s32.totalorder %s21, 1
    %p207 = por %p205, %p206
    %p208 = scmp.ne.s32.totalorder %s199, %s200
    %p209 = scmp.eq.s32.totalorder %s21, 0
    %p210 = por %p208, %p209
    %p211 = scmp.ne.s32.totalorder %s199, %s200
    %p212 = scmp.eq.s32.totalorder %s22, 1
    %p213 = por %p211, %p212
    %p215 = scmp.ne.s32.totalorder %s200, %s214
    %p216 = scmp.eq.s32.totalorder %s22, 0
    %p217 = por %p215, %p216
    %s219 = sadd.s32 %s218, 1
    %p222 = scmp.eq.s32.totalorder %s16, 1
    %p223 = scmp.ne.s32.totalorder %s218, %s220
    %p224 = scmp.eq.s32.totalorder %s16, 0
    %p225 = por %p223, %p224
    %p226 = scmp.ne.s32.totalorder %s218, %s220
    %p227 = scmp.eq.s32.totalorder %s21, 1
    %p228 = por %p226, %p227
    %p229 = scmp.ne.s32.totalorder %s220, %s221
    %p230 = scmp.eq.s32.totalorder %s21, 0
    %p231 = por %p229, %p230
    %p232 = scmp.ne.s32.totalorder %s220, %s221
    %p233 = scmp.eq.s32.totalorder %s22, 1
    %p234 = por %p232, %p233
    %p236 = scmp.ne.s32.totalorder %s221, %s235
    %p237 = scmp.eq.s32.totalorder %s22, 0
    %p238 = por %p236, %p237
    %s240 = sadd.s32 %s239, 1
    %p243 = scmp.eq.s32.totalorder %s16, 1
    %p244 = scmp.ne.s32.totalorder %s239, %s241
    %p245 = scmp.eq.s32.totalorder %s16, 0
    %p246 = por %p244, %p245
    %p247 = scmp.ne.s32.totalorder %s239, %s241
    %p248 = scmp.eq.s32.totalorder %s21, 1
    %p249 = por %p247, %p248
    %p250 = scmp.ne.s32.totalorder %s241, %s242
    %p251 = scmp.eq.s32.totalorder %s21, 0
    %p252 = por %p250, %p251
    %p253 = scmp.ne.s32.totalorder %s241, %s242
    %p254 = scmp.eq.s32.totalorder %s22, 1
    %p255 = por %p253, %p254
    %p257 = scmp.ne.s32.totalorder %s242, %s256
    %p258 = scmp.eq.s32.totalorder %s22, 0
    %p259 = por %p257, %p258
    %s261 = sadd.s32 %s260, 1
    %p264 = scmp.eq.s32.totalorder %s16, 1
    %p265 = scmp.ne.s32.totalorder %s260, %s262
    %p266 = scmp.eq.s32.totalorder %s16, 0
    %p267 = por %p265, %p266
    %p268 = scmp.ne.s32.totalorder %s260, %s262
    %p269 = scmp.eq.s32.totalorder %s21, 1
    %p270 = por %p268, %p269
    %p271 = scmp.ne.s32.totalorder %s262, %s263
    %p272 = scmp.eq.s32.totalorder %s21, 0
    %p273 = por %p271, %p272
    %p274 = scmp.ne.s32.totalorder %s262, %s263
    %p275 = scmp.eq.s32.totalorder %s22, 1
    %p276 = por %p274, %p275
    %p278 = scmp.ne.s32.totalorder %s263, %s277
    %p279 = scmp.eq.s32.totalorder %s22, 0
    %p280 = por %p278, %p279
    %s281 = ssub.s32 %s23, %s42
    %s282 = ssub.s32 %s24, %s38
    %s283 = sor.u32 %s281, %s282
    %p284 = scmp.eq.s32.totalorder %s283, 0
    %s286 = sadd.s32 %s285, 1
    %s287 = scalar_select %p284, %s285, %s286
    %p290 = pneg %p284
    %p291 = scmp.eq.s32.totalorder %s16, 1
    %p292 = por %p290, %p291
    %p293 = scmp.ne.s32.totalorder %s285, %s288
    %p294 = scmp.eq.s32.totalorder %s16, 0
    %p295 = por %p293, %p294
    %p296 = scmp.ne.s32.totalorder %s285, %s288
    %p297 = scmp.eq.s32.totalorder %s21, 1
    %p298 = por %p296, %p297
    %p299 = scmp.ne.s32.totalorder %s288, %s289
    %p300 = scmp.eq.s32.totalorder %s21, 0
    %p301 = por %p299, %p300
    %p302 = scmp.ne.s32.totalorder %s288, %s289
    %p303 = scmp.eq.s32.totalorder %s22, 1
    %p304 = por %p302, %p303
    %p306 = scmp.ne.s32.totalorder %s289, %s305
    %p307 = scmp.eq.s32.totalorder %s22, 0
    %p308 = por %p306, %p307
    %p309 = scmp.le.s32.totalorder 1, %s16
    %p310 = scmp.lt.s32.totalorder %s16, 3
    %p311 = pnand %p309, %p310
    %p312 = pneg %p311
    // Predicated region
    $region9: #{decoder_forward.14} parent=5 // pred_check
      _
    $region10: #{decoder_forward.14} parent=5 // pred_check_branch
      %314 = sbr.rel (%p311) target = $region12
    $region11: #{decoder_forward.14} parent=5 // pred_region
      %s315 = ssub.s32 %s16, 1
      // Predicated region
      $region13: #{decoder_forward.14} parent=11 // pred_check
        %p316 = pneg %p168
      $region14: #{decoder_forward.14} parent=11 // pred_check_branch
        %318 = sbr.rel (%p316) target = $region16
      $region15: #{decoder_forward.14} parent=11 // pred_region
        _
      $region16: #{decoder_forward.14} parent=11 // pred_fallthru
        _
      // Predicated region
      $region17: #{decoder_forward.14} parent=11 // pred_check
        %p319 = pneg %p189
      $region18: #{decoder_forward.14} parent=11 // pred_check_branch
        %321 = sbr.rel (%p319) target = $region20
      $region19: #{decoder_forward.14} parent=11 // pred_region
        _
      $region20: #{decoder_forward.14} parent=11 // pred_fallthru
        _
      // Predicated region
      $region21: #{decoder_forward.14} parent=11 // pred_check
        %p322 = pneg %p210
      $region22: #{decoder_forward.14} parent=11 // pred_check_branch
        %324 = sbr.rel (%p322) target = $region24
      $region23: #{decoder_forward.14} parent=11 // pred_region
        _
      $region24: #{decoder_forward.14} parent=11 // pred_fallthru
        _
      // Predicated region
      $region25: #{decoder_forward.14} parent=11 // pred_check
        %p325 = pneg %p231
      $region26: #{decoder_forward.14} parent=11 // pred_check_branch
        %327 = sbr.rel (%p325) target = $region28
      $region27: #{decoder_forward.14} parent=11 // pred_region
        _
      $region28: #{decoder_forward.14} parent=11 // pred_fallthru
        _
      // Predicated region
      $region29: #{decoder_forward.14} parent=11 // pred_check
        %p328 = pneg %p252
      $region30: #{decoder_forward.14} parent=11 // pred_check_branch
        %330 = sbr.rel (%p328) target = $region32
      $region31: #{decoder_forward.14} parent=11 // pred_region
        _
      $region32: #{decoder_forward.14} parent=11 // pred_fallthru
        _
      // Predicated region
      $region33: #{decoder_forward.14} parent=11 // pred_check
        %p331 = pneg %p273
      $region34: #{decoder_forward.14} parent=11 // pred_check_branch
        %333 = sbr.rel (%p331) target = $region36
      $region35: #{decoder_forward.14} parent=11 // pred_region
        _
      $region36: #{decoder_forward.14} parent=11 // pred_fallthru
        _
    $region12: #{decoder_forward.14} parent=5 // pred_fallthru
      _
    %p334 = scmp.lt.s32.totalorder %s16, 2
    // Predicated region
    $region37: #{decoder_forward.14} parent=5 // pred_check
      %p335 = pneg %p334
    $region38: #{decoder_forward.14} parent=5 // pred_check_branch
      %337 = sbr.rel (%p335) target = $region40
    $region39: #{decoder_forward.14} parent=5 // pred_region
      // Predicated region
      $region41: #{decoder_forward.14} parent=39 // pred_check
        %p338 = pneg %p57
      $region42: #{decoder_forward.14} parent=39 // pred_check_branch
        %340 = sbr.rel (%p338) target = $region44
      $region43: #{decoder_forward.14} parent=39 // pred_region
        %p341 = scmp.lt.s32.totalorder %s23, 1
        %s342 = scalar_select %p341, %s23, 1
        %p343 = scmp.lt.s32.totalorder %s24, 0
        %s344 = scalar_select %p343, %s24, 0
        %s345 = sadd.s32 %s344, %s342
        %s346 = smul.addr %s345, 4
        %s347 = scalar_lea.vmem %s0, %s346
      $region44: #{decoder_forward.14} parent=39 // pred_fallthru
        _
      // Predicated region
      $region45: #{decoder_forward.14} parent=39 // pred_check
        %p348 = pneg %p85
      $region46: #{decoder_forward.14} parent=39 // pred_check_branch
        %350 = sbr.rel (%p348) target = $region48
      $region47: #{decoder_forward.14} parent=39 // pred_region
        %p351 = scmp.lt.s32.totalorder %s23, 1
        %s352 = scalar_select %p351, %s23, 1
        %p353 = scmp.lt.s32.totalorder %s25, 0
        %s354 = scalar_select %p353, %s25, 0
        %s355 = sadd.s32 %s354, %s352
        %s356 = smul.addr %s355, 4
        %s357 = scalar_lea.vmem %s1, %s356
      $region48: #{decoder_forward.14} parent=39 // pred_fallthru
        _
      // Predicated region
      $region49: #{decoder_forward.14} parent=39 // pred_check
        %p358 = pneg %p113
      $region50: #{decoder_forward.14} parent=39 // pred_check_branch
        %360 = sbr.rel (%p358) target = $region52
      $region51: #{decoder_forward.14} parent=39 // pred_region
        %p361 = scmp.lt.s32.totalorder %s23, 1
        %s362 = scalar_select %p361, %s23, 1
        %p363 = scmp.lt.s32.totalorder %s24, 0
        %s364 = scalar_select %p363, %s24, 0
        %s365 = sadd.s32 %s364, %s362
        %s366 = smul.addr %s365, 8
        %s367 = scalar_lea.vmem %s2, %s366
      $region52: #{decoder_forward.14} parent=39 // pred_fallthru
        _
      // Predicated region
      $region53: #{decoder_forward.14} parent=39 // pred_check
        %p368 = pneg %p141
      $region54: #{decoder_forward.14} parent=39 // pred_check_branch
        %370 = sbr.rel (%p368) target = $region56
      $region55: #{decoder_forward.14} parent=39 // pred_region
        %p371 = scmp.lt.s32.totalorder %s23, 1
        %s372 = scalar_select %p371, %s23, 1
        %p373 = scmp.lt.s32.totalorder %s25, 0
        %s374 = scalar_select %p373, %s25, 0
        %s375 = sadd.s32 %s374, %s372
        %s376 = scalar_lea.vmem %s3, %s375
      $region56: #{decoder_forward.14} parent=39 // pred_fallthru
        _
    $region40: #{decoder_forward.14} parent=5 // pred_fallthru
      _
    %p377 = scmp.le.s32.totalorder 1, %s16
    %p378 = scmp.lt.s32.totalorder %s16, 3
    %p379 = pnand %p377, %p378
    %p380 = pneg %p379
    // Predicated region
    $region57: #{decoder_forward.14} parent=5 // pred_check
      _
    $region58: #{decoder_forward.14} parent=5 // pred_check_branch
      %382 = sbr.rel (%p379) target = $region60
    $region59: #{decoder_forward.14} parent=5 // pred_region
      %s383 = ssub.s32 %s16, 1
      %p384 = scmp.lt.s32.totalorder %s26, 1
      %s385 = scalar_select %p384, %s26, 1
      %p386 = scmp.lt.s32.totalorder %s27, 0
      %s387 = scalar_select %p386, %s27, 0
      %s388 = sadd.s32 %s387, %s385
      %s389 = smul.addr %s388, 4
      %s390 = scalar_lea.vmem %s0, %s389
      %p391 = pneg %p63
      %p392 = pneg %p60
      %p393 = scmp.lt.s32.totalorder %s26, 1
      %s394 = scalar_select %p393, %s26, 1
      %p395 = scmp.lt.s32.totalorder %s28, 0
      %s396 = scalar_select %p395, %s28, 0
      %s397 = sadd.s32 %s396, %s394
      %s398 = smul.addr %s397, 4
      %s399 = scalar_lea.vmem %s1, %s398
      %p400 = pneg %p91
      %p401 = pneg %p88
      %p402 = scmp.lt.s32.totalorder %s26, 1
      %s403 = scalar_select %p402, %s26, 1
      %p404 = scmp.lt.s32.totalorder %s27, 0
      %s405 = scalar_select %p404, %s27, 0
      %s406 = sadd.s32 %s405, %s403
      %s407 = smul.addr %s406, 8
      %s408 = scalar_lea.vmem %s2, %s407
      %p409 = pneg %p119
      %p410 = pneg %p116
      %p411 = scmp.lt.s32.totalorder %s26, 1
      %s412 = scalar_select %p411, %s26, 1
      %p413 = scmp.lt.s32.totalorder %s28, 0
      %s414 = scalar_select %p413, %s28, 0
      %s415 = sadd.s32 %s414, %s412
      %s416 = scalar_lea.vmem %s3, %s415
      %p417 = pneg %p147
      %p418 = pneg %p144
      %p419 = pneg %p168
      %p420 = pneg %p165
      %p421 = pneg %p189
      %p422 = pneg %p186
      %p423 = pneg %p210
      %p424 = pneg %p207
      %p425 = pneg %p231
      %p426 = pneg %p228
      %p427 = pneg %p252
      %p428 = pneg %p249
      %p429 = pneg %p273
      %p430 = pneg %p270
      %p431 = pneg %p301
      %p432 = pneg %p298
      %p433 = scmp.lt.s32.totalorder %s26, 1
      %s434 = scalar_select %p433, %s26, 1
      %p435 = scmp.lt.s32.totalorder %s27, 0
      %s436 = scalar_select %p435, %s27, 0
      %s437 = sadd.s32 %s436, %s434
      %s438 = smul.addr %s437, 4
      %s439 = scalar_lea.vmem %s10, %s438
      %p440 = scmp.lt.s32.totalorder %s26, 1
      %s441 = scalar_select %p440, %s26, 1
      %p442 = scmp.lt.s32.totalorder %s27, 0
      %s443 = scalar_select %p442, %s27, 0
      %s444 = sadd.s32 %s443, %s441
      %s445 = smul.addr %s444, 4
      %s446 = scalar_lea.vmem %s0, %s445
      %p447 = scmp.lt.s32.totalorder %s26, 1
      %s448 = scalar_select %p447, %s26, 1
      %p449 = scmp.lt.s32.totalorder %s28, 0
      %s450 = scalar_select %p449, %s28, 0
      %s451 = sadd.s32 %s450, %s448
      %s452 = smul.addr %s451, 4
      %s453 = scalar_lea.vmem %s1, %s452
      %p454 = scmp.lt.s32.totalorder %s26, 1
      %s455 = scalar_select %p454, %s26, 1
      %p456 = scmp.lt.s32.totalorder %s27, 0
      %s457 = scalar_select %p456, %s27, 0
      %s458 = sadd.s32 %s457, %s455
      %s459 = smul.addr %s458, 8
      %s460 = scalar_lea.vmem %s2, %s459
      %p461 = scmp.lt.s32.totalorder %s26, 1
      %s462 = scalar_select %p461, %s26, 1
      %p463 = scmp.lt.s32.totalorder %s28, 0
      %s464 = scalar_select %p463, %s28, 0
      %s465 = sadd.s32 %s464, %s462
      %s466 = scalar_lea.vmem %s3, %s465
      %p467 = scmp.lt.s32.totalorder %s26, 1
      %s468 = scalar_select %p467, %s26, 1
      %p469 = scmp.lt.s32.totalorder %s27, 0
      %s470 = scalar_select %p469, %s27, 0
      %s471 = sadd.s32 %s470, %s468
      %s472 = smul.addr %s471, 4
      %s473 = scalar_lea.vmem %s10, %s472
      %p475 = scmp.eq.s32.totalorder %s28, 0
      // Predicated region
      $region61: #{decoder_forward.14} parent=59 // pred_check
        %p476 = pneg %p475
      $region62: #{decoder_forward.14} parent=59 // pred_check_branch
        %478 = sbr.rel (%p476) target = $region64
      $region63: #{decoder_forward.14} parent=59 // pred_region
        %v479 = vld [vmem:[%s446] sm:$0xf]
        %v480 = vld [vmem:[%s4] sm:$0xf]
        %v481 = vld [vmem:[%s4 + $0x4] sm:$0xf]
        %v482 = vld [vmem:[%s4 + $0x8] sm:$0xf]
        %v483 = vld [vmem:[%s4 + $0xc] sm:$0xf]
        %v484 = vld [vmem:[%s5] sm:$0x1]
        %v486 = vlaneseq
        %v487 = vshrl.u32 %v486, 7
        %v488 = vsub.s32 0, %v487
        %v489 = vrot.slane %v484, %v488
        %v495 = vunpack.c.l.b16 %v480
        %v496 = vunpack.c.l.b16 %v481
        %v497 = vunpack.c.l.b16 %v482
        %v498 = vunpack.c.l.b16 %v483
        %v499 = vpack.c.b16 %v496, %v495
        %v500 = vpack.c.b16 %v498, %v497
        %vm503 = vcmask 261120
        %v505 = vsel %vm503, %v479, 0
        %507 = vmatprep.subr.bf16.mxu0 0
        %508 = vmatpush1.bf16.msra.mxu0 %v499
        %509 = vmatprep.subr.bf16.mxu0 0
        %510 = vmatpush1.bf16.msra.mxu0 %v500
        %511 = vmatprep.subr.bf16.mxu0 0
        %512 = vmatpush1.bf16.msra.mxu0 0
        %513 = vmatprep.subr.bf16.mxu0 0
        %514 = vmatpush1.bf16.msra.mxu0 0
        %515 = vmatprep.subr.bf16.mxu0 0
        %516 = vmatpush1.bf16.msra.mxu0 0
        %517 = vmatprep.subr.bf16.mxu0 0
        %518 = vmatpush1.bf16.msra.mxu0 0
        %519 = vmatprep.subr.bf16.mxu0 0
        %520 = vmatpush1.bf16.msra.mxu0 0
        %521 = vmatprep.subr.bf16.mxu0 0
        %522 = vmatpush1.bf16.msra.mxu0 0
        %523 = vmatprep.subr.bf16.mxu0 0
        %524 = vmatpush1.bf16.msra.mxu0 0
        %525 = vmatprep.subr.bf16.mxu0 0
        %526 = vmatpush1.bf16.msra.mxu0 0
        %527 = vmatprep.subr.bf16.mxu0 0
        %528 = vmatpush1.bf16.msra.mxu0 0
        %529 = vmatprep.subr.bf16.mxu0 0
        %530 = vmatpush1.bf16.msra.mxu0 0
        %531 = vmatprep.subr.bf16.mxu0 0
        %532 = vmatpush1.bf16.msra.mxu0 0
        %533 = vmatprep.subr.bf16.mxu0 0
        %534 = vmatpush1.bf16.msra.mxu0 0
        %535 = vmatprep.subr.bf16.mxu0 0
        %536 = vmatpush1.bf16.msra.mxu0 0
        %537 = vmatprep.subr.bf16.mxu0 0
        %538 = vmatpush1.bf16.msra.mxu0 0
        %539 = vmatprep.mubr.bf16.mxu0 0
        %540 = vmatmul.mubr.bf16.gmra.mrb[0].mxu0 %v505
        %v541 = vpop.f32.mrb[0].mxu0
        %v542 = vadd.f32 %v489, %v541
        %v543 = vpop.f32.mrb[0].mxu0
        %v544 = vpop.f32.mrb[0].mxu0
        %v545 = vpop.f32.mrb[0].mxu0
        %546 = vdwg.mxu0
        %v547 = vmul.f32 %v542, 0.35355338
        %v548 = vpack.c.bf16 %v547, %v547
        %vm549 = vcmask 257024
        %550 = vst.msk [vmem:[#allocation2] sm:$0xf] %vm549, %v548
        %vm551 = vcmask 7168
        %552 = vst.msk [vmem:[#allocation3] sm:$0xff] %vm551, -1e+10
        %553 = vst.msk [vmem:[#allocation3 + $0x8] sm:$0xff] %vm551, -1e+10
        %554 = vst.msk [vmem:[#allocation3 + $0x10] sm:$0xff] %vm551, -1e+10
        %555 = vst.msk [vmem:[#allocation3 + $0x18] sm:$0xff] %vm551, -1e+10
        %556 = vst.msk [vmem:[#allocation4] sm:$0xff] %vm551, 0.0
        %557 = vst.msk [vmem:[#allocation4 + $0x8] sm:$0xff] %vm551, 0.0
        %558 = vst.msk [vmem:[#allocation4 + $0x10] sm:$0xff] %vm551, 0.0
        %559 = vst.msk [vmem:[#allocation4 + $0x18] sm:$0xff] %vm551, 0.0
        %vm560 = vcmask 64512
        %561 = vst.msk [vmem:[#allocation5] sm:$0xff] %vm560, 0.0
        %562 = vst.msk [vmem:[#allocation5 + $0x8] sm:$0xff] %vm560, 0.0
        %563 = vst.msk [vmem:[#allocation5 + $0x10] sm:$0xff] %vm560, 0.0
        %564 = vst.msk [vmem:[#allocation5 + $0x18] sm:$0xff] %vm560, 0.0
      $region64: #{decoder_forward.14} parent=59 // pred_fallthru
        _
      %v565 = vld [vmem:[%s453] sm:$0xf]
      %v566 = vld [vmem:[#allocation2] sm:$0xf]
      %v567 = vld [vmem:[%s460] sm:$0xff]
      %vm568 = vcmp.gt.f32.partialorder %v567, 0.5
      %v569 = vld [vmem:[%s466] sm:$0x1]
      %vm570 = vcmp.gt.f32.partialorder %v569, 0.5
      %v571 = vsel %vm568, 1, 0
      %572 = vset.pattern.permute.xlu0 0
      %573 = vperm.xlu0 %572, %v571
      %v574 = vpop.permute.xlu0 %573
      %vm575 = vcmp.eq.s32.totalorder %v574, 1
      %v576 = vsel %vm570, 1, 0
      %v577 = vlaneseq
      %v578 = vshrl.u32 %v577, 7
      %v579 = vsub.s32 0, %v578
      %v580 = vrot.slane %v576, %v579
      %vm581 = vcmp.eq.s32.totalorder %v580, 1
      %vm582 = vmand %vm575, %vm581
      %vm583 = vcmask 64512
      %v585 = vsel %vm583, %v566, 0
      %v588 = vsel %vm583, %v565, 0
      %590 = vmatprep.subr.bf16.mxu0 0
      %591 = vmatpush1.bf16.xpose.msra.mxu0 %v588
      %592 = vmatprep.subr.bf16.mxu0 0
      %593 = vmatpush1.bf16.xpose.msra.mxu0 0
      %594 = vmatprep.subr.bf16.mxu0 0
      %595 = vmatpush1.bf16.xpose.msra.mxu0 0
      %596 = vmatprep.subr.bf16.mxu0 0
      %597 = vmatpush1.bf16.xpose.msra.mxu0 0
      %598 = vmatprep.subr.bf16.mxu0 0
      %599 = vmatpush1.bf16.xpose.msra.mxu0 0
      %600 = vmatprep.subr.bf16.mxu0 0
      %601 = vmatpush1.bf16.xpose.msra.mxu0 0
      %602 = vmatprep.subr.bf16.mxu0 0
      %603 = vmatpush1.bf16.xpose.msra.mxu0 0
      %604 = vmatprep.subr.bf16.mxu0 0
      %605 = vmatpush1.bf16.xpose.msra.mxu0 0
      %606 = vmatprep.subr.bf16.mxu0 0
      %607 = vmatpush1.bf16.xpose.msra.mxu0 0
      %608 = vmatprep.subr.bf16.mxu0 0
      %609 = vmatpush1.bf16.xpose.msra.mxu0 0
      %610 = vmatprep.subr.bf16.mxu0 0
      %611 = vmatpush1.bf16.xpose.msra.mxu0 0
      %612 = vmatprep.subr.bf16.mxu0 0
      %613 = vmatpush1.bf16.xpose.msra.mxu0 0
      %614 = vmatprep.subr.bf16.mxu0 0
      %615 = vmatpush1.bf16.xpose.msra.mxu0 0
      %616 = vmatprep.subr.bf16.mxu0 0
      %617 = vmatpush1.bf16.xpose.msra.mxu0 0
      %618 = vmatprep.subr.bf16.mxu0 0
      %619 = vmatpush1.bf16.xpose.msra.mxu0 0
      %620 = vmatprep.subr.bf16.mxu0 0
      %621 = vmatpush1.bf16.xpose.msra.mxu0 0
      %622 = vmatprep.mubr.bf16.mxu0 0
      %623 = vmatmul.mubr.bf16.gmra.mrb[0].mxu0 %v585
      %v624 = vpop.f32.mrb[0].mxu0
      %v625 = vadd.f32 0.0, %v624
      %v626 = vpop.f32.mrb[0].mxu0
      %v627 = vpop.f32.mrb[0].mxu0
      %v628 = vpop.f32.mrb[0].mxu0
      %629 = vdwg.mxu0
      %v630 = vsel %vm582, %v625, -1e+10
      %v631 = vld [vmem:[#allocation3] sm:$0xff]
      %v632 = vsel %vm583, %v630, -inf
      %633 = vmax.xlane.f32.xlu0 %v632
      %v634 = vpop.xlane.xlu0 %633
      %v635 = vmax.f32 %v631, %v634
      %v636 = vsub.f32 %v631, %v635
      %v637 = vmul.f32 %v636, 1.442695
      %v638 = vpow.pop %v637
      %640 = vset.pattern.permute.xlu0 0
      %641 = vperm.xlu0 %640, %v635
      %v642 = vpop.permute.xlu0 %641
      %v644 = vsub.f32 %v630, %v642
      %v645 = vmul.f32 %v644, 1.442695
      %v646 = vpow.pop %v645
      %v647 = vld [vmem:[#allocation4] sm:$0xff]
      %v648 = vmul.f32 %v638, %v647
      %v649 = vsel %vm583, %v646, 0.0
      %650 = vadd.xlane.f32.xlu0 %v649
      %v651 = vpop.xlane.xlu0 %650
      %v652 = vadd.f32 %v648, %v651
      %vm653 = vcmask 7168
      %654 = vst.msk [vmem:[#allocation4] sm:$0xff] %vm653, %v652
      %v655 = vld [vmem:[#allocation5] sm:$0xff]
      %657 = vset.pattern.permute.xlu0 0
      %658 = vperm.xlu0 %657, %v638
      %v659 = vpop.permute.xlu0 %658
      %v661 = vmul.f32 %v659, %v655
      %v662 = vpack.c.bf16 %v646, %v646
      %v664 = vunpack.c.l.b16 %v565
      %v665 = vpack.c.b16 %v664, %v664
      %666 = vrot.lane.b32.xlu0 %v665, 96
      %v667 = vpop.permute.xlu0 %666
      %v669 = vsel %vm583, %v662, 0
      %vm671 = vcmask 1043456
      %v673 = vsel %vm671, %v667, 0
      %675 = vmatprep.subr.bf16.mxu0 0
      %676 = vmatpush1.bf16.msra.mxu0 %v673
      %677 = vmatprep.subr.bf16.mxu0 0
      %678 = vmatpush1.bf16.msra.mxu0 0
      %679 = vmatprep.subr.bf16.mxu0 0
      %680 = vmatpush1.bf16.msra.mxu0 0
      %681 = vmatprep.subr.bf16.mxu0 0
      %682 = vmatpush1.bf16.msra.mxu0 0
      %683 = vmatprep.subr.bf16.mxu0 0
      %684 = vmatpush1.bf16.msra.mxu0 0
      %685 = vmatprep.subr.bf16.mxu0 0
      %686 = vmatpush1.bf16.msra.mxu0 0
      %687 = vmatprep.subr.bf16.mxu0 0
      %688 = vmatpush1.bf16.msra.mxu0 0
      %689 = vmatprep.subr.bf16.mxu0 0
      %690 = vmatpush1.bf16.msra.mxu0 0
      %691 = vmatprep.subr.bf16.mxu0 0
      %692 = vmatpush1.bf16.msra.mxu0 0
      %693 = vmatprep.subr.bf16.mxu0 0
      %694 = vmatpush1.bf16.msra.mxu0 0
      %695 = vmatprep.subr.bf16.mxu0 0
      %696 = vmatpush1.bf16.msra.mxu0 0
      %697 = vmatprep.subr.bf16.mxu0 0
      %698 = vmatpush1.bf16.msra.mxu0 0
      %699 = vmatprep.subr.bf16.mxu0 0
      %700 = vmatpush1.bf16.msra.mxu0 0
      %701 = vmatprep.subr.bf16.mxu0 0
      %702 = vmatpush1.bf16.msra.mxu0 0
      %703 = vmatprep.subr.bf16.mxu0 0
      %704 = vmatpush1.bf16.msra.mxu0 0
      %705 = vmatprep.subr.bf16.mxu0 0
      %706 = vmatpush1.bf16.msra.mxu0 0
      %707 = vmatprep.mubr.bf16.mxu0 0
      %708 = vmatmul.mubr.bf16.gmra.mrb[0].mxu0 %v669
      %v709 = vpop.f32.mrb[0].mxu0
      %v710 = vadd.f32 0.0, %v709
      %v711 = vpop.f32.mrb[0].mxu0
      %v712 = vpop.f32.mrb[0].mxu0
      %v713 = vpop.f32.mrb[0].mxu0
      %714 = vdwg.mxu0
      %v715 = vadd.f32 %v661, %v710
      %716 = vst.msk [vmem:[#allocation5] sm:$0xff] %vm583, %v715
      %717 = vst.msk [vmem:[#allocation3] sm:$0xff] %vm653, %v635
      %v719 = vunpack.c.l.b16 %v566
      %v720 = vpack.c.b16 %v719, %v719
      %721 = vrot.lane.b32.xlu0 %v720, 120
      %v722 = vpop.permute.xlu0 %721
      %723 = vrot.lane.b32.xlu0 %v665, 120
      %v724 = vpop.permute.xlu0 %723
      %v726 = vsel %vm583, %v722, 0
      %v729 = vsel %vm583, %v724, 0
      %731 = vmatprep.subr.bf16.mxu0 0
      %732 = vmatpush1.bf16.xpose.msra.mxu0 %v729
      %733 = vmatprep.subr.bf16.mxu0 0
      %734 = vmatpush1.bf16.xpose.msra.mxu0 0
      %735 = vmatprep.subr.bf16.mxu0 0
      %736 = vmatpush1.bf16.xpose.msra.mxu0 0
      %737 = vmatprep.subr.bf16.mxu0 0
      %738 = vmatpush1.bf16.xpose.msra.mxu0 0
      %739 = vmatprep.subr.bf16.mxu0 0
      %740 = vmatpush1.bf16.xpose.msra.mxu0 0
      %741 = vmatprep.subr.bf16.mxu0 0
      %742 = vmatpush1.bf16.xpose.msra.mxu0 0
      %743 = vmatprep.subr.bf16.mxu0 0
      %744 = vmatpush1.bf16.xpose.msra.mxu0 0
      %745 = vmatprep.subr.bf16.mxu0 0
      %746 = vmatpush1.bf16.xpose.msra.mxu0 0
      %747 = vmatprep.subr.bf16.mxu0 0
      %748 = vmatpush1.bf16.xpose.msra.mxu0 0
      %749 = vmatprep.subr.bf16.mxu0 0
      %750 = vmatpush1.bf16.xpose.msra.mxu0 0
      %751 = vmatprep.subr.bf16.mxu0 0
      %752 = vmatpush1.bf16.xpose.msra.mxu0 0
      %753 = vmatprep.subr.bf16.mxu0 0
      %754 = vmatpush1.bf16.xpose.msra.mxu0 0
      %755 = vmatprep.subr.bf16.mxu0 0
      %756 = vmatpush1.bf16.xpose.msra.mxu0 0
      %757 = vmatprep.subr.bf16.mxu0 0
      %758 = vmatpush1.bf16.xpose.msra.mxu0 0
      %759 = vmatprep.subr.bf16.mxu0 0
      %760 = vmatpush1.bf16.xpose.msra.mxu0 0
      %761 = vmatprep.subr.bf16.mxu0 0
      %762 = vmatpush1.bf16.xpose.msra.mxu0 0
      %763 = vmatprep.mubr.bf16.mxu0 0
      %764 = vmatmul.mubr.bf16.gmra.mrb[0].mxu0 %v726
      %v765 = vpop.f32.mrb[0].mxu0
      %v766 = vadd.f32 0.0, %v765
      %v767 = vpop.f32.mrb[0].mxu0
      %v768 = vpop.f32.mrb[0].mxu0
      %v769 = vpop.f32.mrb[0].mxu0
      %770 = vdwg.mxu0
      %v771 = vsel %vm582, %v766, -1e+10
      %s772 = scalar_lea.vmem [#allocation3], 8
      %v773 = vld [vmem:[%s772] sm:$0xff]
      %v774 = vsel %vm583, %v771, -inf
      %775 = vmax.xlane.f32.xlu0 %v774
      %v776 = vpop.xlane.xlu0 %775
      %v777 = vmax.f32 %v773, %v776
      %v778 = vsub.f32 %v773, %v777
      %v779 = vmul.f32 %v778, 1.442695
      %v780 = vpow.pop %v779
      %782 = vset.pattern.permute.xlu0 0
      %783 = vperm.xlu0 %782, %v777
      %v784 = vpop.permute.xlu0 %783
      %v786 = vsub.f32 %v771, %v784
      %v787 = vmul.f32 %v786, 1.442695
      %v788 = vpow.pop %v787
      %s789 = scalar_lea.vmem [#allocation4], 8
      %v790 = vld [vmem:[%s789] sm:$0xff]
      %v791 = vmul.f32 %v780, %v790
      %v792 = vsel %vm583, %v788, 0.0
      %793 = vadd.xlane.f32.xlu0 %v792
      %v794 = vpop.xlane.xlu0 %793
      %v795 = vadd.f32 %v791, %v794
      %796 = vst.msk [vmem:[%s789] sm:$0xff] %vm653, %v795
      %s797 = scalar_lea.vmem [#allocation5], 8
      %v798 = vld [vmem:[%s797] sm:$0xff]
      %800 = vset.pattern.permute.xlu0 0
      %801 = vperm.xlu0 %800, %v780
      %v802 = vpop.permute.xlu0 %801
      %v804 = vmul.f32 %v802, %v798
      %v805 = vpack.c.bf16 %v788, %v788
      %806 = vrot.lane.b32.xlu0 %v665, 88
      %v807 = vpop.permute.xlu0 %806
      %v809 = vsel %vm583, %v805, 0
      %v812 = vsel %vm671, %v807, 0
      %814 = vmatprep.subr.bf16.mxu0 0
      %815 = vmatpush1.bf16.msra.mxu0 %v812
      %816 = vmatprep.subr.bf16.mxu0 0
      %817 = vmatpush1.bf16.msra.mxu0 0
      %818 = vmatprep.subr.bf16.mxu0 0
      %819 = vmatpush1.bf16.msra.mxu0 0
      %820 = vmatprep.subr.bf16.mxu0 0
      %821 = vmatpush1.bf16.msra.mxu0 0
      %822 = vmatprep.subr.bf16.mxu0 0
      %823 = vmatpush1.bf16.msra.mxu0 0
      %824 = vmatprep.subr.bf16.mxu0 0
      %825 = vmatpush1.bf16.msra.mxu0 0
      %826 = vmatprep.subr.bf16.mxu0 0
      %827 = vmatpush1.bf16.msra.mxu0 0
      %828 = vmatprep.subr.bf16.mxu0 0
      %829 = vmatpush1.bf16.msra.mxu0 0
      %830 = vmatprep.subr.bf16.mxu0 0
      %831 = vmatpush1.bf16.msra.mxu0 0
      %832 = vmatprep.subr.bf16.mxu0 0
      %833 = vmatpush1.bf16.msra.mxu0 0
      %834 = vmatprep.subr.bf16.mxu0 0
      %835 = vmatpush1.bf16.msra.mxu0 0
      %836 = vmatprep.subr.bf16.mxu0 0
      %837 = vmatpush1.bf16.msra.mxu0 0
      %838 = vmatprep.subr.bf16.mxu0 0
      %839 = vmatpush1.bf16.msra.mxu0 0
      %840 = vmatprep.subr.bf16.mxu0 0
      %841 = vmatpush1.bf16.msra.mxu0 0
      %842 = vmatprep.subr.bf16.mxu0 0
      %843 = vmatpush1.bf16.msra.mxu0 0
      %844 = vmatprep.subr.bf16.mxu0 0
      %845 = vmatpush1.bf16.msra.mxu0 0
      %846 = vmatprep.mubr.bf16.mxu0 0
      %847 = vmatmul.mubr.bf16.gmra.mrb[0].mxu0 %v809
      %v848 = vpop.f32.mrb[0].mxu0
      %v849 = vadd.f32 0.0, %v848
      %v850 = vpop.f32.mrb[0].mxu0
      %v851 = vpop.f32.mrb[0].mxu0
      %v852 = vpop.f32.mrb[0].mxu0
      %853 = vdwg.mxu0
      %v854 = vadd.f32 %v804, %v849
      %855 = vst.msk [vmem:[%s797] sm:$0xff] %vm583, %v854
      %856 = vst.msk [vmem:[%s772] sm:$0xff] %vm653, %v777
      %857 = vrot.lane.b32.xlu0 %v720, 112
      %v858 = vpop.permute.xlu0 %857
      %859 = vrot.lane.b32.xlu0 %v665, 112
      %v860 = vpop.permute.xlu0 %859
      %v862 = vsel %vm583, %v858, 0
      %v865 = vsel %vm583, %v860, 0
      %867 = vmatprep.subr.bf16.mxu0 0
      %868 = vmatpush1.bf16.xpose.msra.mxu0 %v865
      %869 = vmatprep.subr.bf16.mxu0 0
      %870 = vmatpush1.bf16.xpose.msra.mxu0 0
      %871 = vmatprep.subr.bf16.mxu0 0
      %872 = vmatpush1.bf16.xpose.msra.mxu0 0
      %873 = vmatprep.subr.bf16.mxu0 0
      %874 = vmatpush1.bf16.xpose.msra.mxu0 0
      %875 = vmatprep.subr.bf16.mxu0 0
      %876 = vmatpush1.bf16.xpose.msra.mxu0 0
      %877 = vmatprep.subr.bf16.mxu0 0
      %878 = vmatpush1.bf16.xpose.msra.mxu0 0
      %879 = vmatprep.subr.bf16.mxu0 0
      %880 = vmatpush1.bf16.xpose.msra.mxu0 0
      %881 = vmatprep.subr.bf16.mxu0 0
      %882 = vmatpush1.bf16.xpose.msra.mxu0 0
      %883 = vmatprep.subr.bf16.mxu0 0
      %884 = vmatpush1.bf16.xpose.msra.mxu0 0
      %885 = vmatprep.subr.bf16.mxu0 0
      %886 = vmatpush1.bf16.xpose.msra.mxu0 0
      %887 = vmatprep.subr.bf16.mxu0 0
      %888 = vmatpush1.bf16.xpose.msra.mxu0 0
      %889 = vmatprep.subr.bf16.mxu0 0
      %890 = vmatpush1.bf16.xpose.msra.mxu0 0
      %891 = vmatprep.subr.bf16.mxu0 0
      %892 = vmatpush1.bf16.xpose.msra.mxu0 0
      %893 = vmatprep.subr.bf16.mxu0 0
      %894 = vmatpush1.bf16.xpose.msra.mxu0 0
      %895 = vmatprep.subr.bf16.mxu0 0
      %896 = vmatpush1.bf16.xpose.msra.mxu0 0
      %897 = vmatprep.subr.bf16.mxu0 0
      %898 = vmatpush1.bf16.xpose.msra.mxu0 0
      %899 = vmatprep.mubr.bf16.mxu0 0
      %900 = vmatmul.mubr.bf16.gmra.mrb[0].mxu0 %v862
      %v901 = vpop.f32.mrb[0].mxu0
      %v902 = vadd.f32 0.0, %v901
      %v903 = vpop.f32.mrb[0].mxu0
      %v904 = vpop.f32.mrb[0].mxu0
      %v905 = vpop.f32.mrb[0].mxu0
      %906 = vdwg.mxu0
      %v907 = vsel %vm582, %v902, -1e+10
      %s908 = scalar_lea.vmem [#allocation3], 16
      %v909 = vld [vmem:[%s908] sm:$0xff]
      %v910 = vsel %vm583, %v907, -inf
      %911 = vmax.xlane.f32.xlu0 %v910
      %v912 = vpop.xlane.xlu0 %911
      %v913 = vmax.f32 %v909, %v912
      %v914 = vsub.f32 %v909, %v913
      %v915 = vmul.f32 %v914, 1.442695
      %v916 = vpow.pop %v915
      %918 = vset.pattern.permute.xlu0 0
      %919 = vperm.xlu0 %918, %v913
      %v920 = vpop.permute.xlu0 %919
      %v922 = vsub.f32 %v907, %v920
      %v923 = vmul.f32 %v922, 1.442695
      %v924 = vpow.pop %v923
      %s925 = scalar_lea.vmem [#allocation4], 16
      %v926 = vld [vmem:[%s925] sm:$0xff]
      %v927 = vmul.f32 %v916, %v926
      %v928 = vsel %vm583, %v924, 0.0
      %929 = vadd.xlane.f32.xlu0 %v928
      %v930 = vpop.xlane.xlu0 %929
      %v931 = vadd.f32 %v927, %v930
      %932 = vst.msk [vmem:[%s925] sm:$0xff] %vm653, %v931
      %s933 = scalar_lea.vmem [#allocation5], 16
      %v934 = vld [vmem:[%s933] sm:$0xff]
      %936 = vset.pattern.permute.xlu0 0
      %937 = vperm.xlu0 %936, %v916
      %v938 = vpop.permute.xlu0 %937
      %v940 = vmul.f32 %v938, %v934
      %v941 = vpack.c.bf16 %v924, %v924
      %942 = vrot.lane.b32.xlu0 %v665, 80
      %v943 = vpop.permute.xlu0 %942
      %v945 = vsel %vm583, %v941, 0
      %v948 = vsel %vm671, %v943, 0
      %950 = vmatprep.subr.bf16.mxu0 0
      %951 = vmatpush1.bf16.msra.mxu0 %v948
      %952 = vmatprep.subr.bf16.mxu0 0
      %953 = vmatpush1.bf16.msra.mxu0 0
      %954 = vmatprep.subr.bf16.mxu0 0
      %955 = vmatpush1.bf16.msra.mxu0 0
      %956 = vmatprep.subr.bf16.mxu0 0
      %957 = vmatpush1.bf16.msra.mxu0 0
      %958 = vmatprep.subr.bf16.mxu0 0
      %959 = vmatpush1.bf16.msra.mxu0 0
      %960 = vmatprep.subr.bf16.mxu0 0
      %961 = vmatpush1.bf16.msra.mxu0 0
      %962 = vmatprep.subr.bf16.mxu0 0
      %963 = vmatpush1.bf16.msra.mxu0 0
      %964 = vmatprep.subr.bf16.mxu0 0
      %965 = vmatpush1.bf16.msra.mxu0 0
      %966 = vmatprep.subr.bf16.mxu0 0
      %967 = vmatpush1.bf16.msra.mxu0 0
      %968 = vmatprep.subr.bf16.mxu0 0
      %969 = vmatpush1.bf16.msra.mxu0 0
      %970 = vmatprep.subr.bf16.mxu0 0
      %971 = vmatpush1.bf16.msra.mxu0 0
      %972 = vmatprep.subr.bf16.mxu0 0
      %973 = vmatpush1.bf16.msra.mxu0 0
      %974 = vmatprep.subr.bf16.mxu0 0
      %975 = vmatpush1.bf16.msra.mxu0 0
      %976 = vmatprep.subr.bf16.mxu0 0
      %977 = vmatpush1.bf16.msra.mxu0 0
      %978 = vmatprep.subr.bf16.mxu0 0
      %979 = vmatpush1.bf16.msra.mxu0 0
      %980 = vmatprep.subr.bf16.mxu0 0
      %981 = vmatpush1.bf16.msra.mxu0 0
      %982 = vmatprep.mubr.bf16.mxu0 0
      %983 = vmatmul.mubr.bf16.gmra.mrb[0].mxu0 %v945
      %v984 = vpop.f32.mrb[0].mxu0
      %v985 = vadd.f32 0.0, %v984
      %v986 = vpop.f32.mrb[0].mxu0
      %v987 = vpop.f32.mrb[0].mxu0
      %v988 = vpop.f32.mrb[0].mxu0
      %989 = vdwg.mxu0
      %v990 = vadd.f32 %v940, %v985
      %991 = vst.msk [vmem:[%s933] sm:$0xff] %vm583, %v990
      %992 = vst.msk [vmem:[%s908] sm:$0xff] %vm653, %v913
      %993 = vrot.lane.b32.xlu0 %v720, 104
      %v994 = vpop.permute.xlu0 %993
      %995 = vrot.lane.b32.xlu0 %v665, 104
      %v996 = vpop.permute.xlu0 %995
      %v998 = vsel %vm583, %v994, 0
      %v1001 = vsel %vm583, %v996, 0
      %1003 = vmatprep.subr.bf16.mxu0 0
      %1004 = vmatpush1.bf16.xpose.msra.mxu0 %v1001
      %1005 = vmatprep.subr.bf16.mxu0 0
      %1006 = vmatpush1.bf16.xpose.msra.mxu0 0
      %1007 = vmatprep.subr.bf16.mxu0 0
      %1008 = vmatpush1.bf16.xpose.msra.mxu0 0
      %1009 = vmatprep.subr.bf16.mxu0 0
      %1010 = vmatpush1.bf16.xpose.msra.mxu0 0
      %1011 = vmatprep.subr.bf16.mxu0 0
      %1012 = vmatpush1.bf16.xpose.msra.mxu0 0
      %1013 = vmatprep.subr.bf16.mxu0 0
      %1014 = vmatpush1.bf16.xpose.msra.mxu0 0
      %1015 = vmatprep.subr.bf16.mxu0 0
      %1016 = vmatpush1.bf16.xpose.msra.mxu0 0
      %1017 = vmatprep.subr.bf16.mxu0 0
      %1018 = vmatpush1.bf16.xpose.msra.mxu0 0
      %1019 = vmatprep.subr.bf16.mxu0 0
      %1020 = vmatpush1.bf16.xpose.msra.mxu0 0
      %1021 = vmatprep.subr.bf16.mxu0 0
      %1022 = vmatpush1.bf16.xpose.msra.mxu0 0
      %1023 = vmatprep.subr.bf16.mxu0 0
      %1024 = vmatpush1.bf16.xpose.msra.mxu0 0
      %1025 = vmatprep.subr.bf16.mxu0 0
      %1026 = vmatpush1.bf16.xpose.msra.mxu0 0
      %1027 = vmatprep.subr.bf16.mxu0 0
      %1028 = vmatpush1.bf16.xpose.msra.mxu0 0
      %1029 = vmatprep.subr.bf16.mxu0 0
      %1030 = vmatpush1.bf16.xpose.msra.mxu0 0
      %1031 = vmatprep.subr.bf16.mxu0 0
      %1032 = vmatpush1.bf16.xpose.msra.mxu0 0
      %1033 = vmatprep.subr.bf16.mxu0 0
      %1034 = vmatpush1.bf16.xpose.msra.mxu0 0
      %1035 = vmatprep.mubr.bf16.mxu0 0
      %1036 = vmatmul.mubr.bf16.gmra.mrb[0].mxu0 %v998
      %v1037 = vpop.f32.mrb[0].mxu0
      %v1038 = vadd.f32 0.0, %v1037
      %v1039 = vpop.f32.mrb[0].mxu0
      %v1040 = vpop.f32.mrb[0].mxu0
      %v1041 = vpop.f32.mrb[0].mxu0
      %1042 = vdwg.mxu0
      %v1043 = vsel %vm582, %v1038, -1e+10
      %s1044 = scalar_lea.vmem [#allocation3], 24
      %v1045 = vld [vmem:[%s1044] sm:$0xff]
      %v1046 = vsel %vm583, %v1043, -inf
      %1047 = vmax.xlane.f32.xlu0 %v1046
      %v1048 = vpop.xlane.xlu0 %1047
      %v1049 = vmax.f32 %v1045, %v1048
      %v1050 = vsub.f32 %v1045, %v1049
      %v1051 = vmul.f32 %v1050, 1.442695
      %v1052 = vpow.pop %v1051
      %1054 = vset.pattern.permute.xlu0 0
      %1055 = vperm.xlu0 %1054, %v1049
      %v1056 = vpop.permute.xlu0 %1055
      %v1058 = vsub.f32 %v1043, %v1056
      %v1059 = vmul.f32 %v1058, 1.442695
      %v1060 = vpow.pop %v1059
      %s1061 = scalar_lea.vmem [#allocation4], 24
      %v1062 = vld [vmem:[%s1061] sm:$0xff]
      %v1063 = vmul.f32 %v1052, %v1062
      %v1064 = vsel %vm583, %v1060, 0.0
      %1065 = vadd.xlane.f32.xlu0 %v1064
      %v1066 = vpop.xlane.xlu0 %1065
      %v1067 = vadd.f32 %v1063, %v1066
      %1068 = vst.msk [vmem:[%s1061] sm:$0xff] %vm653, %v1067
      %s1069 = scalar_lea.vmem [#allocation5], 24
      %v1070 = vld [vmem:[%s1069] sm:$0xff]
      %1072 = vset.pattern.permute.xlu0 0
      %1073 = vperm.xlu0 %1072, %v1052
      %v1074 = vpop.permute.xlu0 %1073
      %v1076 = vmul.f32 %v1074, %v1070
      %v1077 = vpack.c.bf16 %v1060, %v1060
      %1078 = vrot.lane.b32.xlu0 %v665, 72
      %v1079 = vpop.permute.xlu0 %1078
      %v1081 = vsel %vm583, %v1077, 0
      %v1084 = vsel %vm671, %v1079, 0
      %1086 = vmatprep.subr.bf16.mxu0 0
      %1087 = vmatpush1.bf16.msra.mxu0 %v1084
      %1088 = vmatprep.subr.bf16.mxu0 0
      %1089 = vmatpush1.bf16.msra.mxu0 0
      %1090 = vmatprep.subr.bf16.mxu0 0
      %1091 = vmatpush1.bf16.msra.mxu0 0
      %1092 = vmatprep.subr.bf16.mxu0 0
      %1093 = vmatpush1.bf16.msra.mxu0 0
      %1094 = vmatprep.subr.bf16.mxu0 0
      %1095 = vmatpush1.bf16.msra.mxu0 0
      %1096 = vmatprep.subr.bf16.mxu0 0
      %1097 = vmatpush1.bf16.msra.mxu0 0
      %1098 = vmatprep.subr.bf16.mxu0 0
      %1099 = vmatpush1.bf16.msra.mxu0 0
      %1100 = vmatprep.subr.bf16.mxu0 0
      %1101 = vmatpush1.bf16.msra.mxu0 0
      %1102 = vmatprep.subr.bf16.mxu0 0
      %1103 = vmatpush1.bf16.msra.mxu0 0
      %1104 = vmatprep.subr.bf16.mxu0 0
      %1105 = vmatpush1.bf16.msra.mxu0 0
      %1106 = vmatprep.subr.bf16.mxu0 0
      %1107 = vmatpush1.bf16.msra.mxu0 0
      %1108 = vmatprep.subr.bf16.mxu0 0
      %1109 = vmatpush1.bf16.msra.mxu0 0
      %1110 = vmatprep.subr.bf16.mxu0 0
      %1111 = vmatpush1.bf16.msra.mxu0 0
      %1112 = vmatprep.subr.bf16.mxu0 0
      %1113 = vmatpush1.bf16.msra.mxu0 0
      %1114 = vmatprep.subr.bf16.mxu0 0
      %1115 = vmatpush1.bf16.msra.mxu0 0
      %1116 = vmatprep.subr.bf16.mxu0 0
      %1117 = vmatpush1.bf16.msra.mxu0 0
      %1118 = vmatprep.mubr.bf16.mxu0 0
      %1119 = vmatmul.mubr.bf16.gmra.mrb[0].mxu0 %v1081
      %v1120 = vpop.f32.mrb[0].mxu0
      %v1121 = vadd.f32 0.0, %v1120
      %v1122 = vpop.f32.mrb[0].mxu0
      %v1123 = vpop.f32.mrb[0].mxu0
      %v1124 = vpop.f32.mrb[0].mxu0
      %1125 = vdwg.mxu0
      %v1126 = vadd.f32 %v1076, %v1121
      %1127 = vst.msk [vmem:[%s1069] sm:$0xff] %vm583, %v1126
      %1128 = vst.msk [vmem:[%s1044] sm:$0xff] %vm653, %v1049
      // Predicated region
      $region65: #{decoder_forward.14} parent=59 // pred_check
        %p1129 = pneg %p475
      $region66: #{decoder_forward.14} parent=59 // pred_check_branch
        %1131 = sbr.rel (%p1129) target = $region68
      $region67: #{decoder_forward.14} parent=59 // pred_region
        %v1132 = vld [vmem:[%s6] sm:$0xf]
        %v1133 = vld [vmem:[%s6 + $0x4] sm:$0xf]
        %v1134 = vld [vmem:[%s6 + $0x8] sm:$0xf]
        %v1135 = vld [vmem:[%s6 + $0xc] sm:$0xf]
        %v1136 = vld [vmem:[#allocation5] sm:$0xff]
        %v1137 = vld [vmem:[#allocation4] sm:$0xff]
        %v1138 = vrcp.pop %v1137
        %1140 = vset.pattern.permute.xlu0 0
        %1141 = vperm.xlu0 %1140, %v1138
        %v1142 = vpop.permute.xlu0 %1141
        %v1144 = vmul.f32 %v1136, %v1142
        %v1145 = vpack.c.bf16 %v1144, %v1144
        %v1146 = vld [vmem:[%s797] sm:$0xff]
        %v1147 = vld [vmem:[%s789] sm:$0xff]
        %v1148 = vrcp.pop %v1147
        %1150 = vset.pattern.permute.xlu0 0
        %1151 = vperm.xlu0 %1150, %v1148
        %v1152 = vpop.permute.xlu0 %1151
        %v1154 = vmul.f32 %v1146, %v1152
        %v1155 = vpack.c.bf16 %v1154, %v1154
        %v1157 = vsel %vm583, %v1155, 0
        %v1160 = vsel %vm671, %v1133, 0
        %1162 = vmatprep.subr.bf16.mxu0 0
        %1163 = vmatpush1.bf16.msra.mxu0 %v1160
        %1164 = vmatprep.subr.bf16.mxu0 0
        %1165 = vmatpush1.bf16.msra.mxu0 0
        %1166 = vmatprep.subr.bf16.mxu0 0
        %1167 = vmatpush1.bf16.msra.mxu0 0
        %1168 = vmatprep.subr.bf16.mxu0 0
        %1169 = vmatpush1.bf16.msra.mxu0 0
        %1170 = vmatprep.subr.bf16.mxu0 0
        %1171 = vmatpush1.bf16.msra.mxu0 0
        %1172 = vmatprep.subr.bf16.mxu0 0
        %1173 = vmatpush1.bf16.msra.mxu0 0
        %1174 = vmatprep.subr.bf16.mxu0 0
        %1175 = vmatpush1.bf16.msra.mxu0 0
        %1176 = vmatprep.subr.bf16.mxu0 0
        %1177 = vmatpush1.bf16.msra.mxu0 0
        %1178 = vmatprep.subr.bf16.mxu0 0
        %1179 = vmatpush1.bf16.msra.mxu0 0
        %1180 = vmatprep.subr.bf16.mxu0 0
        %1181 = vmatpush1.bf16.msra.mxu0 0
        %1182 = vmatprep.subr.bf16.mxu0 0
        %1183 = vmatpush1.bf16.msra.mxu0 0
        %1184 = vmatprep.subr.bf16.mxu0 0
        %1185 = vmatpush1.bf16.msra.mxu0 0
        %1186 = vmatprep.subr.bf16.mxu0 0
        %1187 = vmatpush1.bf16.msra.mxu0 0
        %1188 = vmatprep.subr.bf16.mxu0 0
        %1189 = vmatpush1.bf16.msra.mxu0 0
        %1190 = vmatprep.subr.bf16.mxu0 0
        %1191 = vmatpush1.bf16.msra.mxu0 0
        %1192 = vmatprep.subr.bf16.mxu0 0
        %1193 = vmatpush1.bf16.msra.mxu0 0
        %1194 = vmatprep.mubr.bf16.mxu0 0
        %1195 = vmatmul.mubr.bf16.gmra.mrb[0].mxu0 %v1157
        %v1196 = vpop.f32.mrb[0].mxu0
        %v1197 = vadd.f32 0.0, %v1196
        %v1198 = vpop.f32.mrb[0].mxu0
        %v1199 = vpop.f32.mrb[0].mxu0
        %v1200 = vpop.f32.mrb[0].mxu0
        %1201 = vdwg.mxu0
        %v1203 = vsel %vm583, %v1145, 0
        %v1206 = vsel %vm671, %v1132, 0
        %1208 = vmatprep.subr.bf16.mxu0 0
        %1209 = vmatpush1.bf16.msra.mxu0 %v1206
        %1210 = vmatprep.subr.bf16.mxu0 0
        %1211 = vmatpush1.bf16.msra.mxu0 0
        %1212 = vmatprep.subr.bf16.mxu0 0
        %1213 = vmatpush1.bf16.msra.mxu0 0
        %1214 = vmatprep.subr.bf16.mxu0 0
        %1215 = vmatpush1.bf16.msra.mxu0 0
        %1216 = vmatprep.subr.bf16.mxu0 0
        %1217 = vmatpush1.bf16.msra.mxu0 0
        %1218 = vmatprep.subr.bf16.mxu0 0
        %1219 = vmatpush1.bf16.msra.mxu0 0
        %1220 = vmatprep.subr.bf16.mxu0 0
        %1221 = vmatpush1.bf16.msra.mxu0 0
        %1222 = vmatprep.subr.bf16.mxu0 0
        %1223 = vmatpush1.bf16.msra.mxu0 0
        %1224 = vmatprep.subr.bf16.mxu0 0
        %1225 = vmatpush1.bf16.msra.mxu0 0
        %1226 = vmatprep.subr.bf16.mxu0 0
        %1227 = vmatpush1.bf16.msra.mxu0 0
        %1228 = vmatprep.subr.bf16.mxu0 0
        %1229 = vmatpush1.bf16.msra.mxu0 0
        %1230 = vmatprep.subr.bf16.mxu0 0
        %1231 = vmatpush1.bf16.msra.mxu0 0
        %1232 = vmatprep.subr.bf16.mxu0 0
        %1233 = vmatpush1.bf16.msra.mxu0 0
        %1234 = vmatprep.subr.bf16.mxu0 0
        %1235 = vmatpush1.bf16.msra.mxu0 0
        %1236 = vmatprep.subr.bf16.mxu0 0
        %1237 = vmatpush1.bf16.msra.mxu0 0
        %1238 = vmatprep.subr.bf16.mxu0 0
        %1239 = vmatpush1.bf16.msra.mxu0 0
        %1240 = vmatprep.mubr.bf16.mxu0 0
        %1241 = vmatmul.mubr.bf16.gmra.mrb[0].mxu0 %v1203
        %v1242 = vpop.f32.mrb[0].mxu0
        %v1243 = vadd.f32 %v1197, %v1242
        %v1244 = vpop.f32.mrb[0].mxu0
        %v1245 = vpop.f32.mrb[0].mxu0
        %v1246 = vpop.f32.mrb[0].mxu0
        %1247 = vdwg.mxu0
        %v1248 = vld [vmem:[%s933] sm:$0xff]
        %v1249 = vld [vmem:[%s925] sm:$0xff]
        %v1250 = vrcp.pop %v1249
        %1252 = vset.pattern.permute.xlu0 0
        %1253 = vperm.xlu0 %1252, %v1250
        %v1254 = vpop.permute.xlu0 %1253
        %v1256 = vmul.f32 %v1248, %v1254
        %v1257 = vpack.c.bf16 %v1256, %v1256
        %v1259 = vsel %vm583, %v1257, 0
        %v1262 = vsel %vm671, %v1134, 0
        %1264 = vmatprep.subr.bf16.mxu0 0
        %1265 = vmatpush1.bf16.msra.mxu0 %v1262
        %1266 = vmatprep.subr.bf16.mxu0 0
        %1267 = vmatpush1.bf16.msra.mxu0 0
        %1268 = vmatprep.subr.bf16.mxu0 0
        %1269 = vmatpush1.bf16.msra.mxu0 0
        %1270 = vmatprep.subr.bf16.mxu0 0
        %1271 = vmatpush1.bf16.msra.mxu0 0
        %1272 = vmatprep.subr.bf16.mxu0 0
        %1273 = vmatpush1.bf16.msra.mxu0 0
        %1274 = vmatprep.subr.bf16.mxu0 0
        %1275 = vmatpush1.bf16.msra.mxu0 0
        %1276 = vmatprep.subr.bf16.mxu0 0
        %1277 = vmatpush1.bf16.msra.mxu0 0
        %1278 = vmatprep.subr.bf16.mxu0 0
        %1279 = vmatpush1.bf16.msra.mxu0 0
        %1280 = vmatprep.subr.bf16.mxu0 0
        %1281 = vmatpush1.bf16.msra.mxu0 0
        %1282 = vmatprep.subr.bf16.mxu0 0
        %1283 = vmatpush1.bf16.msra.mxu0 0
        %1284 = vmatprep.subr.bf16.mxu0 0
        %1285 = vmatpush1.bf16.msra.mxu0 0
        %1286 = vmatprep.subr.bf16.mxu0 0
        %1287 = vmatpush1.bf16.msra.mxu0 0
        %1288 = vmatprep.subr.bf16.mxu0 0
        %1289 = vmatpush1.bf16.msra.mxu0 0
        %1290 = vmatprep.subr.bf16.mxu0 0
        %1291 = vmatpush1.bf16.msra.mxu0 0
        %1292 = vmatprep.subr.bf16.mxu0 0
        %1293 = vmatpush1.bf16.msra.mxu0 0
        %1294 = vmatprep.subr.bf16.mxu0 0
        %1295 = vmatpush1.bf16.msra.mxu0 0
        %1296 = vmatprep.mubr.bf16.mxu0 0
        %1297 = vmatmul.mubr.bf16.gmra.mrb[0].mxu0 %v1259
        %v1298 = vpop.f32.mrb[0].mxu0
        %v1299 = vadd.f32 0.0, %v1298
        %v1300 = vpop.f32.mrb[0].mxu0
        %v1301 = vpop.f32.mrb[0].mxu0
        %v1302 = vpop.f32.mrb[0].mxu0
        %1303 = vdwg.mxu0
        %v1304 = vadd.f32 %v1243, %v1299
        %v1305 = vld [vmem:[%s1069] sm:$0xff]
        %v1306 = vld [vmem:[%s1061] sm:$0xff]
        %v1307 = vrcp.pop %v1306
        %1309 = vset.pattern.permute.xlu0 0
        %1310 = vperm.xlu0 %1309, %v1307
        %v1311 = vpop.permute.xlu0 %1310
        %v1313 = vmul.f32 %v1305, %v1311
        %v1314 = vpack.c.bf16 %v1313, %v1313
        %v1316 = vsel %vm583, %v1314, 0
        %v1319 = vsel %vm671, %v1135, 0
        %1321 = vmatprep.subr.bf16.mxu0 0
        %1322 = vmatpush1.bf16.msra.mxu0 %v1319
        %1323 = vmatprep.subr.bf16.mxu0 0
        %1324 = vmatpush1.bf16.msra.mxu0 0
        %1325 = vmatprep.subr.bf16.mxu0 0
        %1326 = vmatpush1.bf16.msra.mxu0 0
        %1327 = vmatprep.subr.bf16.mxu0 0
        %1328 = vmatpush1.bf16.msra.mxu0 0
        %1329 = vmatprep.subr.bf16.mxu0 0
        %1330 = vmatpush1.bf16.msra.mxu0 0
        %1331 = vmatprep.subr.bf16.mxu0 0
        %1332 = vmatpush1.bf16.msra.mxu0 0
        %1333 = vmatprep.subr.bf16.mxu0 0
        %1334 = vmatpush1.bf16.msra.mxu0 0
        %1335 = vmatprep.subr.bf16.mxu0 0
        %1336 = vmatpush1.bf16.msra.mxu0 0
        %1337 = vmatprep.subr.bf16.mxu0 0
        %1338 = vmatpush1.bf16.msra.mxu0 0
        %1339 = vmatprep.subr.bf16.mxu0 0
        %1340 = vmatpush1.bf16.msra.mxu0 0
        %1341 = vmatprep.subr.bf16.mxu0 0
        %1342 = vmatpush1.bf16.msra.mxu0 0
        %1343 = vmatprep.subr.bf16.mxu0 0
        %1344 = vmatpush1.bf16.msra.mxu0 0
        %1345 = vmatprep.subr.bf16.mxu0 0
        %1346 = vmatpush1.bf16.msra.mxu0 0
        %1347 = vmatprep.subr.bf16.mxu0 0
        %1348 = vmatpush1.bf16.msra.mxu0 0
        %1349 = vmatprep.subr.bf16.mxu0 0
        %1350 = vmatpush1.bf16.msra.mxu0 0
        %1351 = vmatprep.subr.bf16.mxu0 0
        %1352 = vmatpush1.bf16.msra.mxu0 0
        %1353 = vmatprep.mubr.bf16.mxu0 0
        %1354 = vmatmul.mubr.bf16.gmra.mrb[0].mxu0 %v1316
        %v1355 = vpop.f32.mrb[0].mxu0
        %v1356 = vadd.f32 0.0, %v1355
        %v1357 = vpop.f32.mrb[0].mxu0
        %v1358 = vpop.f32.mrb[0].mxu0
        %v1359 = vpop.f32.mrb[0].mxu0
        %1360 = vdwg.mxu0
        %v1361 = vadd.f32 %v1304, %v1356
        %v1362 = vld [vmem:[%s7] sm:$0x1]
        %v1364 = vlaneseq
        %v1365 = vshrl.u32 %v1364, 7
        %v1366 = vsub.s32 0, %v1365
        %v1367 = vrot.slane %v1362, %v1366
        %v1369 = vadd.f32 %v1361, %v1367
        %v1370 = vld [vmem:[%s446] sm:$0xf]
        %v1371 = vunpack.c.l.bf16 %v1370
        %v1372 = vadd.f32 %v1371, %v1369
        %vm1373 = vcmask 261120
        %v1374 = vsel %vm1373, %v1372, 0.0
        %1375 = vadd.xlane.f32.xlu0 %v1374
        %v1376 = vpop.xlane.xlu0 %1375
        %v1377 = vrcp.pop 32.0
        %v1378 = vmul.f32 %v1376, %v1377
        %v1379 = vsub.f32 %v1372, %v1378
        %v1380 = vmul.f32 %v1379, %v1379
        %v1381 = vsel %vm1373, %v1380, 0.0
        %1382 = vadd.xlane.f32.xlu0 %v1381
        %v1383 = vpop.xlane.xlu0 %1382
        %v1384 = vmul.f32 %v1383, %v1377
        %v1385 = vadd.f32 %v1384, 1e-05
        %v1386 = vrsqrt.pop %v1385
        %v1387 = vmul.f32 %v1379, %v1386
        %v1388 = vld [vmem:[%s8] sm:$0x1]
        %v1390 = vlaneseq
        %v1391 = vshrl.u32 %v1390, 7
        %v1392 = vsub.s32 0, %v1391
        %v1393 = vrot.slane %v1388, %v1392
        %v1395 = vmul.f32 %v1387, %v1393
        %v1396 = vld [vmem:[%s9] sm:$0x1]
        %v1398 = vlaneseq
        %v1399 = vshrl.u32 %v1398, 7
        %v1400 = vsub.s32 0, %v1399
        %v1401 = vrot.slane %v1396, %v1400
        %v1403 = vadd.f32 %v1395, %v1401
        %v1404 = vpack.c.bf16 %v1403, %v1403
        %vm1405 = vcmask 257024
        %1406 = vst.msk [vmem:[%s473] sm:$0xf] %vm1405, %v1404
      $region68: #{decoder_forward.14} parent=59 // pred_fallthru
        _
      %p1407 = scmp.lt.s32.totalorder %s26, 1
      %s1408 = scalar_select %p1407, %s26, 1
      %p1409 = scmp.lt.s32.totalorder %s27, 0
      %s1410 = scalar_select %p1409, %s27, 0
      %s1411 = sadd.s32 %s1410, %s1408
      %s1412 = smul.addr %s1411, 4
      %s1413 = scalar_lea.vmem %s10, %s1412
      // Predicated region
      $region69: #{decoder_forward.14} parent=59 // pred_check
        %p1414 = pneg %p298
      $region70: #{decoder_forward.14} parent=59 // pred_check_branch
        %1416 = sbr.rel (%p1414) target = $region72
      $region71: #{decoder_forward.14} parent=59 // pred_region
        _
      $region72: #{decoder_forward.14} parent=59 // pred_fallthru
        _
    $region60: #{decoder_forward.14} parent=5 // pred_fallthru
      _
    %p1417 = scmp.le.s32.totalorder 2, %s16
    // Predicated region
    $region73: #{decoder_forward.14} parent=5 // pred_check
      %p1418 = pneg %p1417
    $region74: #{decoder_forward.14} parent=5 // pred_check_branch
      %1420 = sbr.rel (%p1418) target = $region76
    $region75: #{decoder_forward.14} parent=5 // pred_region
      %s1421 = ssub.s32 %s16, 2
      // Predicated region
      $region77: #{decoder_forward.14} parent=75 // pred_check
        %p1422 = pneg %p304
      $region78: #{decoder_forward.14} parent=75 // pred_check_branch
        %1424 = sbr.rel (%p1422) target = $region80
      $region79: #{decoder_forward.14} parent=75 // pred_region
        %p1425 = scmp.lt.s32.totalorder %s29, 1
        %s1426 = scalar_select %p1425, %s29, 1
        %p1427 = scmp.lt.s32.totalorder %s30, 0
        %s1428 = scalar_select %p1427, %s30, 0
        %s1429 = sadd.s32 %s1428, %s1426
        %s1430 = smul.addr %s1429, 4
        %s1431 = scalar_lea.vmem %s10, %s1430
      $region80: #{decoder_forward.14} parent=75 // pred_fallthru
        _
    $region76: #{decoder_forward.14} parent=5 // pred_fallthru
      _
  $region6: #{decoder_forward.14} parent=0 // loop_footer
    %s20 = sadd.s32 1, %s16
  $region7: #{decoder_forward.14} parent=0 // loop_footer_branch
    %15 = sbr.rel target = $region3
  $region8: #{decoder_forward.14} parent=0 // loop_exit
    _

</llo_original>
